<compile_context>
chip_gen: v5e
topology: v5e:2x2
jax: 0.10.0
libtpu: 0.0.40
codegen_flags: <defaults>
</compile_context>

<pallas_src>
import jax
import jax.numpy as jnp
from jax.experimental import pallas as pl
from jax.experimental.pallas import tpu as pltpu

C1, K1, LATENT = 10, 7, 100       # matches the PyTorch module
IMG = 14
IN_FLAT = IMG * IMG               # 196 (Cin = 1)
IN_PAD = 256                      # 196 -> 2 full 128-lane vregs
LAT_PAD = 128                     # 100 -> 1 full 128-lane vreg
MS_PAD = 2 * LAT_PAD              # [mu | log_var], split exactly at lane 128
BIAS_ROWS, BIAS_W = 8, 640        # all biases packed into one (8, 640) array


# ----------------------------- fused Pallas kernel ---------------------------

def _vae_fused_kernel(x_ref, eps_ref,
                      m1, m2, m3, wms, wfc, d1, d2, d3, bias_ref,
                      out_ref, ms_ref):
    b = bias_ref[...]                                    # (8, 640) f32, one load

    def dense(h, w_ref, brow, relu=True):
        # bf16 MXU matmul with f32 accumulate; bias/relu stay f32 (v5e-safe).
        y = jnp.dot(h.astype(jnp.bfloat16), w_ref[...],
                    preferred_element_type=jnp.float32)
        y = y + brow                                     # (1, N) bias row
        return jnp.maximum(y, 0.0) if relu else y

    # ---- encoder: three convs as dense GEMMs, all VMEM resident ----
    h = dense(x_ref[...], m1, b[0:1, :640])              # (bm, 640) enConv1+relu
    h = dense(h, m2, b[1:2, :320])                       # (bm, 320) enConv2+relu
    h = dense(h, m3, b[2:3, :160])                       # (bm, 160) enConv3+relu

    # ---- latent head: fused [mu | log_var] GEMM, split on the 128-lane edge ----
    ms = dense(h, wms, b[3:4, :MS_PAD], relu=False)      # (bm, 256)
    ms_ref[...] = ms                                     # single lane-dense store
    mu = ms[:, :LAT_PAD]                                 # padded lanes are 0
    lv = ms[:, LAT_PAD:]                                 # padded lanes are 0
    z = mu + jnp.exp(lv * 0.5) * eps_ref[...]            # std=exp(logvar/2); EUP
    z = dense(z, wfc, b[4:5, :160], relu=False)          # (bm, 160) deFc

    # ---- decoder: three transposed convs as dense GEMMs ----
    z = dense(z, d1, b[5:6, :320])                       # (bm, 320) deConv1+relu
    z = dense(z, d2, b[6:7, :640])                       # (bm, 640) deConv2+relu
    z = dense(z, d3, b[7:8, :IN_PAD])                    # (bm, 256) deConv3+relu
    out_ref[...] = jax.nn.sigmoid(z)                     # sigmoid(relu(.)) as in spec


# --------------------- one-time parameter preprocessing ----------------------

def _uniform_pair(key, wshape, bshape, fan_in):
    kw, kb = jax.random.split(key)
    bound = 1.0 / jnp.sqrt(float(fan_in))
    w = jax.random.uniform(kw, wshape, jnp.float32, -bound, bound)
    b = jax.random.uniform(kb, bshape, jnp.float32, -bound, bound)
    return w, b


def init_params(key):
    """Raw parameters with PyTorch-default-like init and PyTorch layouts."""
    def lin(k, fin, fout):
        return _uniform_pair(k, (fout, fin), (fout,), fin)

    def conv(k, cin, cout, ks):
        return _uniform_pair(k, (cout, cin, ks, ks), (cout,), cin * ks * ks)

    def convt(k, cin, cout, ks):
        return _uniform_pair(k, (cin, cout, ks, ks), (cout,), cout * ks * ks)

    keys = jax.random.split(key, 9)
    return {
        "enConv1": conv(keys[0], 1, C1, K1),               # 1 -> 10, 7x7
        "enConv2": conv(keys[1], C1, 2 * C1, K1 - 2),      # 10 -> 20, 5x5
        "enConv3": conv(keys[2], 2 * C1, 4 * C1, K1 - 4),  # 20 -> 40, 3x3
        "mu": lin(keys[3], 160, LATENT),
        "sigma": lin(keys[4], 160, LATENT),
        "deFc": lin(keys[5], LATENT, 160),
        "deConv1": convt(keys[6], 4 * C1, 2 * C1, K1 - 4),
        "deConv2": convt(keys[7], 2 * C1, C1, K1 - 2),
        "deConv3": convt(keys[8], C1, 1, K1),
    }


def _conv_as_dense(w, b, hin, win):
    """Valid stride-1 Conv2d as a dense (Cin*Hin*Win, Cout*Ho*Wo) matrix in
    NCHW-flatten order on both sides, plus a flat (Cout*Ho*Wo,) bias."""
    cout, cin, k, _ = w.shape
    ho, wo = hin - k + 1, win - k + 1
    eye = jnp.eye(cin * hin * win, dtype=jnp.float32).reshape(-1, cin, hin, win)
    cols = jax.lax.conv_general_dilated(
        eye, w, window_strides=(1, 1), padding="VALID",
        dimension_numbers=("NCHW", "OIHW", "NCHW"),
        precision=jax.lax.Precision.HIGHEST)
    mat = cols.reshape(cin * hin * win, cout * ho * wo)
    bias = jnp.broadcast_to(b[:, None, None], (cout, ho, wo)).reshape(-1)
    return mat, bias


def _convT_as_dense(wt, b, hin, win):
    """Stride-1 ConvTranspose2d == full conv with spatially flipped kernel,
    materialized as a dense matrix (padding folded in at init)."""
    cin, cout, k, _ = wt.shape
    w = jnp.flip(wt, axis=(2, 3)).transpose(1, 0, 2, 3)   # (Cout, Cin, k, k)
    ho, wo = hin + k - 1, win + k - 1
    eye = jnp.eye(cin * hin * win, dtype=jnp.float32).reshape(-1, cin, hin, win)
    eye = jnp.pad(eye, ((0, 0), (0, 0), (k - 1, k - 1), (k - 1, k - 1)))
    cols = jax.lax.conv_general_dilated(
        eye, w, window_strides=(1, 1), padding="VALID",
        dimension_numbers=("NCHW", "OIHW", "NCHW"),
        precision=jax.lax.Precision.HIGHEST)
    mat = cols.reshape(cin * hin * win, cout * ho * wo)
    bias = jnp.broadcast_to(b[:, None, None], (cout, ho, wo)).reshape(-1)
    return mat, bias


def pack_params(params):
    """One-time weight prep: convs/deconvs -> dense bf16 GEMM matrices padded to
    128-lane boundaries, mu & sigma fused (split at lane 128), deConv3 output
    columns padded 196->256, and all 8 biases packed into one (8, 640) f32
    array.  Padded rows/cols/bias lanes are exactly zero."""
    m1, b1 = _conv_as_dense(*params["enConv1"], IMG, IMG)   # (196, 640)
    m2, b2 = _conv_as_dense(*params["enConv2"], 8, 8)       # (640, 320)
    m3, b3 = _conv_as_dense(*params["enConv3"], 4, 4)       # (320, 160)

    wmu, bmu = params["mu"]
    wsg, bsg = params["sigma"]
    wfc, bfc = params["deFc"]

    d1, c1 = _convT_as_dense(*params["deConv1"], 2, 2)      # (160, 320)
    d2, c2 = _convT_as_dense(*params["deConv2"], 4, 4)      # (320, 640)
    d3, c3 = _convT_as_dense(*params["deConv3"], 8, 8)      # (640, 196)

    # zero-pad to (8,128)-aligned K / lane widths
    m1p = jnp.zeros((IN_PAD, 640), jnp.float32).at[:IN_FLAT].set(m1)
    wmsp = (jnp.zeros((160, MS_PAD), jnp.float32)
            .at[:, :LATENT].set(wmu.T)
            .at[:, LAT_PAD:LAT_PAD + LATENT].set(wsg.T))
    wfcp = jnp.zeros((LAT_PAD, 160), jnp.float32).at[:LATENT].set(wfc.T)
    d3p = jnp.zeros((640, IN_PAD), jnp.float32).at[:, :IN_FLAT].set(d3)

    bias = (jnp.zeros((BIAS_ROWS, BIAS_W), jnp.float32)
            .at[0, :640].set(b1)
            .at[1, :320].set(b2)
            .at[2, :160].set(b3)
            .at[3, :LATENT].set(bmu)
            .at[3, LAT_PAD:LAT_PAD + LATENT].set(bsg)
            .at[4, :160].set(bfc)
            .at[5, :320].set(c1)
            .at[6, :640].set(c2)
            .at[7, :IN_FLAT].set(c3))

    bf16 = lambda a: a.astype(jnp.bfloat16)
    return [bf16(m1p), bf16(m2), bf16(m3), bf16(wmsp), bf16(wfcp),
            bf16(d1), bf16(d2), bf16(d3p), bias]


# ---------------------------------- forward ----------------------------------

def _round_up(x, m):
    return ((x + m - 1) // m) * m


def _pick_bm(n):
    # n < 256  : single block (tiny batch, launch-overhead bound anyway).
    # 256..511 : split into >=2 grid points so the "parallel" grid axis can
    #            shard across both v7x TensorCores.
    # n >= 512 : bm=256 fills the 256-wide MXU passes on v6e/v7x.
    if n < 256:
        return n
    if n < 512:
        return _round_up((n + 1) // 2, 8)
    return 256


def even_vae_forward(packed, x, eps):
    n = x.shape[0]
    x2d = x.reshape(n, IN_FLAT).astype(jnp.float32)          # NCHW flatten == torch .view
    x2d = jnp.pad(x2d, ((0, 0), (0, IN_PAD - IN_FLAT)))      # K: 196 -> 256 (zeros)
    eps = jnp.pad(eps.astype(jnp.float32),
                  ((0, 0), (0, LAT_PAD - LATENT)))           # 100 -> 128 (zeros)

    bm = _pick_bm(n)
    grid = (pl.cdiv(n, bm),)

    def rows(width):
        return pl.BlockSpec((bm, width), lambda i: (i, 0))

    def whole(a):
        # Weights: constant block index -> DMA'd once, VMEM resident.
        # (Buffered(1) single-buffering skipped: bf16 weights total ~1.6 MiB,
        # so the default double buffer costs nothing meaningful.)
        return pl.BlockSpec(a.shape, lambda i: (0, 0))

    in_specs = [rows(IN_PAD), rows(LAT_PAD)] + [whole(a) for a in packed]
    out_specs = [rows(IN_PAD), rows(MS_PAD)]
    out_shape = [jax.ShapeDtypeStruct((n, IN_PAD), jnp.float32),
                 jax.ShapeDtypeStruct((n, MS_PAD), jnp.float32)]

    recon_pad, ms = pl.pallas_call(
        _vae_fused_kernel,
        grid=grid,
        in_specs=in_specs,
        out_specs=out_specs,
        out_shape=out_shape,
        compiler_params=pltpu.CompilerParams(
            dimension_semantics=("parallel",),
            vmem_limit_bytes=48 * 1024 * 1024),
    )(x2d, eps, *packed)

    # Wrapper-side un-padding: free layout plumbing.
    recon = recon_pad[:, :IN_FLAT].reshape(n, 1, IMG, IMG)
    mu = ms[:, :LATENT]
    log_var = ms[:, LAT_PAD:LAT_PAD + LATENT]
    return recon, mu, log_var


# ------------------------------------ main ------------------------------------

if __name__ == "__main__":
    key = jax.random.PRNGKey(0)
    kp, kx, ke = jax.random.split(key, 3)

    params = init_params(kp)
    packed = pack_params(params)                       # one-time weight prep

    batch = 2
    # MNIST-like input in [0, 1], NCHW, 14x14 (even-MNIST).
    x = jax.random.uniform(kx, (batch, 1, IMG, IMG), jnp.float32)
    # TODO(synk): eps replaces torch.randn_like inside reparameterize; it could
    # alternatively be drawn in-kernel with pltpu.prng_seed + stateful_normal to
    # drop this input stream entirely (kept host-side for determinism).
    eps = jax.random.normal(ke, (batch, LATENT), jnp.float32)

    fwd = jax.jit(even_vae_forward)
    out, mu, log_var = fwd(packed, x, eps)
    jax.block_until_ready((out, mu, log_var))

    assert out.shape == (batch, 1, IMG, IMG)
    assert mu.shape == (batch, LATENT)
    assert log_var.shape == (batch, LATENT)
    assert bool(jnp.all(jnp.isfinite(out)))
    assert bool(jnp.all(out >= 0.0)) and bool(jnp.all(out <= 1.0))
    print("KERNEL_OK")
</pallas_src>

<mosaic_0001>
module attributes {stable_mosaic.version = 11 : i64} {
  func.func @_vae_fused_kernel(%arg0: i32, %arg1: memref<2x256xf32, #tpu.memory_space<vmem>>, %arg2: memref<2x128xf32, #tpu.memory_space<vmem>>, %arg3: memref<256x640xbf16, #tpu.memory_space<vmem>>, %arg4: memref<640x320xbf16, #tpu.memory_space<vmem>>, %arg5: memref<320x160xbf16, #tpu.memory_space<vmem>>, %arg6: memref<160x256xbf16, #tpu.memory_space<vmem>>, %arg7: memref<128x160xbf16, #tpu.memory_space<vmem>>, %arg8: memref<160x320xbf16, #tpu.memory_space<vmem>>, %arg9: memref<320x640xbf16, #tpu.memory_space<vmem>>, %arg10: memref<640x256xbf16, #tpu.memory_space<vmem>>, %arg11: memref<8x640xf32, #tpu.memory_space<vmem>>, %arg12: memref<2x256xf32, #tpu.memory_space<vmem>>, %arg13: memref<2x256xf32, #tpu.memory_space<vmem>>) attributes {dimension_semantics = [#tpu.dimension_semantics<parallel>], iteration_bounds = array<i64: 1>, scalar_prefetch = 0 : i64, scratch_operands = 0 : i64, tpu.core_type = #tpu.core_type<tc>, window_params = [{transform_indices = @transform_0, window_bounds = array<i64: 2, 256>}, {transform_indices = @transform_1, window_bounds = array<i64: 2, 128>}, {pipeline_mode = #tpu.pipeline_mode<synchronous>, transform_indices = @transform_2, window_bounds = array<i64: 256, 640>}, {pipeline_mode = #tpu.pipeline_mode<synchronous>, transform_indices = @transform_3, window_bounds = array<i64: 640, 320>}, {pipeline_mode = #tpu.pipeline_mode<synchronous>, transform_indices = @transform_4, window_bounds = array<i64: 320, 160>}, {pipeline_mode = #tpu.pipeline_mode<synchronous>, transform_indices = @transform_5, window_bounds = array<i64: 160, 256>}, {pipeline_mode = #tpu.pipeline_mode<synchronous>, transform_indices = @transform_6, window_bounds = array<i64: 128, 160>}, {pipeline_mode = #tpu.pipeline_mode<synchronous>, transform_indices = @transform_7, window_bounds = array<i64: 160, 320>}, {pipeline_mode = #tpu.pipeline_mode<synchronous>, transform_indices = @transform_8, window_bounds = array<i64: 320, 640>}, {pipeline_mode = #tpu.pipeline_mode<synchronous>, transform_indices = @transform_9, window_bounds = array<i64: 640, 256>}, {pipeline_mode = #tpu.pipeline_mode<synchronous>, transform_indices = @transform_10, window_bounds = array<i64: 8, 640>}, {transform_indices = @transform_11, window_bounds = array<i64: 2, 256>}, {transform_indices = @transform_12, window_bounds = array<i64: 2, 256>}]} {
    %c0 = arith.constant 0 : index
    %c0_0 = arith.constant 0 : index
    %0 = vector.load %arg11[%c0, %c0_0] : memref<8x640xf32, #tpu.memory_space<vmem>>, vector<8x640xf32>
    %c0_1 = arith.constant 0 : index
    %c0_2 = arith.constant 0 : index
    %1 = vector.load %arg1[%c0_1, %c0_2] : memref<2x256xf32, #tpu.memory_space<vmem>>, vector<2x256xf32>
    %2 = vector.extract_strided_slice %0 {offsets = [0, 0], sizes = [1, 640], strides = [1, 1]} : vector<8x640xf32> to vector<1x640xf32>
    %3 = arith.truncf %1 : vector<2x256xf32> to vector<2x256xbf16>
    %c0_3 = arith.constant 0 : index
    %c0_4 = arith.constant 0 : index
    %4 = vector.load %arg3[%c0_3, %c0_4] : memref<256x640xbf16, #tpu.memory_space<vmem>>, vector<256x640xbf16>
    %cst = arith.constant dense<0.000000e+00> : vector<2x640xf32>
    %5 = tpu.matmul %3, %4, %cst {dimension_numbers = #tpu.dot_dimension_numbers<[1], [0], [0], [1], [0, 0, 1, 1], [], []>} : vector<2x256xbf16>, vector<256x640xbf16>, vector<2x640xf32> -> vector<2x640xf32>
    %6 = vector.broadcast %2 : vector<1x640xf32> to vector<2x640xf32>
    %7 = arith.addf %5, %6 : vector<2x640xf32>
    %cst_5 = arith.constant 0.000000e+00 : f32
    %8 = vector.broadcast %cst_5 : f32 to vector<2x640xf32>
    %9 = arith.maximumf %7, %8 : vector<2x640xf32>
    %10 = vector.extract_strided_slice %0 {offsets = [1, 0], sizes = [1, 320], strides = [1, 1]} : vector<8x640xf32> to vector<1x320xf32>
    %11 = arith.truncf %9 : vector<2x640xf32> to vector<2x640xbf16>
    %c0_6 = arith.constant 0 : index
    %c0_7 = arith.constant 0 : index
    %12 = vector.load %arg4[%c0_6, %c0_7] : memref<640x320xbf16, #tpu.memory_space<vmem>>, vector<640x320xbf16>
    %cst_8 = arith.constant dense<0.000000e+00> : vector<2x320xf32>
    %13 = tpu.matmul %11, %12, %cst_8 {dimension_numbers = #tpu.dot_dimension_numbers<[1], [0], [0], [1], [0, 0, 1, 1], [], []>} : vector<2x640xbf16>, vector<640x320xbf16>, vector<2x320xf32> -> vector<2x320xf32>
    %14 = vector.broadcast %10 : vector<1x320xf32> to vector<2x320xf32>
    %15 = arith.addf %13, %14 : vector<2x320xf32>
    %cst_9 = arith.constant 0.000000e+00 : f32
    %16 = vector.broadcast %cst_9 : f32 to vector<2x320xf32>
    %17 = arith.maximumf %15, %16 : vector<2x320xf32>
    %18 = vector.extract_strided_slice %0 {offsets = [2, 0], sizes = [1, 160], strides = [1, 1]} : vector<8x640xf32> to vector<1x160xf32>
    %19 = arith.truncf %17 : vector<2x320xf32> to vector<2x320xbf16>
    %c0_10 = arith.constant 0 : index
    %c0_11 = arith.constant 0 : index
    %20 = vector.load %arg5[%c0_10, %c0_11] : memref<320x160xbf16, #tpu.memory_space<vmem>>, vector<320x160xbf16>
    %cst_12 = arith.constant dense<0.000000e+00> : vector<2x160xf32>
    %21 = tpu.matmul %19, %20, %cst_12 {dimension_numbers = #tpu.dot_dimension_numbers<[1], [0], [0], [1], [0, 0, 1, 1], [], []>} : vector<2x320xbf16>, vector<320x160xbf16>, vector<2x160xf32> -> vector<2x160xf32>
    %22 = vector.broadcast %18 : vector<1x160xf32> to vector<2x160xf32>
    %23 = arith.addf %21, %22 : vector<2x160xf32>
    %cst_13 = arith.constant 0.000000e+00 : f32
    %24 = vector.broadcast %cst_13 : f32 to vector<2x160xf32>
    %25 = arith.maximumf %23, %24 : vector<2x160xf32>
    %26 = vector.extract_strided_slice %0 {offsets = [3, 0], sizes = [1, 256], strides = [1, 1]} : vector<8x640xf32> to vector<1x256xf32>
    %27 = arith.truncf %25 : vector<2x160xf32> to vector<2x160xbf16>
    %c0_14 = arith.constant 0 : index
    %c0_15 = arith.constant 0 : index
    %28 = vector.load %arg6[%c0_14, %c0_15] : memref<160x256xbf16, #tpu.memory_space<vmem>>, vector<160x256xbf16>
    %cst_16 = arith.constant dense<0.000000e+00> : vector<2x256xf32>
    %29 = tpu.matmul %27, %28, %cst_16 {dimension_numbers = #tpu.dot_dimension_numbers<[1], [0], [0], [1], [0, 0, 1, 1], [], []>} : vector<2x160xbf16>, vector<160x256xbf16>, vector<2x256xf32> -> vector<2x256xf32>
    %30 = vector.broadcast %26 : vector<1x256xf32> to vector<2x256xf32>
    %31 = arith.addf %29, %30 : vector<2x256xf32>
    %c0_17 = arith.constant 0 : index
    %c0_18 = arith.constant 0 : index
    %32 = vector.load %arg13[%c0_17, %c0_18] : memref<2x256xf32, #tpu.memory_space<vmem>>, vector<2x256xf32>
    tpu.vector_store %arg13[%c0_17, %c0_18], %31 {strides = array<i32>} : memref<2x256xf32, #tpu.memory_space<vmem>>, vector<2x256xf32>,
    %33 = vector.extract_strided_slice %31 {offsets = [0, 0], sizes = [2, 128], strides = [1, 1]} : vector<2x256xf32> to vector<2x128xf32>
    %34 = vector.extract_strided_slice %31 {offsets = [0, 128], sizes = [2, 128], strides = [1, 1]} : vector<2x256xf32> to vector<2x128xf32>
    %cst_19 = arith.constant 5.000000e-01 : f32
    %35 = vector.broadcast %cst_19 : f32 to vector<2x128xf32>
    %36 = arith.mulf %34, %35 : vector<2x128xf32>
    %37 = math.exp %36 : vector<2x128xf32>
    %c0_20 = arith.constant 0 : index
    %c0_21 = arith.constant 0 : index
    %38 = vector.load %arg2[%c0_20, %c0_21] : memref<2x128xf32, #tpu.memory_space<vmem>>, vector<2x128xf32>
    %39 = arith.mulf %37, %38 : vector<2x128xf32>
    %40 = arith.addf %33, %39 : vector<2x128xf32>
    %41 = vector.extract_strided_slice %0 {offsets = [4, 0], sizes = [1, 160], strides = [1, 1]} : vector<8x640xf32> to vector<1x160xf32>
    %42 = arith.truncf %40 : vector<2x128xf32> to vector<2x128xbf16>
    %c0_22 = arith.constant 0 : index
    %c0_23 = arith.constant 0 : index
    %43 = vector.load %arg7[%c0_22, %c0_23] : memref<128x160xbf16, #tpu.memory_space<vmem>>, vector<128x160xbf16>
    %cst_24 = arith.constant dense<0.000000e+00> : vector<2x160xf32>
    %44 = tpu.matmul %42, %43, %cst_24 {dimension_numbers = #tpu.dot_dimension_numbers<[1], [0], [0], [1], [0, 0, 1, 1], [], []>} : vector<2x128xbf16>, vector<128x160xbf16>, vector<2x160xf32> -> vector<2x160xf32>
    %45 = vector.broadcast %41 : vector<1x160xf32> to vector<2x160xf32>
    %46 = arith.addf %44, %45 : vector<2x160xf32>
    %47 = vector.extract_strided_slice %0 {offsets = [5, 0], sizes = [1, 320], strides = [1, 1]} : vector<8x640xf32> to vector<1x320xf32>
    %48 = arith.truncf %46 : vector<2x160xf32> to vector<2x160xbf16>
    %c0_25 = arith.constant 0 : index
    %c0_26 = arith.constant 0 : index
    %49 = vector.load %arg8[%c0_25, %c0_26] : memref<160x320xbf16, #tpu.memory_space<vmem>>, vector<160x320xbf16>
    %cst_27 = arith.constant dense<0.000000e+00> : vector<2x320xf32>
    %50 = tpu.matmul %48, %49, %cst_27 {dimension_numbers = #tpu.dot_dimension_numbers<[1], [0], [0], [1], [0, 0, 1, 1], [], []>} : vector<2x160xbf16>, vector<160x320xbf16>, vector<2x320xf32> -> vector<2x320xf32>
    %51 = vector.broadcast %47 : vector<1x320xf32> to vector<2x320xf32>
    %52 = arith.addf %50, %51 : vector<2x320xf32>
    %cst_28 = arith.constant 0.000000e+00 : f32
    %53 = vector.broadcast %cst_28 : f32 to vector<2x320xf32>
    %54 = arith.maximumf %52, %53 : vector<2x320xf32>
    %55 = vector.extract_strided_slice %0 {offsets = [6, 0], sizes = [1, 640], strides = [1, 1]} : vector<8x640xf32> to vector<1x640xf32>
    %56 = arith.truncf %54 : vector<2x320xf32> to vector<2x320xbf16>
    %c0_29 = arith.constant 0 : index
    %c0_30 = arith.constant 0 : index
    %57 = vector.load %arg9[%c0_29, %c0_30] : memref<320x640xbf16, #tpu.memory_space<vmem>>, vector<320x640xbf16>
    %cst_31 = arith.constant dense<0.000000e+00> : vector<2x640xf32>
    %58 = tpu.matmul %56, %57, %cst_31 {dimension_numbers = #tpu.dot_dimension_numbers<[1], [0], [0], [1], [0, 0, 1, 1], [], []>} : vector<2x320xbf16>, vector<320x640xbf16>, vector<2x640xf32> -> vector<2x640xf32>
    %59 = vector.broadcast %55 : vector<1x640xf32> to vector<2x640xf32>
    %60 = arith.addf %58, %59 : vector<2x640xf32>
    %cst_32 = arith.constant 0.000000e+00 : f32
    %61 = vector.broadcast %cst_32 : f32 to vector<2x640xf32>
    %62 = arith.maximumf %60, %61 : vector<2x640xf32>
    %63 = vector.extract_strided_slice %0 {offsets = [7, 0], sizes = [1, 256], strides = [1, 1]} : vector<8x640xf32> to vector<1x256xf32>
    %64 = arith.truncf %62 : vector<2x640xf32> to vector<2x640xbf16>
    %c0_33 = arith.constant 0 : index
    %c0_34 = arith.constant 0 : index
    %65 = vector.load %arg10[%c0_33, %c0_34] : memref<640x256xbf16, #tpu.memory_space<vmem>>, vector<640x256xbf16>
    %cst_35 = arith.constant dense<0.000000e+00> : vector<2x256xf32>
    %66 = tpu.matmul %64, %65, %cst_35 {dimension_numbers = #tpu.dot_dimension_numbers<[1], [0], [0], [1], [0, 0, 1, 1], [], []>} : vector<2x640xbf16>, vector<640x256xbf16>, vector<2x256xf32> -> vector<2x256xf32>
    %67 = vector.broadcast %63 : vector<1x256xf32> to vector<2x256xf32>
    %68 = arith.addf %66, %67 : vector<2x256xf32>
    %cst_36 = arith.constant 0.000000e+00 : f32
    %69 = vector.broadcast %cst_36 : f32 to vector<2x256xf32>
    %70 = arith.maximumf %68, %69 : vector<2x256xf32>
    %71 = arith.negf %70 : vector<2x256xf32>
    %72 = math.exp %71 : vector<2x256xf32>
    %cst_37 = arith.constant 1.000000e+00 : f32
    %73 = vector.broadcast %cst_37 : f32 to vector<2x256xf32>
    %74 = arith.addf %73, %72 : vector<2x256xf32>
    %75 = arith.divf %73, %74 : vector<2x256xf32>
    %c0_38 = arith.constant 0 : index
    %c0_39 = arith.constant 0 : index
    %76 = vector.load %arg12[%c0_38, %c0_39] : memref<2x256xf32, #tpu.memory_space<vmem>>, vector<2x256xf32>
    tpu.vector_store %arg12[%c0_38, %c0_39], %75 {strides = array<i32>} : memref<2x256xf32, #tpu.memory_space<vmem>>, vector<2x256xf32>,
    return
  }
  func.func @transform_0(%arg0: i32) -> (i32, i32) {
    %c0_i32 = arith.constant 0 : i32
    %c0_i32_0 = arith.constant 0 : i32
    return %arg0, %c0_i32 : i32, i32
  }
  func.func @transform_1(%arg0: i32) -> (i32, i32) {
    %c0_i32 = arith.constant 0 : i32
    %c0_i32_0 = arith.constant 0 : i32
    return %arg0, %c0_i32 : i32, i32
  }
  func.func @transform_2(%arg0: i32) -> (i32, i32) {
    %c0_i32 = arith.constant 0 : i32
    %c0_i32_0 = arith.constant 0 : i32
    %c0_i32_1 = arith.constant 0 : i32
    return %c0_i32, %c0_i32_0 : i32, i32
  }
  func.func @transform_3(%arg0: i32) -> (i32, i32) {
    %c0_i32 = arith.constant 0 : i32
    %c0_i32_0 = arith.constant 0 : i32
    %c0_i32_1 = arith.constant 0 : i32
    return %c0_i32, %c0_i32_0 : i32, i32
  }
  func.func @transform_4(%arg0: i32) -> (i32, i32) {
    %c0_i32 = arith.constant 0 : i32
    %c0_i32_0 = arith.constant 0 : i32
    %c0_i32_1 = arith.constant 0 : i32
    return %c0_i32, %c0_i32_0 : i32, i32
  }
  func.func @transform_5(%arg0: i32) -> (i32, i32) {
    %c0_i32 = arith.constant 0 : i32
    %c0_i32_0 = arith.constant 0 : i32
    %c0_i32_1 = arith.constant 0 : i32
    return %c0_i32, %c0_i32_0 : i32, i32
  }
  func.func @transform_6(%arg0: i32) -> (i32, i32) {
    %c0_i32 = arith.constant 0 : i32
    %c0_i32_0 = arith.constant 0 : i32
    %c0_i32_1 = arith.constant 0 : i32
    return %c0_i32, %c0_i32_0 : i32, i32
  }
  func.func @transform_7(%arg0: i32) -> (i32, i32) {
    %c0_i32 = arith.constant 0 : i32
    %c0_i32_0 = arith.constant 0 : i32
    %c0_i32_1 = arith.constant 0 : i32
    return %c0_i32, %c0_i32_0 : i32, i32
  }
  func.func @transform_8(%arg0: i32) -> (i32, i32) {
    %c0_i32 = arith.constant 0 : i32
    %c0_i32_0 = arith.constant 0 : i32
    %c0_i32_1 = arith.constant 0 : i32
    return %c0_i32, %c0_i32_0 : i32, i32
  }
  func.func @transform_9(%arg0: i32) -> (i32, i32) {
    %c0_i32 = arith.constant 0 : i32
    %c0_i32_0 = arith.constant 0 : i32
    %c0_i32_1 = arith.constant 0 : i32
    return %c0_i32, %c0_i32_0 : i32, i32
  }
  func.func @transform_10(%arg0: i32) -> (i32, i32) {
    %c0_i32 = arith.constant 0 : i32
    %c0_i32_0 = arith.constant 0 : i32
    %c0_i32_1 = arith.constant 0 : i32
    return %c0_i32, %c0_i32_0 : i32, i32
  }
  func.func @transform_11(%arg0: i32) -> (i32, i32) {
    %c0_i32 = arith.constant 0 : i32
    %c0_i32_0 = arith.constant 0 : i32
    return %arg0, %c0_i32 : i32, i32
  }
  func.func @transform_12(%arg0: i32) -> (i32, i32) {
    %c0_i32 = arith.constant 0 : i32
    %c0_i32_0 = arith.constant 0 : i32
    return %arg0, %c0_i32 : i32, i32
  }
}

</mosaic_0001>

<llo_original>
// kernel: even_vae_forward.1
$region0: #{even_vae_forward.1}
  #allocation0 [shape = 'u32[]', space=smem, size = 0x4, offset = 0x4, fixed_abs, tag = 'smem constant byte address 0x4 - core index']
  #allocation1 [shape = 'u32[72,128]{1,0:T(1,128)}', space=vmem, size = 0x9000, scoped, tag = 'internal scratch']
  %s0 = inlined_call_operand.vmem [shape: f32[2,256], index: 0, kind: input, shape index: {}]
  %s1 = inlined_call_operand.vmem [shape: f32[2,128], index: 1, kind: input, shape index: {}]
  %s2 = inlined_call_operand.vmem [shape: bf16[256,640], index: 2, kind: input, shape index: {}]
  %s3 = inlined_call_operand.vmem [shape: bf16[640,320], index: 3, kind: input, shape index: {}]
  %s4 = inlined_call_operand.vmem [shape: bf16[320,160], index: 4, kind: input, shape index: {}]
  %s5 = inlined_call_operand.hbm [shape: bf16[160,256], index: 5, kind: input, shape index: {}]
  %s6 = inlined_call_operand.vmem [shape: bf16[128,160], index: 6, kind: input, shape index: {}]
  %s7 = inlined_call_operand.vmem [shape: bf16[160,320], index: 7, kind: input, shape index: {}]
  %s8 = inlined_call_operand.vmem [shape: bf16[320,640], index: 8, kind: input, shape index: {}]
  %s9 = inlined_call_operand.hbm [shape: bf16[640,256], index: 9, kind: input, shape index: {}]
  %s10 = inlined_call_operand.vmem [shape: f32[8,640], index: 10, kind: input, shape index: {}]
  %s11 = inlined_call_operand.vmem [shape: f32[2,256], index: 11, kind: output, shape index: {0}]
  %s12 = inlined_call_operand.vmem [shape: f32[2,256], index: 12, kind: output, shape index: {1}]
  %13 = xla_tuple %s11, %s12
  %s14 = sld [smem:[#allocation0]]
  $region70: #{even_vae_forward.1} parent=0
    _
  %s16 = ssub.s32 1, %s14
  %s17 = scalar_select 0, %s16, %s14
  $region1: #{even_vae_forward.1} parent=0
    #allocation2 [shape = 'u8[81920]{0}', space=vmem, size = 0x14000, scoped, tag = 'input window, operand 5, single buffered']
    #allocation3 [shape = 's32[1]{0}', space=sflag, size = 0x4, scoped, tag = 'scoped memory for even_vae_forward.1']
    #allocation4 [shape = 'u8[327680]{0}', space=vmem, size = 0x50000, scoped, tag = 'input window, operand 9, single buffered']
    #allocation5 [shape = 's32[1]{0}', space=sflag, size = 0x4, scoped, tag = 'scoped memory for even_vae_forward.1']
    %18 = vsyncpa [#allocation3], 0
    %19 = vsyncpa [#allocation5], 0
    // Predicated region
    $region2: #{even_vae_forward.1} parent=1 // pred_check
      _
    $region3: #{even_vae_forward.1} parent=1 // pred_check_branch
      %21 = sbr.rel (0) target = $region5
    $region4: #{even_vae_forward.1} parent=1 // pred_region
      _
    $region5: #{even_vae_forward.1} parent=1 // pred_fallthru
      _
    // Predicated region
    $region6: #{even_vae_forward.1} parent=1 // pred_check
      _
    $region7: #{even_vae_forward.1} parent=1 // pred_check_branch
      %23 = sbr.rel (0) target = $region9
    $region8: #{even_vae_forward.1} parent=1 // pred_region
      _
    $region9: #{even_vae_forward.1} parent=1 // pred_fallthru
      _
    // Predicated region
    $region10: #{even_vae_forward.1} parent=1 // pred_check
      _
    $region11: #{even_vae_forward.1} parent=1 // pred_check_branch
      %25 = sbr.rel (0) target = $region13
    $region12: #{even_vae_forward.1} parent=1 // pred_region
      _
    $region13: #{even_vae_forward.1} parent=1 // pred_fallthru
      _
    // Predicated region
    $region14: #{even_vae_forward.1} parent=1 // pred_check
      _
    $region15: #{even_vae_forward.1} parent=1 // pred_check_branch
      %27 = sbr.rel (0) target = $region17
    $region16: #{even_vae_forward.1} parent=1 // pred_region
      _
    $region17: #{even_vae_forward.1} parent=1 // pred_fallthru
      _
    // Predicated region
    $region18: #{even_vae_forward.1} parent=1 // pred_check
      _
    $region19: #{even_vae_forward.1} parent=1 // pred_check_branch
      %29 = sbr.rel (0) target = $region21
    $region20: #{even_vae_forward.1} parent=1 // pred_region
      _
    $region21: #{even_vae_forward.1} parent=1 // pred_fallthru
      _
    // Predicated region
    $region22: #{even_vae_forward.1} parent=1 // pred_check
      _
    $region23: #{even_vae_forward.1} parent=1 // pred_check_branch
      %31 = sbr.rel (0) target = $region25
    $region24: #{even_vae_forward.1} parent=1 // pred_region
      %33 = vsyncadd [#allocation3], 0
      %s34 = sshll.u32 %s5, 4
      %s35 = int_to_ptr.hbm [resolvable:$true] %s34
      %s36 = sshll.u32 [#allocation2], 4
      %s37 = int_to_ptr.vmem [resolvable:$true] %s36
      %42 = dma.hbm_to_vmem [thread:$0]  %s35, 2560, %s37, [#allocation3], 128, 128, 8
    $region25: #{even_vae_forward.1} parent=1 // pred_fallthru
      _
    // Predicated region
    $region26: #{even_vae_forward.1} parent=1 // pred_check
      _
    $region27: #{even_vae_forward.1} parent=1 // pred_check_branch
      %44 = sbr.rel (0) target = $region29
    $region28: #{even_vae_forward.1} parent=1 // pred_region
      _
    $region29: #{even_vae_forward.1} parent=1 // pred_fallthru
      _
    // Predicated region
    $region30: #{even_vae_forward.1} parent=1 // pred_check
      _
    $region31: #{even_vae_forward.1} parent=1 // pred_check_branch
      %46 = sbr.rel (0) target = $region33
    $region32: #{even_vae_forward.1} parent=1 // pred_region
      _
    $region33: #{even_vae_forward.1} parent=1 // pred_fallthru
      _
    // Predicated region
    $region34: #{even_vae_forward.1} parent=1 // pred_check
      _
    $region35: #{even_vae_forward.1} parent=1 // pred_check_branch
      %48 = sbr.rel (0) target = $region37
    $region36: #{even_vae_forward.1} parent=1 // pred_region
      _
    $region37: #{even_vae_forward.1} parent=1 // pred_fallthru
      _
    // Predicated region
    $region38: #{even_vae_forward.1} parent=1 // pred_check
      _
    $region39: #{even_vae_forward.1} parent=1 // pred_check_branch
      %50 = sbr.rel (0) target = $region41
    $region40: #{even_vae_forward.1} parent=1 // pred_region
      %52 = vsyncadd [#allocation5], 0
      %s53 = sshll.u32 %s9, 4
      %s54 = int_to_ptr.hbm [resolvable:$true] %s53
      %s55 = sshll.u32 [#allocation4], 4
      %s56 = int_to_ptr.vmem [resolvable:$true] %s55
      %61 = dma.hbm_to_vmem [thread:$0]  %s54, 10240, %s56, [#allocation5], 128, 128, 8
    $region41: #{even_vae_forward.1} parent=1 // pred_fallthru
      _
    // Predicated region
    $region42: #{even_vae_forward.1} parent=1 // pred_check
      _
    $region43: #{even_vae_forward.1} parent=1 // pred_check_branch
      %63 = sbr.rel (0) target = $region45
    $region44: #{even_vae_forward.1} parent=1 // pred_region
      _
    $region45: #{even_vae_forward.1} parent=1 // pred_fallthru
      _
    // Predicated region
    $region46: #{even_vae_forward.1} parent=1 // pred_check
      _
    $region47: #{even_vae_forward.1} parent=1 // pred_check_branch
      %65 = sbr.rel (0) target = $region49
    $region48: #{even_vae_forward.1} parent=1 // pred_region
      %67 = dma.done [#allocation3], 2560
    $region49: #{even_vae_forward.1} parent=1 // pred_fallthru
      _
    // Predicated region
    $region50: #{even_vae_forward.1} parent=1 // pred_check
      _
    $region51: #{even_vae_forward.1} parent=1 // pred_check_branch
      %69 = sbr.rel (0) target = $region53
    $region52: #{even_vae_forward.1} parent=1 // pred_region
      %71 = dma.done [#allocation5], 10240
    $region53: #{even_vae_forward.1} parent=1 // pred_fallthru
      _
    %v73 = vld [vmem:[%s10] sm:$0xff]
    %v74 = vld [vmem:[%s10 + $0x8] sm:$0xff]
    %v75 = vld [vmem:[%s10 + $0x10] sm:$0xff]
    %v76 = vld [vmem:[%s10 + $0x18] sm:$0xff]
    %v77 = vld [vmem:[%s10 + $0x20] sm:$0xff]
    %v78 = vld [vmem:[%s0] sm:$0xf]
    %80 = vst [vmem:[#allocation1] ss:$4 sm:$0xff] %v78
    %v81 = vld.sshfl [vmem:[#allocation1] sm:$0xff pattern:$0x73625140]
    %v82 = vld.sshfl [vmem:[#allocation1 + $0x8] sm:$0xff pattern:$0x73625140]
    %v85 = vpack.c.bf16 %v81, %v81
    %v86 = vpack.c.bf16 %v82, %v82
    %v87 = vld [vmem:[%s2] sm:$0xff]
    %v88 = vld [vmem:[%s2 + $0x8] sm:$0xff]
    %v89 = vld [vmem:[%s2 + $0x10] sm:$0xf]
    %v90 = vld [vmem:[%s2 + $0x14] sm:$0xff]
    %v91 = vld [vmem:[%s2 + $0x1c] sm:$0xff]
    %v92 = vld [vmem:[%s2 + $0x24] sm:$0xf]
    %v93 = vld [vmem:[%s2 + $0x28] sm:$0xff]
    %v94 = vld [vmem:[%s2 + $0x30] sm:$0xff]
    %v95 = vld [vmem:[%s2 + $0x38] sm:$0xf]
    %v96 = vld [vmem:[%s2 + $0x3c] sm:$0xff]
    %v97 = vld [vmem:[%s2 + $0x44] sm:$0xff]
    %v98 = vld [vmem:[%s2 + $0x4c] sm:$0xf]
    %v99 = vld [vmem:[%s2 + $0x50] sm:$0xff]
    %v100 = vld [vmem:[%s2 + $0x58] sm:$0xff]
    %v101 = vld [vmem:[%s2 + $0x60] sm:$0xf]
    %v102 = vld [vmem:[%s2 + $0x64] sm:$0xff]
    %v103 = vld [vmem:[%s2 + $0x6c] sm:$0xff]
    %v104 = vld [vmem:[%s2 + $0x74] sm:$0xf]
    %v105 = vld [vmem:[%s2 + $0x78] sm:$0xff]
    %v106 = vld [vmem:[%s2 + $0x80] sm:$0xff]
    %v107 = vld [vmem:[%s2 + $0x88] sm:$0xf]
    %v108 = vld [vmem:[%s2 + $0x8c] sm:$0xff]
    %v109 = vld [vmem:[%s2 + $0x94] sm:$0xff]
    %v110 = vld [vmem:[%s2 + $0x9c] sm:$0xf]
    %v111 = vld [vmem:[%s2 + $0xa0] sm:$0xff]
    %v112 = vld [vmem:[%s2 + $0xa8] sm:$0xff]
    %v113 = vld [vmem:[%s2 + $0xb0] sm:$0xf]
    %v114 = vld [vmem:[%s2 + $0xb4] sm:$0xff]
    %v115 = vld [vmem:[%s2 + $0xbc] sm:$0xff]
    %v116 = vld [vmem:[%s2 + $0xc4] sm:$0xf]
    %v117 = vld [vmem:[%s2 + $0xc8] sm:$0xff]
    %v118 = vld [vmem:[%s2 + $0xd0] sm:$0xff]
    %v119 = vld [vmem:[%s2 + $0xd8] sm:$0xf]
    %v120 = vld [vmem:[%s2 + $0xdc] sm:$0xff]
    %v121 = vld [vmem:[%s2 + $0xe4] sm:$0xff]
    %v122 = vld [vmem:[%s2 + $0xec] sm:$0xf]
    %v123 = vld [vmem:[%s2 + $0xf0] sm:$0xff]
    %v124 = vld [vmem:[%s2 + $0xf8] sm:$0xff]
    %v125 = vld [vmem:[%s2 + $0x100] sm:$0xf]
    %v126 = vld [vmem:[%s2 + $0x104] sm:$0xff]
    %v127 = vld [vmem:[%s2 + $0x10c] sm:$0xff]
    %v128 = vld [vmem:[%s2 + $0x114] sm:$0xf]
    %v129 = vld [vmem:[%s2 + $0x118] sm:$0xff]
    %v130 = vld [vmem:[%s2 + $0x120] sm:$0xff]
    %v131 = vld [vmem:[%s2 + $0x128] sm:$0xf]
    %v132 = vld [vmem:[%s2 + $0x12c] sm:$0xff]
    %v133 = vld [vmem:[%s2 + $0x134] sm:$0xff]
    %v134 = vld [vmem:[%s2 + $0x13c] sm:$0xf]
    %v135 = vld [vmem:[%s2 + $0x140] sm:$0xff]
    %v136 = vld [vmem:[%s2 + $0x148] sm:$0xff]
    %v137 = vld [vmem:[%s2 + $0x150] sm:$0xf]
    %v138 = vld [vmem:[%s2 + $0x154] sm:$0xff]
    %v139 = vld [vmem:[%s2 + $0x15c] sm:$0xff]
    %v140 = vld [vmem:[%s2 + $0x164] sm:$0xf]
    %v141 = vld [vmem:[%s2 + $0x168] sm:$0xff]
    %v142 = vld [vmem:[%s2 + $0x170] sm:$0xff]
    %v143 = vld [vmem:[%s2 + $0x178] sm:$0xf]
    %v144 = vld [vmem:[%s2 + $0x17c] sm:$0xff]
    %v145 = vld [vmem:[%s2 + $0x184] sm:$0xff]
    %v146 = vld [vmem:[%s2 + $0x18c] sm:$0xf]
    %v147 = vld [vmem:[%s2 + $0x190] sm:$0xff]
    %v148 = vld [vmem:[%s2 + $0x198] sm:$0xff]
    %v149 = vld [vmem:[%s2 + $0x1a0] sm:$0xf]
    %v150 = vld [vmem:[%s2 + $0x1a4] sm:$0xff]
    %v151 = vld [vmem:[%s2 + $0x1ac] sm:$0xff]
    %v152 = vld [vmem:[%s2 + $0x1b4] sm:$0xf]
    %v153 = vld [vmem:[%s2 + $0x1b8] sm:$0xff]
    %v154 = vld [vmem:[%s2 + $0x1c0] sm:$0xff]
    %v155 = vld [vmem:[%s2 + $0x1c8] sm:$0xf]
    %v156 = vld [vmem:[%s2 + $0x1cc] sm:$0xff]
    %v157 = vld [vmem:[%s2 + $0x1d4] sm:$0xff]
    %v158 = vld [vmem:[%s2 + $0x1dc] sm:$0xf]
    %v159 = vld [vmem:[%s2 + $0x1e0] sm:$0xff]
    %v160 = vld [vmem:[%s2 + $0x1e8] sm:$0xff]
    %v161 = vld [vmem:[%s2 + $0x1f0] sm:$0xf]
    %v162 = vld [vmem:[%s2 + $0x1f4] sm:$0xff]
    %v163 = vld [vmem:[%s2 + $0x1fc] sm:$0xff]
    %v164 = vld [vmem:[%s2 + $0x204] sm:$0xf]
    %v165 = vld [vmem:[%s2 + $0x208] sm:$0xff]
    %v166 = vld [vmem:[%s2 + $0x210] sm:$0xff]
    %v167 = vld [vmem:[%s2 + $0x218] sm:$0xf]
    %v168 = vld [vmem:[%s2 + $0x21c] sm:$0xff]
    %v169 = vld [vmem:[%s2 + $0x224] sm:$0xff]
    %v170 = vld [vmem:[%s2 + $0x22c] sm:$0xf]
    %v171 = vld [vmem:[%s2 + $0x230] sm:$0xff]
    %v172 = vld [vmem:[%s2 + $0x238] sm:$0xff]
    %v173 = vld [vmem:[%s2 + $0x240] sm:$0xf]
    %v174 = vld [vmem:[%s2 + $0x244] sm:$0xff]
    %v175 = vld [vmem:[%s2 + $0x24c] sm:$0xff]
    %v176 = vld [vmem:[%s2 + $0x254] sm:$0xf]
    %v177 = vld [vmem:[%s2 + $0x258] sm:$0xff]
    %v178 = vld [vmem:[%s2 + $0x260] sm:$0xff]
    %v179 = vld [vmem:[%s2 + $0x268] sm:$0xf]
    %v180 = vld [vmem:[%s2 + $0x26c] sm:$0xff]
    %v181 = vld [vmem:[%s2 + $0x274] sm:$0xff]
    %v182 = vld [vmem:[%s2 + $0x27c] sm:$0xf]
    %v183 = vperm.slane %v73, 0
    %v184 = vperm.slane %v74, 0
    %v185 = vperm.slane %v75, 0
    %v186 = vperm.slane %v76, 0
    %v187 = vperm.slane %v77, 0
    %v284 = vunpack.c.l.b16 %v87
    %v285 = vunpack.c.h.b16 %v87
    %v286 = vunpack.c.l.b16 %v88
    %v287 = vunpack.c.h.b16 %v88
    %v288 = vunpack.c.l.b16 %v89
    %v289 = vunpack.c.l.b16 %v90
    %v290 = vunpack.c.h.b16 %v90
    %v291 = vunpack.c.l.b16 %v91
    %v292 = vunpack.c.h.b16 %v91
    %v293 = vunpack.c.l.b16 %v92
    %v294 = vunpack.c.l.b16 %v93
    %v295 = vunpack.c.h.b16 %v93
    %v296 = vunpack.c.l.b16 %v94
    %v297 = vunpack.c.h.b16 %v94
    %v298 = vunpack.c.l.b16 %v95
    %v299 = vunpack.c.l.b16 %v96
    %v300 = vunpack.c.h.b16 %v96
    %v301 = vunpack.c.l.b16 %v97
    %v302 = vunpack.c.h.b16 %v97
    %v303 = vunpack.c.l.b16 %v98
    %v304 = vunpack.c.l.b16 %v99
    %v305 = vunpack.c.h.b16 %v99
    %v306 = vunpack.c.l.b16 %v100
    %v307 = vunpack.c.h.b16 %v100
    %v308 = vunpack.c.l.b16 %v101
    %v309 = vunpack.c.l.b16 %v102
    %v310 = vunpack.c.h.b16 %v102
    %v311 = vunpack.c.l.b16 %v103
    %v312 = vunpack.c.h.b16 %v103
    %v313 = vunpack.c.l.b16 %v104
    %v314 = vunpack.c.l.b16 %v105
    %v315 = vunpack.c.h.b16 %v105
    %v316 = vunpack.c.l.b16 %v106
    %v317 = vunpack.c.h.b16 %v106
    %v318 = vunpack.c.l.b16 %v107
    %v319 = vunpack.c.l.b16 %v108
    %v320 = vunpack.c.h.b16 %v108
    %v321 = vunpack.c.l.b16 %v109
    %v322 = vunpack.c.h.b16 %v109
    %v323 = vunpack.c.l.b16 %v110
    %v324 = vunpack.c.l.b16 %v111
    %v325 = vunpack.c.h.b16 %v111
    %v326 = vunpack.c.l.b16 %v112
    %v327 = vunpack.c.h.b16 %v112
    %v328 = vunpack.c.l.b16 %v113
    %v329 = vunpack.c.l.b16 %v114
    %v330 = vunpack.c.h.b16 %v114
    %v331 = vunpack.c.l.b16 %v115
    %v332 = vunpack.c.h.b16 %v115
    %v333 = vunpack.c.l.b16 %v116
    %v334 = vunpack.c.l.b16 %v117
    %v335 = vunpack.c.h.b16 %v117
    %v336 = vunpack.c.l.b16 %v118
    %v337 = vunpack.c.h.b16 %v118
    %v338 = vunpack.c.l.b16 %v119
    %v339 = vunpack.c.l.b16 %v120
    %v340 = vunpack.c.h.b16 %v120
    %v341 = vunpack.c.l.b16 %v121
    %v342 = vunpack.c.h.b16 %v121
    %v343 = vunpack.c.l.b16 %v122
    %v344 = vunpack.c.l.b16 %v123
    %v345 = vunpack.c.h.b16 %v123
    %v346 = vunpack.c.l.b16 %v124
    %v347 = vunpack.c.h.b16 %v124
    %v348 = vunpack.c.l.b16 %v125
    %v349 = vunpack.c.l.b16 %v126
    %v350 = vunpack.c.h.b16 %v126
    %v351 = vunpack.c.l.b16 %v127
    %v352 = vunpack.c.h.b16 %v127
    %v353 = vunpack.c.l.b16 %v128
    %v354 = vunpack.c.l.b16 %v129
    %v355 = vunpack.c.h.b16 %v129
    %v356 = vunpack.c.l.b16 %v130
    %v357 = vunpack.c.h.b16 %v130
    %v358 = vunpack.c.l.b16 %v131
    %v359 = vunpack.c.l.b16 %v132
    %v360 = vunpack.c.h.b16 %v132
    %v361 = vunpack.c.l.b16 %v133
    %v362 = vunpack.c.h.b16 %v133
    %v363 = vunpack.c.l.b16 %v134
    %v364 = vunpack.c.l.b16 %v135
    %v365 = vunpack.c.h.b16 %v135
    %v366 = vunpack.c.l.b16 %v136
    %v367 = vunpack.c.h.b16 %v136
    %v368 = vunpack.c.l.b16 %v137
    %v369 = vunpack.c.l.b16 %v138
    %v370 = vunpack.c.h.b16 %v138
    %v371 = vunpack.c.l.b16 %v139
    %v372 = vunpack.c.h.b16 %v139
    %v373 = vunpack.c.l.b16 %v140
    %v374 = vunpack.c.l.b16 %v141
    %v375 = vunpack.c.h.b16 %v141
    %v376 = vunpack.c.l.b16 %v142
    %v377 = vunpack.c.h.b16 %v142
    %v378 = vunpack.c.l.b16 %v143
    %v379 = vunpack.c.l.b16 %v144
    %v380 = vunpack.c.h.b16 %v144
    %v381 = vunpack.c.l.b16 %v145
    %v382 = vunpack.c.h.b16 %v145
    %v383 = vunpack.c.l.b16 %v146
    %v384 = vunpack.c.l.b16 %v147
    %v385 = vunpack.c.h.b16 %v147
    %v386 = vunpack.c.l.b16 %v148
    %v387 = vunpack.c.h.b16 %v148
    %v388 = vunpack.c.l.b16 %v149
    %v389 = vunpack.c.l.b16 %v150
    %v390 = vunpack.c.h.b16 %v150
    %v391 = vunpack.c.l.b16 %v151
    %v392 = vunpack.c.h.b16 %v151
    %v393 = vunpack.c.l.b16 %v152
    %v394 = vunpack.c.l.b16 %v153
    %v395 = vunpack.c.h.b16 %v153
    %v396 = vunpack.c.l.b16 %v154
    %v397 = vunpack.c.h.b16 %v154
    %v398 = vunpack.c.l.b16 %v155
    %v399 = vunpack.c.l.b16 %v156
    %v400 = vunpack.c.h.b16 %v156
    %v401 = vunpack.c.l.b16 %v157
    %v402 = vunpack.c.h.b16 %v157
    %v403 = vunpack.c.l.b16 %v158
    %v404 = vunpack.c.l.b16 %v159
    %v405 = vunpack.c.h.b16 %v159
    %v406 = vunpack.c.l.b16 %v160
    %v407 = vunpack.c.h.b16 %v160
    %v408 = vunpack.c.l.b16 %v161
    %v409 = vunpack.c.l.b16 %v162
    %v410 = vunpack.c.h.b16 %v162
    %v411 = vunpack.c.l.b16 %v163
    %v412 = vunpack.c.h.b16 %v163
    %v413 = vunpack.c.l.b16 %v164
    %v414 = vunpack.c.l.b16 %v165
    %v415 = vunpack.c.h.b16 %v165
    %v416 = vunpack.c.l.b16 %v166
    %v417 = vunpack.c.h.b16 %v166
    %v418 = vunpack.c.l.b16 %v167
    %v419 = vunpack.c.l.b16 %v168
    %v420 = vunpack.c.h.b16 %v168
    %v421 = vunpack.c.l.b16 %v169
    %v422 = vunpack.c.h.b16 %v169
    %v423 = vunpack.c.l.b16 %v170
    %v424 = vunpack.c.l.b16 %v171
    %v425 = vunpack.c.h.b16 %v171
    %v426 = vunpack.c.l.b16 %v172
    %v427 = vunpack.c.h.b16 %v172
    %v428 = vunpack.c.l.b16 %v173
    %v429 = vunpack.c.l.b16 %v174
    %v430 = vunpack.c.h.b16 %v174
    %v431 = vunpack.c.l.b16 %v175
    %v432 = vunpack.c.h.b16 %v175
    %v433 = vunpack.c.l.b16 %v176
    %v434 = vunpack.c.l.b16 %v177
    %v435 = vunpack.c.h.b16 %v177
    %v436 = vunpack.c.l.b16 %v178
    %v437 = vunpack.c.h.b16 %v178
    %v438 = vunpack.c.l.b16 %v179
    %v439 = vunpack.c.l.b16 %v180
    %v440 = vunpack.c.h.b16 %v180
    %v441 = vunpack.c.l.b16 %v181
    %v442 = vunpack.c.h.b16 %v181
    %v443 = vunpack.c.l.b16 %v182
    %v444 = vpack.c.b16 %v289, %v284
    %v445 = vpack.c.b16 %v290, %v285
    %v446 = vpack.c.b16 %v291, %v286
    %v447 = vpack.c.b16 %v292, %v287
    %v448 = vpack.c.b16 %v293, %v288
    %v449 = vpack.c.b16 %v299, %v294
    %v450 = vpack.c.b16 %v300, %v295
    %v451 = vpack.c.b16 %v301, %v296
    %v452 = vpack.c.b16 %v302, %v297
    %v453 = vpack.c.b16 %v303, %v298
    %v454 = vpack.c.b16 %v309, %v304
    %v455 = vpack.c.b16 %v310, %v305
    %v456 = vpack.c.b16 %v311, %v306
    %v457 = vpack.c.b16 %v312, %v307
    %v458 = vpack.c.b16 %v313, %v308
    %v459 = vpack.c.b16 %v319, %v314
    %v460 = vpack.c.b16 %v320, %v315
    %v461 = vpack.c.b16 %v321, %v316
    %v462 = vpack.c.b16 %v322, %v317
    %v463 = vpack.c.b16 %v323, %v318
    %v464 = vpack.c.b16 %v329, %v324
    %v465 = vpack.c.b16 %v330, %v325
    %v466 = vpack.c.b16 %v331, %v326
    %v467 = vpack.c.b16 %v332, %v327
    %v468 = vpack.c.b16 %v333, %v328
    %v469 = vpack.c.b16 %v339, %v334
    %v470 = vpack.c.b16 %v340, %v335
    %v471 = vpack.c.b16 %v341, %v336
    %v472 = vpack.c.b16 %v342, %v337
    %v473 = vpack.c.b16 %v343, %v338
    %v474 = vpack.c.b16 %v349, %v344
    %v475 = vpack.c.b16 %v350, %v345
    %v476 = vpack.c.b16 %v351, %v346
    %v477 = vpack.c.b16 %v352, %v347
    %v478 = vpack.c.b16 %v353, %v348
    %v479 = vpack.c.b16 %v359, %v354
    %v480 = vpack.c.b16 %v360, %v355
    %v481 = vpack.c.b16 %v361, %v356
    %v482 = vpack.c.b16 %v362, %v357
    %v483 = vpack.c.b16 %v363, %v358
    %v484 = vpack.c.b16 %v369, %v364
    %v485 = vpack.c.b16 %v370, %v365
    %v486 = vpack.c.b16 %v371, %v366
    %v487 = vpack.c.b16 %v372, %v367
    %v488 = vpack.c.b16 %v373, %v368
    %v489 = vpack.c.b16 %v379, %v374
    %v490 = vpack.c.b16 %v380, %v375
    %v491 = vpack.c.b16 %v381, %v376
    %v492 = vpack.c.b16 %v382, %v377
    %v493 = vpack.c.b16 %v383, %v378
    %v494 = vpack.c.b16 %v389, %v384
    %v495 = vpack.c.b16 %v390, %v385
    %v496 = vpack.c.b16 %v391, %v386
    %v497 = vpack.c.b16 %v392, %v387
    %v498 = vpack.c.b16 %v393, %v388
    %v499 = vpack.c.b16 %v399, %v394
    %v500 = vpack.c.b16 %v400, %v395
    %v501 = vpack.c.b16 %v401, %v396
    %v502 = vpack.c.b16 %v402, %v397
    %v503 = vpack.c.b16 %v403, %v398
    %v504 = vpack.c.b16 %v409, %v404
    %v505 = vpack.c.b16 %v410, %v405
    %v506 = vpack.c.b16 %v411, %v406
    %v507 = vpack.c.b16 %v412, %v407
    %v508 = vpack.c.b16 %v413, %v408
    %v509 = vpack.c.b16 %v419, %v414
    %v510 = vpack.c.b16 %v420, %v415
    %v511 = vpack.c.b16 %v421, %v416
    %v512 = vpack.c.b16 %v422, %v417
    %v513 = vpack.c.b16 %v423, %v418
    %v514 = vpack.c.b16 %v429, %v424
    %v515 = vpack.c.b16 %v430, %v425
    %v516 = vpack.c.b16 %v431, %v426
    %v517 = vpack.c.b16 %v432, %v427
    %v518 = vpack.c.b16 %v433, %v428
    %v519 = vpack.c.b16 %v439, %v434
    %v520 = vpack.c.b16 %v440, %v435
    %v521 = vpack.c.b16 %v441, %v436
    %v522 = vpack.c.b16 %v442, %v437
    %v523 = vpack.c.b16 %v443, %v438
    %604 = vmatpush.bf16.msra.mxu0 %v479
    %605 = vmatpush.bf16.msra.mxu0 %v474
    %606 = vmatpush.bf16.msra.mxu0 %v469
    %607 = vmatpush.bf16.msra.mxu0 %v464
    %608 = vmatpush.bf16.msra.mxu0 %v459
    %609 = vmatpush.bf16.msra.mxu0 %v454
    %610 = vmatpush.bf16.msra.mxu0 %v449
    %611 = vmatpush.bf16.msra.mxu0 %v444
    %612 = vmatmul.bf16.gmra.mxu0 %v85
    %v613 = vpop.f32.mrf.mxu0
    %v614 = vadd.f32 %v183, %v613
    %v615 = vpop.f32.mrf.mxu0
    %616 = vdwg.mxu0
    %617 = vmatpush.bf16.msra.mxu0 %v519
    %618 = vmatpush.bf16.msra.mxu0 %v514
    %619 = vmatpush.bf16.msra.mxu0 %v509
    %620 = vmatpush.bf16.msra.mxu0 %v504
    %621 = vmatpush.bf16.msra.mxu0 %v499
    %622 = vmatpush.bf16.msra.mxu0 %v494
    %623 = vmatpush.bf16.msra.mxu0 %v489
    %624 = vmatpush.bf16.msra.mxu0 %v484
    %625 = vmatmul.bf16.gmra.mxu0 %v86
    %v626 = vpop.f32.mrf.mxu0
    %v627 = vadd.f32 %v614, %v626
    %v628 = vpop.f32.mrf.mxu0
    %629 = vdwg.mxu0
    %630 = vmatpush.bf16.msra.mxu0 %v480
    %631 = vmatpush.bf16.msra.mxu0 %v475
    %632 = vmatpush.bf16.msra.mxu0 %v470
    %633 = vmatpush.bf16.msra.mxu0 %v465
    %634 = vmatpush.bf16.msra.mxu0 %v460
    %635 = vmatpush.bf16.msra.mxu0 %v455
    %636 = vmatpush.bf16.msra.mxu0 %v450
    %637 = vmatpush.bf16.msra.mxu0 %v445
    %638 = vmatmul.bf16.gmra.mxu0 %v85
    %v639 = vpop.f32.mrf.mxu0
    %v640 = vadd.f32 %v184, %v639
    %v641 = vpop.f32.mrf.mxu0
    %642 = vdwg.mxu0
    %643 = vmatpush.bf16.msra.mxu0 %v520
    %644 = vmatpush.bf16.msra.mxu0 %v515
    %645 = vmatpush.bf16.msra.mxu0 %v510
    %646 = vmatpush.bf16.msra.mxu0 %v505
    %647 = vmatpush.bf16.msra.mxu0 %v500
    %648 = vmatpush.bf16.msra.mxu0 %v495
    %649 = vmatpush.bf16.msra.mxu0 %v490
    %650 = vmatpush.bf16.msra.mxu0 %v485
    %651 = vmatmul.bf16.gmra.mxu0 %v86
    %v652 = vpop.f32.mrf.mxu0
    %v653 = vadd.f32 %v640, %v652
    %v654 = vpop.f32.mrf.mxu0
    %655 = vdwg.mxu0
    %656 = vmatpush.bf16.msra.mxu0 %v481
    %657 = vmatpush.bf16.msra.mxu0 %v476
    %658 = vmatpush.bf16.msra.mxu0 %v471
    %659 = vmatpush.bf16.msra.mxu0 %v466
    %660 = vmatpush.bf16.msra.mxu0 %v461
    %661 = vmatpush.bf16.msra.mxu0 %v456
    %662 = vmatpush.bf16.msra.mxu0 %v451
    %663 = vmatpush.bf16.msra.mxu0 %v446
    %664 = vmatmul.bf16.gmra.mxu0 %v85
    %v665 = vpop.f32.mrf.mxu0
    %v666 = vadd.f32 %v185, %v665
    %v667 = vpop.f32.mrf.mxu0
    %668 = vdwg.mxu0
    %669 = vmatpush.bf16.msra.mxu0 %v521
    %670 = vmatpush.bf16.msra.mxu0 %v516
    %671 = vmatpush.bf16.msra.mxu0 %v511
    %672 = vmatpush.bf16.msra.mxu0 %v506
    %673 = vmatpush.bf16.msra.mxu0 %v501
    %674 = vmatpush.bf16.msra.mxu0 %v496
    %675 = vmatpush.bf16.msra.mxu0 %v491
    %676 = vmatpush.bf16.msra.mxu0 %v486
    %677 = vmatmul.bf16.gmra.mxu0 %v86
    %v678 = vpop.f32.mrf.mxu0
    %v679 = vadd.f32 %v666, %v678
    %v680 = vpop.f32.mrf.mxu0
    %681 = vdwg.mxu0
    %682 = vmatpush.bf16.msra.mxu0 %v482
    %683 = vmatpush.bf16.msra.mxu0 %v477
    %684 = vmatpush.bf16.msra.mxu0 %v472
    %685 = vmatpush.bf16.msra.mxu0 %v467
    %686 = vmatpush.bf16.msra.mxu0 %v462
    %687 = vmatpush.bf16.msra.mxu0 %v457
    %688 = vmatpush.bf16.msra.mxu0 %v452
    %689 = vmatpush.bf16.msra.mxu0 %v447
    %690 = vmatmul.bf16.gmra.mxu0 %v85
    %v691 = vpop.f32.mrf.mxu0
    %v692 = vadd.f32 %v186, %v691
    %v693 = vpop.f32.mrf.mxu0
    %694 = vdwg.mxu0
    %695 = vmatpush.bf16.msra.mxu0 %v522
    %696 = vmatpush.bf16.msra.mxu0 %v517
    %697 = vmatpush.bf16.msra.mxu0 %v512
    %698 = vmatpush.bf16.msra.mxu0 %v507
    %699 = vmatpush.bf16.msra.mxu0 %v502
    %700 = vmatpush.bf16.msra.mxu0 %v497
    %701 = vmatpush.bf16.msra.mxu0 %v492
    %702 = vmatpush.bf16.msra.mxu0 %v487
    %703 = vmatmul.bf16.gmra.mxu0 %v86
    %v704 = vpop.f32.mrf.mxu0
    %v705 = vadd.f32 %v692, %v704
    %v706 = vpop.f32.mrf.mxu0
    %707 = vdwg.mxu0
    %708 = vmatpush.bf16.msra.mxu0 %v483
    %709 = vmatpush.bf16.msra.mxu0 %v478
    %710 = vmatpush.bf16.msra.mxu0 %v473
    %711 = vmatpush.bf16.msra.mxu0 %v468
    %712 = vmatpush.bf16.msra.mxu0 %v463
    %713 = vmatpush.bf16.msra.mxu0 %v458
    %714 = vmatpush.bf16.msra.mxu0 %v453
    %715 = vmatpush.bf16.msra.mxu0 %v448
    %716 = vmatmul.bf16.gmra.mxu0 %v85
    %v717 = vpop.f32.mrf.mxu0
    %v718 = vadd.f32 %v187, %v717
    %v719 = vpop.f32.mrf.mxu0
    %720 = vdwg.mxu0
    %721 = vmatpush.bf16.msra.mxu0 %v523
    %722 = vmatpush.bf16.msra.mxu0 %v518
    %723 = vmatpush.bf16.msra.mxu0 %v513
    %724 = vmatpush.bf16.msra.mxu0 %v508
    %725 = vmatpush.bf16.msra.mxu0 %v503
    %726 = vmatpush.bf16.msra.mxu0 %v498
    %727 = vmatpush.bf16.msra.mxu0 %v493
    %728 = vmatpush.bf16.msra.mxu0 %v488
    %729 = vmatmul.bf16.gmra.mxu0 %v86
    %v730 = vpop.f32.mrf.mxu0
    %v731 = vadd.f32 %v718, %v730
    %v732 = vpop.f32.mrf.mxu0
    %733 = vdwg.mxu0
    %v734 = vmax.f32 %v627, 0.0
    %v735 = vmax.f32 %v653, 0.0
    %v736 = vmax.f32 %v679, 0.0
    %v737 = vmax.f32 %v705, 0.0
    %v738 = vmax.f32 %v731, 0.0
    %v739 = vpack.c.bf16 %v734, %v734
    %v740 = vpack.c.bf16 %v735, %v735
    %v741 = vpack.c.bf16 %v736, %v736
    %v742 = vpack.c.bf16 %v737, %v737
    %v743 = vpack.c.bf16 %v738, %v738
    %v744 = vld [vmem:[%s3] sm:$0xff]
    %v745 = vld [vmem:[%s3 + $0x8] sm:$0xf]
    %v746 = vld [vmem:[%s3 + $0xc] sm:$0xff]
    %v747 = vld [vmem:[%s3 + $0x14] sm:$0xf]
    %v748 = vld [vmem:[%s3 + $0x18] sm:$0xff]
    %v749 = vld [vmem:[%s3 + $0x20] sm:$0xf]
    %v750 = vld [vmem:[%s3 + $0x24] sm:$0xff]
    %v751 = vld [vmem:[%s3 + $0x2c] sm:$0xf]
    %v752 = vld [vmem:[%s3 + $0x30] sm:$0xff]
    %v753 = vld [vmem:[%s3 + $0x38] sm:$0xf]
    %v754 = vld [vmem:[%s3 + $0x3c] sm:$0xff]
    %v755 = vld [vmem:[%s3 + $0x44] sm:$0xf]
    %v756 = vld [vmem:[%s3 + $0x48] sm:$0xff]
    %v757 = vld [vmem:[%s3 + $0x50] sm:$0xf]
    %v758 = vld [vmem:[%s3 + $0x54] sm:$0xff]
    %v759 = vld [vmem:[%s3 + $0x5c] sm:$0xf]
    %v760 = vld [vmem:[%s3 + $0x60] sm:$0xff]
    %v761 = vld [vmem:[%s3 + $0x68] sm:$0xf]
    %v762 = vld [vmem:[%s3 + $0x6c] sm:$0xff]
    %v763 = vld [vmem:[%s3 + $0x74] sm:$0xf]
    %v764 = vld [vmem:[%s3 + $0x78] sm:$0xff]
    %v765 = vld [vmem:[%s3 + $0x80] sm:$0xf]
    %v766 = vld [vmem:[%s3 + $0x84] sm:$0xff]
    %v767 = vld [vmem:[%s3 + $0x8c] sm:$0xf]
    %v768 = vld [vmem:[%s3 + $0x90] sm:$0xff]
    %v769 = vld [vmem:[%s3 + $0x98] sm:$0xf]
    %v770 = vld [vmem:[%s3 + $0x9c] sm:$0xff]
    %v771 = vld [vmem:[%s3 + $0xa4] sm:$0xf]
    %v772 = vld [vmem:[%s3 + $0xa8] sm:$0xff]
    %v773 = vld [vmem:[%s3 + $0xb0] sm:$0xf]
    %v774 = vld [vmem:[%s3 + $0xb4] sm:$0xff]
    %v775 = vld [vmem:[%s3 + $0xbc] sm:$0xf]
    %v776 = vld [vmem:[%s3 + $0xc0] sm:$0xff]
    %v777 = vld [vmem:[%s3 + $0xc8] sm:$0xf]
    %v778 = vld [vmem:[%s3 + $0xcc] sm:$0xff]
    %v779 = vld [vmem:[%s3 + $0xd4] sm:$0xf]
    %v780 = vld [vmem:[%s3 + $0xd8] sm:$0xff]
    %v781 = vld [vmem:[%s3 + $0xe0] sm:$0xf]
    %v782 = vld [vmem:[%s3 + $0xe4] sm:$0xff]
    %v783 = vld [vmem:[%s3 + $0xec] sm:$0xf]
    %v784 = vld [vmem:[%s3 + $0xf0] sm:$0xff]
    %v785 = vld [vmem:[%s3 + $0xf8] sm:$0xf]
    %v786 = vld [vmem:[%s3 + $0xfc] sm:$0xff]
    %v787 = vld [vmem:[%s3 + $0x104] sm:$0xf]
    %v788 = vld [vmem:[%s3 + $0x108] sm:$0xff]
    %v789 = vld [vmem:[%s3 + $0x110] sm:$0xf]
    %v790 = vld [vmem:[%s3 + $0x114] sm:$0xff]
    %v791 = vld [vmem:[%s3 + $0x11c] sm:$0xf]
    %v792 = vld [vmem:[%s3 + $0x120] sm:$0xff]
    %v793 = vld [vmem:[%s3 + $0x128] sm:$0xf]
    %v794 = vld [vmem:[%s3 + $0x12c] sm:$0xff]
    %v795 = vld [vmem:[%s3 + $0x134] sm:$0xf]
    %v796 = vld [vmem:[%s3 + $0x138] sm:$0xff]
    %v797 = vld [vmem:[%s3 + $0x140] sm:$0xf]
    %v798 = vld [vmem:[%s3 + $0x144] sm:$0xff]
    %v799 = vld [vmem:[%s3 + $0x14c] sm:$0xf]
    %v800 = vld [vmem:[%s3 + $0x150] sm:$0xff]
    %v801 = vld [vmem:[%s3 + $0x158] sm:$0xf]
    %v802 = vld [vmem:[%s3 + $0x15c] sm:$0xff]
    %v803 = vld [vmem:[%s3 + $0x164] sm:$0xf]
    %v804 = vld [vmem:[%s3 + $0x168] sm:$0xff]
    %v805 = vld [vmem:[%s3 + $0x170] sm:$0xf]
    %v806 = vld [vmem:[%s3 + $0x174] sm:$0xff]
    %v807 = vld [vmem:[%s3 + $0x17c] sm:$0xf]
    %v808 = vld [vmem:[%s3 + $0x180] sm:$0xff]
    %v809 = vld [vmem:[%s3 + $0x188] sm:$0xf]
    %v810 = vld [vmem:[%s3 + $0x18c] sm:$0xff]
    %v811 = vld [vmem:[%s3 + $0x194] sm:$0xf]
    %v812 = vld [vmem:[%s3 + $0x198] sm:$0xff]
    %v813 = vld [vmem:[%s3 + $0x1a0] sm:$0xf]
    %v814 = vld [vmem:[%s3 + $0x1a4] sm:$0xff]
    %v815 = vld [vmem:[%s3 + $0x1ac] sm:$0xf]
    %v816 = vld [vmem:[%s3 + $0x1b0] sm:$0xff]
    %v817 = vld [vmem:[%s3 + $0x1b8] sm:$0xf]
    %v818 = vld [vmem:[%s3 + $0x1bc] sm:$0xff]
    %v819 = vld [vmem:[%s3 + $0x1c4] sm:$0xf]
    %v820 = vld [vmem:[%s3 + $0x1c8] sm:$0xff]
    %v821 = vld [vmem:[%s3 + $0x1d0] sm:$0xf]
    %v822 = vld [vmem:[%s3 + $0x1d4] sm:$0xff]
    %v823 = vld [vmem:[%s3 + $0x1dc] sm:$0xf]
    %v824 = vld [vmem:[%s3 + $0x1e0] sm:$0xff]
    %v825 = vld [vmem:[%s3 + $0x1e8] sm:$0xf]
    %v826 = vld [vmem:[%s3 + $0x1ec] sm:$0xff]
    %v827 = vld [vmem:[%s3 + $0x1f4] sm:$0xf]
    %v828 = vld [vmem:[%s3 + $0x1f8] sm:$0xff]
    %v829 = vld [vmem:[%s3 + $0x200] sm:$0xf]
    %v830 = vld [vmem:[%s3 + $0x204] sm:$0xff]
    %v831 = vld [vmem:[%s3 + $0x20c] sm:$0xf]
    %v832 = vld [vmem:[%s3 + $0x210] sm:$0xff]
    %v833 = vld [vmem:[%s3 + $0x218] sm:$0xf]
    %v834 = vld [vmem:[%s3 + $0x21c] sm:$0xff]
    %v835 = vld [vmem:[%s3 + $0x224] sm:$0xf]
    %v836 = vld [vmem:[%s3 + $0x228] sm:$0xff]
    %v837 = vld [vmem:[%s3 + $0x230] sm:$0xf]
    %v838 = vld [vmem:[%s3 + $0x234] sm:$0xff]
    %v839 = vld [vmem:[%s3 + $0x23c] sm:$0xf]
    %v840 = vld [vmem:[%s3 + $0x240] sm:$0xff]
    %v841 = vld [vmem:[%s3 + $0x248] sm:$0xf]
    %v842 = vld [vmem:[%s3 + $0x24c] sm:$0xff]
    %v843 = vld [vmem:[%s3 + $0x254] sm:$0xf]
    %v844 = vld [vmem:[%s3 + $0x258] sm:$0xff]
    %v845 = vld [vmem:[%s3 + $0x260] sm:$0xf]
    %v846 = vld [vmem:[%s3 + $0x264] sm:$0xff]
    %v847 = vld [vmem:[%s3 + $0x26c] sm:$0xf]
    %v848 = vld [vmem:[%s3 + $0x270] sm:$0xff]
    %v849 = vld [vmem:[%s3 + $0x278] sm:$0xf]
    %v850 = vld [vmem:[%s3 + $0x27c] sm:$0xff]
    %v851 = vld [vmem:[%s3 + $0x284] sm:$0xf]
    %v852 = vld [vmem:[%s3 + $0x288] sm:$0xff]
    %v853 = vld [vmem:[%s3 + $0x290] sm:$0xf]
    %v854 = vld [vmem:[%s3 + $0x294] sm:$0xff]
    %v855 = vld [vmem:[%s3 + $0x29c] sm:$0xf]
    %v856 = vld [vmem:[%s3 + $0x2a0] sm:$0xff]
    %v857 = vld [vmem:[%s3 + $0x2a8] sm:$0xf]
    %v858 = vld [vmem:[%s3 + $0x2ac] sm:$0xff]
    %v859 = vld [vmem:[%s3 + $0x2b4] sm:$0xf]
    %v860 = vld [vmem:[%s3 + $0x2b8] sm:$0xff]
    %v861 = vld [vmem:[%s3 + $0x2c0] sm:$0xf]
    %v862 = vld [vmem:[%s3 + $0x2c4] sm:$0xff]
    %v863 = vld [vmem:[%s3 + $0x2cc] sm:$0xf]
    %v864 = vld [vmem:[%s3 + $0x2d0] sm:$0xff]
    %v865 = vld [vmem:[%s3 + $0x2d8] sm:$0xf]
    %v866 = vld [vmem:[%s3 + $0x2dc] sm:$0xff]
    %v867 = vld [vmem:[%s3 + $0x2e4] sm:$0xf]
    %v868 = vld [vmem:[%s3 + $0x2e8] sm:$0xff]
    %v869 = vld [vmem:[%s3 + $0x2f0] sm:$0xf]
    %v870 = vld [vmem:[%s3 + $0x2f4] sm:$0xff]
    %v871 = vld [vmem:[%s3 + $0x2fc] sm:$0xf]
    %v872 = vld [vmem:[%s3 + $0x300] sm:$0xff]
    %v873 = vld [vmem:[%s3 + $0x308] sm:$0xf]
    %v874 = vld [vmem:[%s3 + $0x30c] sm:$0xff]
    %v875 = vld [vmem:[%s3 + $0x314] sm:$0xf]
    %v876 = vld [vmem:[%s3 + $0x318] sm:$0xff]
    %v877 = vld [vmem:[%s3 + $0x320] sm:$0xf]
    %v878 = vld [vmem:[%s3 + $0x324] sm:$0xff]
    %v879 = vld [vmem:[%s3 + $0x32c] sm:$0xf]
    %v880 = vld [vmem:[%s3 + $0x330] sm:$0xff]
    %v881 = vld [vmem:[%s3 + $0x338] sm:$0xf]
    %v882 = vld [vmem:[%s3 + $0x33c] sm:$0xff]
    %v883 = vld [vmem:[%s3 + $0x344] sm:$0xf]
    %v884 = vld [vmem:[%s3 + $0x348] sm:$0xff]
    %v885 = vld [vmem:[%s3 + $0x350] sm:$0xf]
    %v886 = vld [vmem:[%s3 + $0x354] sm:$0xff]
    %v887 = vld [vmem:[%s3 + $0x35c] sm:$0xf]
    %v888 = vld [vmem:[%s3 + $0x360] sm:$0xff]
    %v889 = vld [vmem:[%s3 + $0x368] sm:$0xf]
    %v890 = vld [vmem:[%s3 + $0x36c] sm:$0xff]
    %v891 = vld [vmem:[%s3 + $0x374] sm:$0xf]
    %v892 = vld [vmem:[%s3 + $0x378] sm:$0xff]
    %v893 = vld [vmem:[%s3 + $0x380] sm:$0xf]
    %v894 = vld [vmem:[%s3 + $0x384] sm:$0xff]
    %v895 = vld [vmem:[%s3 + $0x38c] sm:$0xf]
    %v896 = vld [vmem:[%s3 + $0x390] sm:$0xff]
    %v897 = vld [vmem:[%s3 + $0x398] sm:$0xf]
    %v898 = vld [vmem:[%s3 + $0x39c] sm:$0xff]
    %v899 = vld [vmem:[%s3 + $0x3a4] sm:$0xf]
    %v900 = vld [vmem:[%s3 + $0x3a8] sm:$0xff]
    %v901 = vld [vmem:[%s3 + $0x3b0] sm:$0xf]
    %v902 = vld [vmem:[%s3 + $0x3b4] sm:$0xff]
    %v903 = vld [vmem:[%s3 + $0x3bc] sm:$0xf]
    %v904 = vperm.slane %v73, 1
    %v905 = vperm.slane %v74, 1
    %v906 = vperm.slane %v75, 1
    %v1067 = vunpack.c.l.b16 %v744
    %v1068 = vunpack.c.h.b16 %v744
    %v1069 = vunpack.c.l.b16 %v745
    %v1070 = vunpack.c.l.b16 %v746
    %v1071 = vunpack.c.h.b16 %v746
    %v1072 = vunpack.c.l.b16 %v747
    %v1073 = vunpack.c.l.b16 %v748
    %v1074 = vunpack.c.h.b16 %v748
    %v1075 = vunpack.c.l.b16 %v749
    %v1076 = vunpack.c.l.b16 %v750
    %v1077 = vunpack.c.h.b16 %v750
    %v1078 = vunpack.c.l.b16 %v751
    %v1079 = vunpack.c.l.b16 %v752
    %v1080 = vunpack.c.h.b16 %v752
    %v1081 = vunpack.c.l.b16 %v753
    %v1082 = vunpack.c.l.b16 %v754
    %v1083 = vunpack.c.h.b16 %v754
    %v1084 = vunpack.c.l.b16 %v755
    %v1085 = vunpack.c.l.b16 %v756
    %v1086 = vunpack.c.h.b16 %v756
    %v1087 = vunpack.c.l.b16 %v757
    %v1088 = vunpack.c.l.b16 %v758
    %v1089 = vunpack.c.h.b16 %v758
    %v1090 = vunpack.c.l.b16 %v759
    %v1091 = vunpack.c.l.b16 %v760
    %v1092 = vunpack.c.h.b16 %v760
    %v1093 = vunpack.c.l.b16 %v761
    %v1094 = vunpack.c.l.b16 %v762
    %v1095 = vunpack.c.h.b16 %v762
    %v1096 = vunpack.c.l.b16 %v763
    %v1097 = vunpack.c.l.b16 %v764
    %v1098 = vunpack.c.h.b16 %v764
    %v1099 = vunpack.c.l.b16 %v765
    %v1100 = vunpack.c.l.b16 %v766
    %v1101 = vunpack.c.h.b16 %v766
    %v1102 = vunpack.c.l.b16 %v767
    %v1103 = vunpack.c.l.b16 %v768
    %v1104 = vunpack.c.h.b16 %v768
    %v1105 = vunpack.c.l.b16 %v769
    %v1106 = vunpack.c.l.b16 %v770
    %v1107 = vunpack.c.h.b16 %v770
    %v1108 = vunpack.c.l.b16 %v771
    %v1109 = vunpack.c.l.b16 %v772
    %v1110 = vunpack.c.h.b16 %v772
    %v1111 = vunpack.c.l.b16 %v773
    %v1112 = vunpack.c.l.b16 %v774
    %v1113 = vunpack.c.h.b16 %v774
    %v1114 = vunpack.c.l.b16 %v775
    %v1115 = vunpack.c.l.b16 %v776
    %v1116 = vunpack.c.h.b16 %v776
    %v1117 = vunpack.c.l.b16 %v777
    %v1118 = vunpack.c.l.b16 %v778
    %v1119 = vunpack.c.h.b16 %v778
    %v1120 = vunpack.c.l.b16 %v779
    %v1121 = vunpack.c.l.b16 %v780
    %v1122 = vunpack.c.h.b16 %v780
    %v1123 = vunpack.c.l.b16 %v781
    %v1124 = vunpack.c.l.b16 %v782
    %v1125 = vunpack.c.h.b16 %v782
    %v1126 = vunpack.c.l.b16 %v783
    %v1127 = vunpack.c.l.b16 %v784
    %v1128 = vunpack.c.h.b16 %v784
    %v1129 = vunpack.c.l.b16 %v785
    %v1130 = vunpack.c.l.b16 %v786
    %v1131 = vunpack.c.h.b16 %v786
    %v1132 = vunpack.c.l.b16 %v787
    %v1133 = vunpack.c.l.b16 %v788
    %v1134 = vunpack.c.h.b16 %v788
    %v1135 = vunpack.c.l.b16 %v789
    %v1136 = vunpack.c.l.b16 %v790
    %v1137 = vunpack.c.h.b16 %v790
    %v1138 = vunpack.c.l.b16 %v791
    %v1139 = vunpack.c.l.b16 %v792
    %v1140 = vunpack.c.h.b16 %v792
    %v1141 = vunpack.c.l.b16 %v793
    %v1142 = vunpack.c.l.b16 %v794
    %v1143 = vunpack.c.h.b16 %v794
    %v1144 = vunpack.c.l.b16 %v795
    %v1145 = vunpack.c.l.b16 %v796
    %v1146 = vunpack.c.h.b16 %v796
    %v1147 = vunpack.c.l.b16 %v797
    %v1148 = vunpack.c.l.b16 %v798
    %v1149 = vunpack.c.h.b16 %v798
    %v1150 = vunpack.c.l.b16 %v799
    %v1151 = vunpack.c.l.b16 %v800
    %v1152 = vunpack.c.h.b16 %v800
    %v1153 = vunpack.c.l.b16 %v801
    %v1154 = vunpack.c.l.b16 %v802
    %v1155 = vunpack.c.h.b16 %v802
    %v1156 = vunpack.c.l.b16 %v803
    %v1157 = vunpack.c.l.b16 %v804
    %v1158 = vunpack.c.h.b16 %v804
    %v1159 = vunpack.c.l.b16 %v805
    %v1160 = vunpack.c.l.b16 %v806
    %v1161 = vunpack.c.h.b16 %v806
    %v1162 = vunpack.c.l.b16 %v807
    %v1163 = vunpack.c.l.b16 %v808
    %v1164 = vunpack.c.h.b16 %v808
    %v1165 = vunpack.c.l.b16 %v809
    %v1166 = vunpack.c.l.b16 %v810
    %v1167 = vunpack.c.h.b16 %v810
    %v1168 = vunpack.c.l.b16 %v811
    %v1169 = vunpack.c.l.b16 %v812
    %v1170 = vunpack.c.h.b16 %v812
    %v1171 = vunpack.c.l.b16 %v813
    %v1172 = vunpack.c.l.b16 %v814
    %v1173 = vunpack.c.h.b16 %v814
    %v1174 = vunpack.c.l.b16 %v815
    %v1175 = vunpack.c.l.b16 %v816
    %v1176 = vunpack.c.h.b16 %v816
    %v1177 = vunpack.c.l.b16 %v817
    %v1178 = vunpack.c.l.b16 %v818
    %v1179 = vunpack.c.h.b16 %v818
    %v1180 = vunpack.c.l.b16 %v819
    %v1181 = vunpack.c.l.b16 %v820
    %v1182 = vunpack.c.h.b16 %v820
    %v1183 = vunpack.c.l.b16 %v821
    %v1184 = vunpack.c.l.b16 %v822
    %v1185 = vunpack.c.h.b16 %v822
    %v1186 = vunpack.c.l.b16 %v823
    %v1187 = vunpack.c.l.b16 %v824
    %v1188 = vunpack.c.h.b16 %v824
    %v1189 = vunpack.c.l.b16 %v825
    %v1190 = vunpack.c.l.b16 %v826
    %v1191 = vunpack.c.h.b16 %v826
    %v1192 = vunpack.c.l.b16 %v827
    %v1193 = vunpack.c.l.b16 %v828
    %v1194 = vunpack.c.h.b16 %v828
    %v1195 = vunpack.c.l.b16 %v829
    %v1196 = vunpack.c.l.b16 %v830
    %v1197 = vunpack.c.h.b16 %v830
    %v1198 = vunpack.c.l.b16 %v831
    %v1199 = vunpack.c.l.b16 %v832
    %v1200 = vunpack.c.h.b16 %v832
    %v1201 = vunpack.c.l.b16 %v833
    %v1202 = vunpack.c.l.b16 %v834
    %v1203 = vunpack.c.h.b16 %v834
    %v1204 = vunpack.c.l.b16 %v835
    %v1205 = vunpack.c.l.b16 %v836
    %v1206 = vunpack.c.h.b16 %v836
    %v1207 = vunpack.c.l.b16 %v837
    %v1208 = vunpack.c.l.b16 %v838
    %v1209 = vunpack.c.h.b16 %v838
    %v1210 = vunpack.c.l.b16 %v839
    %v1211 = vunpack.c.l.b16 %v840
    %v1212 = vunpack.c.h.b16 %v840
    %v1213 = vunpack.c.l.b16 %v841
    %v1214 = vunpack.c.l.b16 %v842
    %v1215 = vunpack.c.h.b16 %v842
    %v1216 = vunpack.c.l.b16 %v843
    %v1217 = vunpack.c.l.b16 %v844
    %v1218 = vunpack.c.h.b16 %v844
    %v1219 = vunpack.c.l.b16 %v845
    %v1220 = vunpack.c.l.b16 %v846
    %v1221 = vunpack.c.h.b16 %v846
    %v1222 = vunpack.c.l.b16 %v847
    %v1223 = vunpack.c.l.b16 %v848
    %v1224 = vunpack.c.h.b16 %v848
    %v1225 = vunpack.c.l.b16 %v849
    %v1226 = vunpack.c.l.b16 %v850
    %v1227 = vunpack.c.h.b16 %v850
    %v1228 = vunpack.c.l.b16 %v851
    %v1229 = vunpack.c.l.b16 %v852
    %v1230 = vunpack.c.h.b16 %v852
    %v1231 = vunpack.c.l.b16 %v853
    %v1232 = vunpack.c.l.b16 %v854
    %v1233 = vunpack.c.h.b16 %v854
    %v1234 = vunpack.c.l.b16 %v855
    %v1235 = vunpack.c.l.b16 %v856
    %v1236 = vunpack.c.h.b16 %v856
    %v1237 = vunpack.c.l.b16 %v857
    %v1238 = vunpack.c.l.b16 %v858
    %v1239 = vunpack.c.h.b16 %v858
    %v1240 = vunpack.c.l.b16 %v859
    %v1241 = vunpack.c.l.b16 %v860
    %v1242 = vunpack.c.h.b16 %v860
    %v1243 = vunpack.c.l.b16 %v861
    %v1244 = vunpack.c.l.b16 %v862
    %v1245 = vunpack.c.h.b16 %v862
    %v1246 = vunpack.c.l.b16 %v863
    %v1247 = vunpack.c.l.b16 %v864
    %v1248 = vunpack.c.h.b16 %v864
    %v1249 = vunpack.c.l.b16 %v865
    %v1250 = vunpack.c.l.b16 %v866
    %v1251 = vunpack.c.h.b16 %v866
    %v1252 = vunpack.c.l.b16 %v867
    %v1253 = vunpack.c.l.b16 %v868
    %v1254 = vunpack.c.h.b16 %v868
    %v1255 = vunpack.c.l.b16 %v869
    %v1256 = vunpack.c.l.b16 %v870
    %v1257 = vunpack.c.h.b16 %v870
    %v1258 = vunpack.c.l.b16 %v871
    %v1259 = vunpack.c.l.b16 %v872
    %v1260 = vunpack.c.h.b16 %v872
    %v1261 = vunpack.c.l.b16 %v873
    %v1262 = vunpack.c.l.b16 %v874
    %v1263 = vunpack.c.h.b16 %v874
    %v1264 = vunpack.c.l.b16 %v875
    %v1265 = vunpack.c.l.b16 %v876
    %v1266 = vunpack.c.h.b16 %v876
    %v1267 = vunpack.c.l.b16 %v877
    %v1268 = vunpack.c.l.b16 %v878
    %v1269 = vunpack.c.h.b16 %v878
    %v1270 = vunpack.c.l.b16 %v879
    %v1271 = vunpack.c.l.b16 %v880
    %v1272 = vunpack.c.h.b16 %v880
    %v1273 = vunpack.c.l.b16 %v881
    %v1274 = vunpack.c.l.b16 %v882
    %v1275 = vunpack.c.h.b16 %v882
    %v1276 = vunpack.c.l.b16 %v883
    %v1277 = vunpack.c.l.b16 %v884
    %v1278 = vunpack.c.h.b16 %v884
    %v1279 = vunpack.c.l.b16 %v885
    %v1280 = vunpack.c.l.b16 %v886
    %v1281 = vunpack.c.h.b16 %v886
    %v1282 = vunpack.c.l.b16 %v887
    %v1283 = vunpack.c.l.b16 %v888
    %v1284 = vunpack.c.h.b16 %v888
    %v1285 = vunpack.c.l.b16 %v889
    %v1286 = vunpack.c.l.b16 %v890
    %v1287 = vunpack.c.h.b16 %v890
    %v1288 = vunpack.c.l.b16 %v891
    %v1289 = vunpack.c.l.b16 %v892
    %v1290 = vunpack.c.h.b16 %v892
    %v1291 = vunpack.c.l.b16 %v893
    %v1292 = vunpack.c.l.b16 %v894
    %v1293 = vunpack.c.h.b16 %v894
    %v1294 = vunpack.c.l.b16 %v895
    %v1295 = vunpack.c.l.b16 %v896
    %v1296 = vunpack.c.h.b16 %v896
    %v1297 = vunpack.c.l.b16 %v897
    %v1298 = vunpack.c.l.b16 %v898
    %v1299 = vunpack.c.h.b16 %v898
    %v1300 = vunpack.c.l.b16 %v899
    %v1301 = vunpack.c.l.b16 %v900
    %v1302 = vunpack.c.h.b16 %v900
    %v1303 = vunpack.c.l.b16 %v901
    %v1304 = vunpack.c.l.b16 %v902
    %v1305 = vunpack.c.h.b16 %v902
    %v1306 = vunpack.c.l.b16 %v903
    %v1307 = vpack.c.b16 %v1070, %v1067
    %v1308 = vpack.c.b16 %v1071, %v1068
    %v1309 = vpack.c.b16 %v1072, %v1069
    %v1310 = vpack.c.b16 %v1076, %v1073
    %v1311 = vpack.c.b16 %v1077, %v1074
    %v1312 = vpack.c.b16 %v1078, %v1075
    %v1313 = vpack.c.b16 %v1082, %v1079
    %v1314 = vpack.c.b16 %v1083, %v1080
    %v1315 = vpack.c.b16 %v1084, %v1081
    %v1316 = vpack.c.b16 %v1088, %v1085
    %v1317 = vpack.c.b16 %v1089, %v1086
    %v1318 = vpack.c.b16 %v1090, %v1087
    %v1319 = vpack.c.b16 %v1094, %v1091
    %v1320 = vpack.c.b16 %v1095, %v1092
    %v1321 = vpack.c.b16 %v1096, %v1093
    %v1322 = vpack.c.b16 %v1100, %v1097
    %v1323 = vpack.c.b16 %v1101, %v1098
    %v1324 = vpack.c.b16 %v1102, %v1099
    %v1325 = vpack.c.b16 %v1106, %v1103
    %v1326 = vpack.c.b16 %v1107, %v1104
    %v1327 = vpack.c.b16 %v1108, %v1105
    %v1328 = vpack.c.b16 %v1112, %v1109
    %v1329 = vpack.c.b16 %v1113, %v1110
    %v1330 = vpack.c.b16 %v1114, %v1111
    %v1331 = vpack.c.b16 %v1118, %v1115
    %v1332 = vpack.c.b16 %v1119, %v1116
    %v1333 = vpack.c.b16 %v1120, %v1117
    %v1334 = vpack.c.b16 %v1124, %v1121
    %v1335 = vpack.c.b16 %v1125, %v1122
    %v1336 = vpack.c.b16 %v1126, %v1123
    %v1337 = vpack.c.b16 %v1130, %v1127
    %v1338 = vpack.c.b16 %v1131, %v1128
    %v1339 = vpack.c.b16 %v1132, %v1129
    %v1340 = vpack.c.b16 %v1136, %v1133
    %v1341 = vpack.c.b16 %v1137, %v1134
    %v1342 = vpack.c.b16 %v1138, %v1135
    %v1343 = vpack.c.b16 %v1142, %v1139
    %v1344 = vpack.c.b16 %v1143, %v1140
    %v1345 = vpack.c.b16 %v1144, %v1141
    %v1346 = vpack.c.b16 %v1148, %v1145
    %v1347 = vpack.c.b16 %v1149, %v1146
    %v1348 = vpack.c.b16 %v1150, %v1147
    %v1349 = vpack.c.b16 %v1154, %v1151
    %v1350 = vpack.c.b16 %v1155, %v1152
    %v1351 = vpack.c.b16 %v1156, %v1153
    %v1352 = vpack.c.b16 %v1160, %v1157
    %v1353 = vpack.c.b16 %v1161, %v1158
    %v1354 = vpack.c.b16 %v1162, %v1159
    %v1355 = vpack.c.b16 %v1166, %v1163
    %v1356 = vpack.c.b16 %v1167, %v1164
    %v1357 = vpack.c.b16 %v1168, %v1165
    %v1358 = vpack.c.b16 %v1172, %v1169
    %v1359 = vpack.c.b16 %v1173, %v1170
    %v1360 = vpack.c.b16 %v1174, %v1171
    %v1361 = vpack.c.b16 %v1178, %v1175
    %v1362 = vpack.c.b16 %v1179, %v1176
    %v1363 = vpack.c.b16 %v1180, %v1177
    %v1364 = vpack.c.b16 %v1184, %v1181
    %v1365 = vpack.c.b16 %v1185, %v1182
    %v1366 = vpack.c.b16 %v1186, %v1183
    %v1367 = vpack.c.b16 %v1190, %v1187
    %v1368 = vpack.c.b16 %v1191, %v1188
    %v1369 = vpack.c.b16 %v1192, %v1189
    %v1370 = vpack.c.b16 %v1196, %v1193
    %v1371 = vpack.c.b16 %v1197, %v1194
    %v1372 = vpack.c.b16 %v1198, %v1195
    %v1373 = vpack.c.b16 %v1202, %v1199
    %v1374 = vpack.c.b16 %v1203, %v1200
    %v1375 = vpack.c.b16 %v1204, %v1201
    %v1376 = vpack.c.b16 %v1208, %v1205
    %v1377 = vpack.c.b16 %v1209, %v1206
    %v1378 = vpack.c.b16 %v1210, %v1207
    %v1379 = vpack.c.b16 %v1214, %v1211
    %v1380 = vpack.c.b16 %v1215, %v1212
    %v1381 = vpack.c.b16 %v1216, %v1213
    %v1382 = vpack.c.b16 %v1220, %v1217
    %v1383 = vpack.c.b16 %v1221, %v1218
    %v1384 = vpack.c.b16 %v1222, %v1219
    %v1385 = vpack.c.b16 %v1226, %v1223
    %v1386 = vpack.c.b16 %v1227, %v1224
    %v1387 = vpack.c.b16 %v1228, %v1225
    %v1388 = vpack.c.b16 %v1232, %v1229
    %v1389 = vpack.c.b16 %v1233, %v1230
    %v1390 = vpack.c.b16 %v1234, %v1231
    %v1391 = vpack.c.b16 %v1238, %v1235
    %v1392 = vpack.c.b16 %v1239, %v1236
    %v1393 = vpack.c.b16 %v1240, %v1237
    %v1394 = vpack.c.b16 %v1244, %v1241
    %v1395 = vpack.c.b16 %v1245, %v1242
    %v1396 = vpack.c.b16 %v1246, %v1243
    %v1397 = vpack.c.b16 %v1250, %v1247
    %v1398 = vpack.c.b16 %v1251, %v1248
    %v1399 = vpack.c.b16 %v1252, %v1249
    %v1400 = vpack.c.b16 %v1256, %v1253
    %v1401 = vpack.c.b16 %v1257, %v1254
    %v1402 = vpack.c.b16 %v1258, %v1255
    %v1403 = vpack.c.b16 %v1262, %v1259
    %v1404 = vpack.c.b16 %v1263, %v1260
    %v1405 = vpack.c.b16 %v1264, %v1261
    %v1406 = vpack.c.b16 %v1268, %v1265
    %v1407 = vpack.c.b16 %v1269, %v1266
    %v1408 = vpack.c.b16 %v1270, %v1267
    %v1409 = vpack.c.b16 %v1274, %v1271
    %v1410 = vpack.c.b16 %v1275, %v1272
    %v1411 = vpack.c.b16 %v1276, %v1273
    %v1412 = vpack.c.b16 %v1280, %v1277
    %v1413 = vpack.c.b16 %v1281, %v1278
    %v1414 = vpack.c.b16 %v1282, %v1279
    %v1415 = vpack.c.b16 %v1286, %v1283
    %v1416 = vpack.c.b16 %v1287, %v1284
    %v1417 = vpack.c.b16 %v1288, %v1285
    %v1418 = vpack.c.b16 %v1292, %v1289
    %v1419 = vpack.c.b16 %v1293, %v1290
    %v1420 = vpack.c.b16 %v1294, %v1291
    %v1421 = vpack.c.b16 %v1298, %v1295
    %v1422 = vpack.c.b16 %v1299, %v1296
    %v1423 = vpack.c.b16 %v1300, %v1297
    %v1424 = vpack.c.b16 %v1304, %v1301
    %v1425 = vpack.c.b16 %v1305, %v1302
    %v1426 = vpack.c.b16 %v1306, %v1303
    %1547 = vmatpush.bf16.msra.mxu0 %v1328
    %1548 = vmatpush.bf16.msra.mxu0 %v1325
    %1549 = vmatpush.bf16.msra.mxu0 %v1322
    %1550 = vmatpush.bf16.msra.mxu0 %v1319
    %1551 = vmatpush.bf16.msra.mxu0 %v1316
    %1552 = vmatpush.bf16.msra.mxu0 %v1313
    %1553 = vmatpush.bf16.msra.mxu0 %v1310
    %1554 = vmatpush.bf16.msra.mxu0 %v1307
    %1555 = vmatmul.bf16.gmra.mxu0 %v739
    %v1556 = vpop.f32.mrf.mxu0
    %v1557 = vadd.f32 %v904, %v1556
    %v1558 = vpop.f32.mrf.mxu0
    %1559 = vdwg.mxu0
    %1560 = vmatpush.bf16.msra.mxu0 %v1352
    %1561 = vmatpush.bf16.msra.mxu0 %v1349
    %1562 = vmatpush.bf16.msra.mxu0 %v1346
    %1563 = vmatpush.bf16.msra.mxu0 %v1343
    %1564 = vmatpush.bf16.msra.mxu0 %v1340
    %1565 = vmatpush.bf16.msra.mxu0 %v1337
    %1566 = vmatpush.bf16.msra.mxu0 %v1334
    %1567 = vmatpush.bf16.msra.mxu0 %v1331
    %1568 = vmatmul.bf16.gmra.mxu0 %v740
    %v1569 = vpop.f32.mrf.mxu0
    %v1570 = vadd.f32 %v1557, %v1569
    %v1571 = vpop.f32.mrf.mxu0
    %1572 = vdwg.mxu0
    %1573 = vmatpush.bf16.msra.mxu0 %v1376
    %1574 = vmatpush.bf16.msra.mxu0 %v1373
    %1575 = vmatpush.bf16.msra.mxu0 %v1370
    %1576 = vmatpush.bf16.msra.mxu0 %v1367
    %1577 = vmatpush.bf16.msra.mxu0 %v1364
    %1578 = vmatpush.bf16.msra.mxu0 %v1361
    %1579 = vmatpush.bf16.msra.mxu0 %v1358
    %1580 = vmatpush.bf16.msra.mxu0 %v1355
    %1581 = vmatmul.bf16.gmra.mxu0 %v741
    %v1582 = vpop.f32.mrf.mxu0
    %v1583 = vadd.f32 %v1570, %v1582
    %v1584 = vpop.f32.mrf.mxu0
    %1585 = vdwg.mxu0
    %1586 = vmatpush.bf16.msra.mxu0 %v1400
    %1587 = vmatpush.bf16.msra.mxu0 %v1397
    %1588 = vmatpush.bf16.msra.mxu0 %v1394
    %1589 = vmatpush.bf16.msra.mxu0 %v1391
    %1590 = vmatpush.bf16.msra.mxu0 %v1388
    %1591 = vmatpush.bf16.msra.mxu0 %v1385
    %1592 = vmatpush.bf16.msra.mxu0 %v1382
    %1593 = vmatpush.bf16.msra.mxu0 %v1379
    %1594 = vmatmul.bf16.gmra.mxu0 %v742
    %v1595 = vpop.f32.mrf.mxu0
    %v1596 = vadd.f32 %v1583, %v1595
    %v1597 = vpop.f32.mrf.mxu0
    %1598 = vdwg.mxu0
    %1599 = vmatpush.bf16.msra.mxu0 %v1424
    %1600 = vmatpush.bf16.msra.mxu0 %v1421
    %1601 = vmatpush.bf16.msra.mxu0 %v1418
    %1602 = vmatpush.bf16.msra.mxu0 %v1415
    %1603 = vmatpush.bf16.msra.mxu0 %v1412
    %1604 = vmatpush.bf16.msra.mxu0 %v1409
    %1605 = vmatpush.bf16.msra.mxu0 %v1406
    %1606 = vmatpush.bf16.msra.mxu0 %v1403
    %1607 = vmatmul.bf16.gmra.mxu0 %v743
    %v1608 = vpop.f32.mrf.mxu0
    %v1609 = vadd.f32 %v1596, %v1608
    %v1610 = vpop.f32.mrf.mxu0
    %1611 = vdwg.mxu0
    %1612 = vmatpush.bf16.msra.mxu0 %v1329
    %1613 = vmatpush.bf16.msra.mxu0 %v1326
    %1614 = vmatpush.bf16.msra.mxu0 %v1323
    %1615 = vmatpush.bf16.msra.mxu0 %v1320
    %1616 = vmatpush.bf16.msra.mxu0 %v1317
    %1617 = vmatpush.bf16.msra.mxu0 %v1314
    %1618 = vmatpush.bf16.msra.mxu0 %v1311
    %1619 = vmatpush.bf16.msra.mxu0 %v1308
    %1620 = vmatmul.bf16.gmra.mxu0 %v739
    %v1621 = vpop.f32.mrf.mxu0
    %v1622 = vadd.f32 %v905, %v1621
    %v1623 = vpop.f32.mrf.mxu0
    %1624 = vdwg.mxu0
    %1625 = vmatpush.bf16.msra.mxu0 %v1353
    %1626 = vmatpush.bf16.msra.mxu0 %v1350
    %1627 = vmatpush.bf16.msra.mxu0 %v1347
    %1628 = vmatpush.bf16.msra.mxu0 %v1344
    %1629 = vmatpush.bf16.msra.mxu0 %v1341
    %1630 = vmatpush.bf16.msra.mxu0 %v1338
    %1631 = vmatpush.bf16.msra.mxu0 %v1335
    %1632 = vmatpush.bf16.msra.mxu0 %v1332
    %1633 = vmatmul.bf16.gmra.mxu0 %v740
    %v1634 = vpop.f32.mrf.mxu0
    %v1635 = vadd.f32 %v1622, %v1634
    %v1636 = vpop.f32.mrf.mxu0
    %1637 = vdwg.mxu0
    %1638 = vmatpush.bf16.msra.mxu0 %v1377
    %1639 = vmatpush.bf16.msra.mxu0 %v1374
    %1640 = vmatpush.bf16.msra.mxu0 %v1371
    %1641 = vmatpush.bf16.msra.mxu0 %v1368
    %1642 = vmatpush.bf16.msra.mxu0 %v1365
    %1643 = vmatpush.bf16.msra.mxu0 %v1362
    %1644 = vmatpush.bf16.msra.mxu0 %v1359
    %1645 = vmatpush.bf16.msra.mxu0 %v1356
    %1646 = vmatmul.bf16.gmra.mxu0 %v741
    %v1647 = vpop.f32.mrf.mxu0
    %v1648 = vadd.f32 %v1635, %v1647
    %v1649 = vpop.f32.mrf.mxu0
    %1650 = vdwg.mxu0
    %1651 = vmatpush.bf16.msra.mxu0 %v1401
    %1652 = vmatpush.bf16.msra.mxu0 %v1398
    %1653 = vmatpush.bf16.msra.mxu0 %v1395
    %1654 = vmatpush.bf16.msra.mxu0 %v1392
    %1655 = vmatpush.bf16.msra.mxu0 %v1389
    %1656 = vmatpush.bf16.msra.mxu0 %v1386
    %1657 = vmatpush.bf16.msra.mxu0 %v1383
    %1658 = vmatpush.bf16.msra.mxu0 %v1380
    %1659 = vmatmul.bf16.gmra.mxu0 %v742
    %v1660 = vpop.f32.mrf.mxu0
    %v1661 = vadd.f32 %v1648, %v1660
    %v1662 = vpop.f32.mrf.mxu0
    %1663 = vdwg.mxu0
    %1664 = vmatpush.bf16.msra.mxu0 %v1425
    %1665 = vmatpush.bf16.msra.mxu0 %v1422
    %1666 = vmatpush.bf16.msra.mxu0 %v1419
    %1667 = vmatpush.bf16.msra.mxu0 %v1416
    %1668 = vmatpush.bf16.msra.mxu0 %v1413
    %1669 = vmatpush.bf16.msra.mxu0 %v1410
    %1670 = vmatpush.bf16.msra.mxu0 %v1407
    %1671 = vmatpush.bf16.msra.mxu0 %v1404
    %1672 = vmatmul.bf16.gmra.mxu0 %v743
    %v1673 = vpop.f32.mrf.mxu0
    %v1674 = vadd.f32 %v1661, %v1673
    %v1675 = vpop.f32.mrf.mxu0
    %1676 = vdwg.mxu0
    %1677 = vmatpush.bf16.msra.mxu0 %v1330
    %1678 = vmatpush.bf16.msra.mxu0 %v1327
    %1679 = vmatpush.bf16.msra.mxu0 %v1324
    %1680 = vmatpush.bf16.msra.mxu0 %v1321
    %1681 = vmatpush.bf16.msra.mxu0 %v1318
    %1682 = vmatpush.bf16.msra.mxu0 %v1315
    %1683 = vmatpush.bf16.msra.mxu0 %v1312
    %1684 = vmatpush.bf16.msra.mxu0 %v1309
    %1685 = vmatmul.bf16.gmra.mxu0 %v739
    %v1686 = vpop.f32.mrf.mxu0
    %v1687 = vadd.f32 %v906, %v1686
    %v1688 = vpop.f32.mrf.mxu0
    %1689 = vdwg.mxu0
    %1690 = vmatpush.bf16.msra.mxu0 %v1354
    %1691 = vmatpush.bf16.msra.mxu0 %v1351
    %1692 = vmatpush.bf16.msra.mxu0 %v1348
    %1693 = vmatpush.bf16.msra.mxu0 %v1345
    %1694 = vmatpush.bf16.msra.mxu0 %v1342
    %1695 = vmatpush.bf16.msra.mxu0 %v1339
    %1696 = vmatpush.bf16.msra.mxu0 %v1336
    %1697 = vmatpush.bf16.msra.mxu0 %v1333
    %1698 = vmatmul.bf16.gmra.mxu0 %v740
    %v1699 = vpop.f32.mrf.mxu0
    %v1700 = vadd.f32 %v1687, %v1699
    %v1701 = vpop.f32.mrf.mxu0
    %1702 = vdwg.mxu0
    %1703 = vmatpush.bf16.msra.mxu0 %v1378
    %1704 = vmatpush.bf16.msra.mxu0 %v1375
    %1705 = vmatpush.bf16.msra.mxu0 %v1372
    %1706 = vmatpush.bf16.msra.mxu0 %v1369
    %1707 = vmatpush.bf16.msra.mxu0 %v1366
    %1708 = vmatpush.bf16.msra.mxu0 %v1363
    %1709 = vmatpush.bf16.msra.mxu0 %v1360
    %1710 = vmatpush.bf16.msra.mxu0 %v1357
    %1711 = vmatmul.bf16.gmra.mxu0 %v741
    %v1712 = vpop.f32.mrf.mxu0
    %v1713 = vadd.f32 %v1700, %v1712
    %v1714 = vpop.f32.mrf.mxu0
    %1715 = vdwg.mxu0
    %1716 = vmatpush.bf16.msra.mxu0 %v1402
    %1717 = vmatpush.bf16.msra.mxu0 %v1399
    %1718 = vmatpush.bf16.msra.mxu0 %v1396
    %1719 = vmatpush.bf16.msra.mxu0 %v1393
    %1720 = vmatpush.bf16.msra.mxu0 %v1390
    %1721 = vmatpush.bf16.msra.mxu0 %v1387
    %1722 = vmatpush.bf16.msra.mxu0 %v1384
    %1723 = vmatpush.bf16.msra.mxu0 %v1381
    %1724 = vmatmul.bf16.gmra.mxu0 %v742
    %v1725 = vpop.f32.mrf.mxu0
    %v1726 = vadd.f32 %v1713, %v1725
    %v1727 = vpop.f32.mrf.mxu0
    %1728 = vdwg.mxu0
    %1729 = vmatpush.bf16.msra.mxu0 %v1426
    %1730 = vmatpush.bf16.msra.mxu0 %v1423
    %1731 = vmatpush.bf16.msra.mxu0 %v1420
    %1732 = vmatpush.bf16.msra.mxu0 %v1417
    %1733 = vmatpush.bf16.msra.mxu0 %v1414
    %1734 = vmatpush.bf16.msra.mxu0 %v1411
    %1735 = vmatpush.bf16.msra.mxu0 %v1408
    %1736 = vmatpush.bf16.msra.mxu0 %v1405
    %1737 = vmatmul.bf16.gmra.mxu0 %v743
    %v1738 = vpop.f32.mrf.mxu0
    %v1739 = vadd.f32 %v1726, %v1738
    %v1740 = vpop.f32.mrf.mxu0
    %1741 = vdwg.mxu0
    %v1742 = vmax.f32 %v1609, 0.0
    %v1743 = vmax.f32 %v1674, 0.0
    %v1744 = vmax.f32 %v1739, 0.0
    %v1745 = vpack.c.bf16 %v1742, %v1742
    %v1746 = vpack.c.bf16 %v1743, %v1743
    %v1747 = vpack.c.bf16 %v1744, %v1744
    %v1748 = vld [vmem:[%s4] sm:$0xff]
    %v1749 = vld [vmem:[%s4 + $0x8] sm:$0xff]
    %v1750 = vld [vmem:[%s4 + $0x10] sm:$0xff]
    %v1751 = vld [vmem:[%s4 + $0x18] sm:$0xff]
    %v1752 = vld [vmem:[%s4 + $0x20] sm:$0xff]
    %v1753 = vld [vmem:[%s4 + $0x28] sm:$0xff]
    %v1754 = vld [vmem:[%s4 + $0x30] sm:$0xff]
    %v1755 = vld [vmem:[%s4 + $0x38] sm:$0xff]
    %v1756 = vld [vmem:[%s4 + $0x40] sm:$0xff]
    %v1757 = vld [vmem:[%s4 + $0x48] sm:$0xff]
    %v1758 = vld [vmem:[%s4 + $0x50] sm:$0xff]
    %v1759 = vld [vmem:[%s4 + $0x58] sm:$0xff]
    %v1760 = vld [vmem:[%s4 + $0x60] sm:$0xff]
    %v1761 = vld [vmem:[%s4 + $0x68] sm:$0xff]
    %v1762 = vld [vmem:[%s4 + $0x70] sm:$0xff]
    %v1763 = vld [vmem:[%s4 + $0x78] sm:$0xff]
    %v1764 = vld [vmem:[%s4 + $0x80] sm:$0xff]
    %v1765 = vld [vmem:[%s4 + $0x88] sm:$0xff]
    %v1766 = vld [vmem:[%s4 + $0x90] sm:$0xff]
    %v1767 = vld [vmem:[%s4 + $0x98] sm:$0xff]
    %v1768 = vld [vmem:[%s4 + $0xa0] sm:$0xff]
    %v1769 = vld [vmem:[%s4 + $0xa8] sm:$0xff]
    %v1770 = vld [vmem:[%s4 + $0xb0] sm:$0xff]
    %v1771 = vld [vmem:[%s4 + $0xb8] sm:$0xff]
    %v1772 = vld [vmem:[%s4 + $0xc0] sm:$0xff]
    %v1773 = vld [vmem:[%s4 + $0xc8] sm:$0xff]
    %v1774 = vld [vmem:[%s4 + $0xd0] sm:$0xff]
    %v1775 = vld [vmem:[%s4 + $0xd8] sm:$0xff]
    %v1776 = vld [vmem:[%s4 + $0xe0] sm:$0xff]
    %v1777 = vld [vmem:[%s4 + $0xe8] sm:$0xff]
    %v1778 = vld [vmem:[%s4 + $0xf0] sm:$0xff]
    %v1779 = vld [vmem:[%s4 + $0xf8] sm:$0xff]
    %v1780 = vld [vmem:[%s4 + $0x100] sm:$0xff]
    %v1781 = vld [vmem:[%s4 + $0x108] sm:$0xff]
    %v1782 = vld [vmem:[%s4 + $0x110] sm:$0xff]
    %v1783 = vld [vmem:[%s4 + $0x118] sm:$0xff]
    %v1784 = vld [vmem:[%s4 + $0x120] sm:$0xff]
    %v1785 = vld [vmem:[%s4 + $0x128] sm:$0xff]
    %v1786 = vld [vmem:[%s4 + $0x130] sm:$0xff]
    %v1787 = vld [vmem:[%s4 + $0x138] sm:$0xff]
    %v1788 = vperm.slane %v73, 2
    %v1789 = vperm.slane %v74, 2
    %v1830 = vunpack.c.l.b16 %v1748
    %v1831 = vunpack.c.h.b16 %v1748
    %v1832 = vunpack.c.l.b16 %v1749
    %v1833 = vunpack.c.h.b16 %v1749
    %v1834 = vunpack.c.l.b16 %v1750
    %v1835 = vunpack.c.h.b16 %v1750
    %v1836 = vunpack.c.l.b16 %v1751
    %v1837 = vunpack.c.h.b16 %v1751
    %v1838 = vunpack.c.l.b16 %v1752
    %v1839 = vunpack.c.h.b16 %v1752
    %v1840 = vunpack.c.l.b16 %v1753
    %v1841 = vunpack.c.h.b16 %v1753
    %v1842 = vunpack.c.l.b16 %v1754
    %v1843 = vunpack.c.h.b16 %v1754
    %v1844 = vunpack.c.l.b16 %v1755
    %v1845 = vunpack.c.h.b16 %v1755
    %v1846 = vunpack.c.l.b16 %v1756
    %v1847 = vunpack.c.h.b16 %v1756
    %v1848 = vunpack.c.l.b16 %v1757
    %v1849 = vunpack.c.h.b16 %v1757
    %v1850 = vunpack.c.l.b16 %v1758
    %v1851 = vunpack.c.h.b16 %v1758
    %v1852 = vunpack.c.l.b16 %v1759
    %v1853 = vunpack.c.h.b16 %v1759
    %v1854 = vunpack.c.l.b16 %v1760
    %v1855 = vunpack.c.h.b16 %v1760
    %v1856 = vunpack.c.l.b16 %v1761
    %v1857 = vunpack.c.h.b16 %v1761
    %v1858 = vunpack.c.l.b16 %v1762
    %v1859 = vunpack.c.h.b16 %v1762
    %v1860 = vunpack.c.l.b16 %v1763
    %v1861 = vunpack.c.h.b16 %v1763
    %v1862 = vunpack.c.l.b16 %v1764
    %v1863 = vunpack.c.h.b16 %v1764
    %v1864 = vunpack.c.l.b16 %v1765
    %v1865 = vunpack.c.h.b16 %v1765
    %v1866 = vunpack.c.l.b16 %v1766
    %v1867 = vunpack.c.h.b16 %v1766
    %v1868 = vunpack.c.l.b16 %v1767
    %v1869 = vunpack.c.h.b16 %v1767
    %v1870 = vunpack.c.l.b16 %v1768
    %v1871 = vunpack.c.h.b16 %v1768
    %v1872 = vunpack.c.l.b16 %v1769
    %v1873 = vunpack.c.h.b16 %v1769
    %v1874 = vunpack.c.l.b16 %v1770
    %v1875 = vunpack.c.h.b16 %v1770
    %v1876 = vunpack.c.l.b16 %v1771
    %v1877 = vunpack.c.h.b16 %v1771
    %v1878 = vunpack.c.l.b16 %v1772
    %v1879 = vunpack.c.h.b16 %v1772
    %v1880 = vunpack.c.l.b16 %v1773
    %v1881 = vunpack.c.h.b16 %v1773
    %v1882 = vunpack.c.l.b16 %v1774
    %v1883 = vunpack.c.h.b16 %v1774
    %v1884 = vunpack.c.l.b16 %v1775
    %v1885 = vunpack.c.h.b16 %v1775
    %v1886 = vunpack.c.l.b16 %v1776
    %v1887 = vunpack.c.h.b16 %v1776
    %v1888 = vunpack.c.l.b16 %v1777
    %v1889 = vunpack.c.h.b16 %v1777
    %v1890 = vunpack.c.l.b16 %v1778
    %v1891 = vunpack.c.h.b16 %v1778
    %v1892 = vunpack.c.l.b16 %v1779
    %v1893 = vunpack.c.h.b16 %v1779
    %v1894 = vunpack.c.l.b16 %v1780
    %v1895 = vunpack.c.h.b16 %v1780
    %v1896 = vunpack.c.l.b16 %v1781
    %v1897 = vunpack.c.h.b16 %v1781
    %v1898 = vunpack.c.l.b16 %v1782
    %v1899 = vunpack.c.h.b16 %v1782
    %v1900 = vunpack.c.l.b16 %v1783
    %v1901 = vunpack.c.h.b16 %v1783
    %v1902 = vunpack.c.l.b16 %v1784
    %v1903 = vunpack.c.h.b16 %v1784
    %v1904 = vunpack.c.l.b16 %v1785
    %v1905 = vunpack.c.h.b16 %v1785
    %v1906 = vunpack.c.l.b16 %v1786
    %v1907 = vunpack.c.h.b16 %v1786
    %v1908 = vunpack.c.l.b16 %v1787
    %v1909 = vunpack.c.h.b16 %v1787
    %v1910 = vpack.c.b16 %v1832, %v1830
    %v1911 = vpack.c.b16 %v1833, %v1831
    %v1912 = vpack.c.b16 %v1836, %v1834
    %v1913 = vpack.c.b16 %v1837, %v1835
    %v1914 = vpack.c.b16 %v1840, %v1838
    %v1915 = vpack.c.b16 %v1841, %v1839
    %v1916 = vpack.c.b16 %v1844, %v1842
    %v1917 = vpack.c.b16 %v1845, %v1843
    %v1918 = vpack.c.b16 %v1848, %v1846
    %v1919 = vpack.c.b16 %v1849, %v1847
    %v1920 = vpack.c.b16 %v1852, %v1850
    %v1921 = vpack.c.b16 %v1853, %v1851
    %v1922 = vpack.c.b16 %v1856, %v1854
    %v1923 = vpack.c.b16 %v1857, %v1855
    %v1924 = vpack.c.b16 %v1860, %v1858
    %v1925 = vpack.c.b16 %v1861, %v1859
    %v1926 = vpack.c.b16 %v1864, %v1862
    %v1927 = vpack.c.b16 %v1865, %v1863
    %v1928 = vpack.c.b16 %v1868, %v1866
    %v1929 = vpack.c.b16 %v1869, %v1867
    %v1930 = vpack.c.b16 %v1872, %v1870
    %v1931 = vpack.c.b16 %v1873, %v1871
    %v1932 = vpack.c.b16 %v1876, %v1874
    %v1933 = vpack.c.b16 %v1877, %v1875
    %v1934 = vpack.c.b16 %v1880, %v1878
    %v1935 = vpack.c.b16 %v1881, %v1879
    %v1936 = vpack.c.b16 %v1884, %v1882
    %v1937 = vpack.c.b16 %v1885, %v1883
    %v1938 = vpack.c.b16 %v1888, %v1886
    %v1939 = vpack.c.b16 %v1889, %v1887
    %v1940 = vpack.c.b16 %v1892, %v1890
    %v1941 = vpack.c.b16 %v1893, %v1891
    %v1942 = vpack.c.b16 %v1896, %v1894
    %v1943 = vpack.c.b16 %v1897, %v1895
    %v1944 = vpack.c.b16 %v1900, %v1898
    %v1945 = vpack.c.b16 %v1901, %v1899
    %v1946 = vpack.c.b16 %v1904, %v1902
    %v1947 = vpack.c.b16 %v1905, %v1903
    %v1948 = vpack.c.b16 %v1908, %v1906
    %v1949 = vpack.c.b16 %v1909, %v1907
    %vm1990 = vcmask 523264
    %v1992 = vsel %vm1990, %v1747, 0
    %1994 = vmatpush.bf16.msra.mxu0 %v1924
    %1995 = vmatpush.bf16.msra.mxu0 %v1922
    %1996 = vmatpush.bf16.msra.mxu0 %v1920
    %1997 = vmatpush.bf16.msra.mxu0 %v1918
    %1998 = vmatpush.bf16.msra.mxu0 %v1916
    %1999 = vmatpush.bf16.msra.mxu0 %v1914
    %2000 = vmatpush.bf16.msra.mxu0 %v1912
    %2001 = vmatpush.bf16.msra.mxu0 %v1910
    %2002 = vmatmul.bf16.gmra.mxu0 %v1745
    %v2003 = vpop.f32.mrf.mxu0
    %v2004 = vadd.f32 %v1788, %v2003
    %v2005 = vpop.f32.mrf.mxu0
    %2006 = vdwg.mxu0
    %2007 = vmatpush.bf16.msra.mxu0 %v1940
    %2008 = vmatpush.bf16.msra.mxu0 %v1938
    %2009 = vmatpush.bf16.msra.mxu0 %v1936
    %2010 = vmatpush.bf16.msra.mxu0 %v1934
    %2011 = vmatpush.bf16.msra.mxu0 %v1932
    %2012 = vmatpush.bf16.msra.mxu0 %v1930
    %2013 = vmatpush.bf16.msra.mxu0 %v1928
    %2014 = vmatpush.bf16.msra.mxu0 %v1926
    %2015 = vmatmul.bf16.gmra.mxu0 %v1746
    %v2016 = vpop.f32.mrf.mxu0
    %v2017 = vadd.f32 %v2004, %v2016
    %v2018 = vpop.f32.mrf.mxu0
    %2019 = vdwg.mxu0
    %2020 = vmatpush.bf16.msra.mxu0 0
    %2021 = vmatpush.bf16.msra.mxu0 0
    %2022 = vmatpush.bf16.msra.mxu0 0
    %2023 = vmatpush.bf16.msra.mxu0 0
    %2024 = vmatpush.bf16.msra.mxu0 %v1948
    %2025 = vmatpush.bf16.msra.mxu0 %v1946
    %2026 = vmatpush.bf16.msra.mxu0 %v1944
    %2027 = vmatpush.bf16.msra.mxu0 %v1942
    %2028 = vmatmul.bf16.gmra.mxu0 %v1992
    %v2029 = vpop.f32.mrf.mxu0
    %v2030 = vadd.f32 %v2017, %v2029
    %v2031 = vpop.f32.mrf.mxu0
    %2032 = vdwg.mxu0
    %2033 = vmatpush.bf16.msra.mxu0 %v1925
    %2034 = vmatpush.bf16.msra.mxu0 %v1923
    %2035 = vmatpush.bf16.msra.mxu0 %v1921
    %2036 = vmatpush.bf16.msra.mxu0 %v1919
    %2037 = vmatpush.bf16.msra.mxu0 %v1917
    %2038 = vmatpush.bf16.msra.mxu0 %v1915
    %2039 = vmatpush.bf16.msra.mxu0 %v1913
    %2040 = vmatpush.bf16.msra.mxu0 %v1911
    %2041 = vmatmul.bf16.gmra.mxu0 %v1745
    %v2042 = vpop.f32.mrf.mxu0
    %v2043 = vadd.f32 %v1789, %v2042
    %v2044 = vpop.f32.mrf.mxu0
    %2045 = vdwg.mxu0
    %2046 = vmatpush.bf16.msra.mxu0 %v1941
    %2047 = vmatpush.bf16.msra.mxu0 %v1939
    %2048 = vmatpush.bf16.msra.mxu0 %v1937
    %2049 = vmatpush.bf16.msra.mxu0 %v1935
    %2050 = vmatpush.bf16.msra.mxu0 %v1933
    %2051 = vmatpush.bf16.msra.mxu0 %v1931
    %2052 = vmatpush.bf16.msra.mxu0 %v1929
    %2053 = vmatpush.bf16.msra.mxu0 %v1927
    %2054 = vmatmul.bf16.gmra.mxu0 %v1746
    %v2055 = vpop.f32.mrf.mxu0
    %v2056 = vadd.f32 %v2043, %v2055
    %v2057 = vpop.f32.mrf.mxu0
    %2058 = vdwg.mxu0
    %2059 = vmatpush.bf16.msra.mxu0 0
    %2060 = vmatpush.bf16.msra.mxu0 0
    %2061 = vmatpush.bf16.msra.mxu0 0
    %2062 = vmatpush.bf16.msra.mxu0 0
    %2063 = vmatpush.bf16.msra.mxu0 %v1949
    %2064 = vmatpush.bf16.msra.mxu0 %v1947
    %2065 = vmatpush.bf16.msra.mxu0 %v1945
    %2066 = vmatpush.bf16.msra.mxu0 %v1943
    %2067 = vmatmul.bf16.gmra.mxu0 %v1992
    %v2068 = vpop.f32.mrf.mxu0
    %v2069 = vadd.f32 %v2056, %v2068
    %v2070 = vpop.f32.mrf.mxu0
    %2071 = vdwg.mxu0
    %v2072 = vmax.f32 %v2030, 0.0
    %v2073 = vmax.f32 %v2069, 0.0
    %v2074 = vpack.c.bf16 %v2072, %v2072
    %v2075 = vpack.c.bf16 %v2073, %v2073
    %v2076 = vld [vmem:[#allocation2] sm:$0xff]
    %v2077 = vld [vmem:[#allocation2 + $0x8] sm:$0xff]
    %v2078 = vld [vmem:[#allocation2 + $0x10] sm:$0xff]
    %v2079 = vld [vmem:[#allocation2 + $0x18] sm:$0xff]
    %v2080 = vld [vmem:[#allocation2 + $0x20] sm:$0xff]
    %v2081 = vld [vmem:[#allocation2 + $0x28] sm:$0xff]
    %v2082 = vld [vmem:[#allocation2 + $0x30] sm:$0xff]
    %v2083 = vld [vmem:[#allocation2 + $0x38] sm:$0xff]
    %v2084 = vld [vmem:[#allocation2 + $0x40] sm:$0xff]
    %v2085 = vld [vmem:[#allocation2 + $0x48] sm:$0xff]
    %v2086 = vld [vmem:[#allocation2 + $0x50] sm:$0xff]
    %v2087 = vld [vmem:[#allocation2 + $0x58] sm:$0xff]
    %v2088 = vld [vmem:[#allocation2 + $0x60] sm:$0xff]
    %v2089 = vld [vmem:[#allocation2 + $0x68] sm:$0xff]
    %v2090 = vld [vmem:[#allocation2 + $0x70] sm:$0xff]
    %v2091 = vld [vmem:[#allocation2 + $0x78] sm:$0xff]
    %v2092 = vld [vmem:[#allocation2 + $0x80] sm:$0xff]
    %v2093 = vld [vmem:[#allocation2 + $0x88] sm:$0xff]
    %v2094 = vld [vmem:[#allocation2 + $0x90] sm:$0xff]
    %v2095 = vld [vmem:[#allocation2 + $0x98] sm:$0xff]
    %v2096 = vperm.slane %v73, 3
    %v2097 = vperm.slane %v74, 3
    %v2118 = vunpack.c.l.b16 %v2076
    %v2119 = vunpack.c.h.b16 %v2076
    %v2120 = vunpack.c.l.b16 %v2077
    %v2121 = vunpack.c.h.b16 %v2077
    %v2122 = vunpack.c.l.b16 %v2078
    %v2123 = vunpack.c.h.b16 %v2078
    %v2124 = vunpack.c.l.b16 %v2079
    %v2125 = vunpack.c.h.b16 %v2079
    %v2126 = vunpack.c.l.b16 %v2080
    %v2127 = vunpack.c.h.b16 %v2080
    %v2128 = vunpack.c.l.b16 %v2081
    %v2129 = vunpack.c.h.b16 %v2081
    %v2130 = vunpack.c.l.b16 %v2082
    %v2131 = vunpack.c.h.b16 %v2082
    %v2132 = vunpack.c.l.b16 %v2083
    %v2133 = vunpack.c.h.b16 %v2083
    %v2134 = vunpack.c.l.b16 %v2084
    %v2135 = vunpack.c.h.b16 %v2084
    %v2136 = vunpack.c.l.b16 %v2085
    %v2137 = vunpack.c.h.b16 %v2085
    %v2138 = vunpack.c.l.b16 %v2086
    %v2139 = vunpack.c.h.b16 %v2086
    %v2140 = vunpack.c.l.b16 %v2087
    %v2141 = vunpack.c.h.b16 %v2087
    %v2142 = vunpack.c.l.b16 %v2088
    %v2143 = vunpack.c.h.b16 %v2088
    %v2144 = vunpack.c.l.b16 %v2089
    %v2145 = vunpack.c.h.b16 %v2089
    %v2146 = vunpack.c.l.b16 %v2090
    %v2147 = vunpack.c.h.b16 %v2090
    %v2148 = vunpack.c.l.b16 %v2091
    %v2149 = vunpack.c.h.b16 %v2091
    %v2150 = vunpack.c.l.b16 %v2092
    %v2151 = vunpack.c.h.b16 %v2092
    %v2152 = vunpack.c.l.b16 %v2093
    %v2153 = vunpack.c.h.b16 %v2093
    %v2154 = vunpack.c.l.b16 %v2094
    %v2155 = vunpack.c.h.b16 %v2094
    %v2156 = vunpack.c.l.b16 %v2095
    %v2157 = vunpack.c.h.b16 %v2095
    %v2158 = vpack.c.b16 %v2120, %v2118
    %v2159 = vpack.c.b16 %v2121, %v2119
    %v2160 = vpack.c.b16 %v2124, %v2122
    %v2161 = vpack.c.b16 %v2125, %v2123
    %v2162 = vpack.c.b16 %v2128, %v2126
    %v2163 = vpack.c.b16 %v2129, %v2127
    %v2164 = vpack.c.b16 %v2132, %v2130
    %v2165 = vpack.c.b16 %v2133, %v2131
    %v2166 = vpack.c.b16 %v2136, %v2134
    %v2167 = vpack.c.b16 %v2137, %v2135
    %v2168 = vpack.c.b16 %v2140, %v2138
    %v2169 = vpack.c.b16 %v2141, %v2139
    %v2170 = vpack.c.b16 %v2144, %v2142
    %v2171 = vpack.c.b16 %v2145, %v2143
    %v2172 = vpack.c.b16 %v2148, %v2146
    %v2173 = vpack.c.b16 %v2149, %v2147
    %v2174 = vpack.c.b16 %v2152, %v2150
    %v2175 = vpack.c.b16 %v2153, %v2151
    %v2176 = vpack.c.b16 %v2156, %v2154
    %v2177 = vpack.c.b16 %v2157, %v2155
    %vm2198 = vcmask 261120
    %v2200 = vsel %vm2198, %v2075, 0
    %2202 = vmatpush.bf16.msra.mxu0 %v2172
    %2203 = vmatpush.bf16.msra.mxu0 %v2170
    %2204 = vmatpush.bf16.msra.mxu0 %v2168
    %2205 = vmatpush.bf16.msra.mxu0 %v2166
    %2206 = vmatpush.bf16.msra.mxu0 %v2164
    %2207 = vmatpush.bf16.msra.mxu0 %v2162
    %2208 = vmatpush.bf16.msra.mxu0 %v2160
    %2209 = vmatpush.bf16.msra.mxu0 %v2158
    %2210 = vmatmul.bf16.gmra.mxu0 %v2074
    %v2211 = vpop.f32.mrf.mxu0
    %v2212 = vadd.f32 %v2096, %v2211
    %v2213 = vpop.f32.mrf.mxu0
    %2214 = vdwg.mxu0
    %2215 = vmatpush.bf16.msra.mxu0 0
    %2216 = vmatpush.bf16.msra.mxu0 0
    %2217 = vmatpush.bf16.msra.mxu0 0
    %2218 = vmatpush.bf16.msra.mxu0 0
    %2219 = vmatpush.bf16.msra.mxu0 0
    %2220 = vmatpush.bf16.msra.mxu0 0
    %2221 = vmatpush.bf16.msra.mxu0 %v2176
    %2222 = vmatpush.bf16.msra.mxu0 %v2174
    %2223 = vmatmul.bf16.gmra.mxu0 %v2200
    %v2224 = vpop.f32.mrf.mxu0
    %v2225 = vadd.f32 %v2212, %v2224
    %v2226 = vpop.f32.mrf.mxu0
    %2227 = vdwg.mxu0
    %2228 = vmatpush.bf16.msra.mxu0 %v2173
    %2229 = vmatpush.bf16.msra.mxu0 %v2171
    %2230 = vmatpush.bf16.msra.mxu0 %v2169
    %2231 = vmatpush.bf16.msra.mxu0 %v2167
    %2232 = vmatpush.bf16.msra.mxu0 %v2165
    %2233 = vmatpush.bf16.msra.mxu0 %v2163
    %2234 = vmatpush.bf16.msra.mxu0 %v2161
    %2235 = vmatpush.bf16.msra.mxu0 %v2159
    %2236 = vmatmul.bf16.gmra.mxu0 %v2074
    %v2237 = vpop.f32.mrf.mxu0
    %v2238 = vadd.f32 %v2097, %v2237
    %v2239 = vpop.f32.mrf.mxu0
    %2240 = vdwg.mxu0
    %2241 = vmatpush.bf16.msra.mxu0 0
    %2242 = vmatpush.bf16.msra.mxu0 0
    %2243 = vmatpush.bf16.msra.mxu0 0
    %2244 = vmatpush.bf16.msra.mxu0 0
    %2245 = vmatpush.bf16.msra.mxu0 0
    %2246 = vmatpush.bf16.msra.mxu0 0
    %2247 = vmatpush.bf16.msra.mxu0 %v2177
    %2248 = vmatpush.bf16.msra.mxu0 %v2175
    %2249 = vmatmul.bf16.gmra.mxu0 %v2200
    %v2250 = vpop.f32.mrf.mxu0
    %v2251 = vadd.f32 %v2238, %v2250
    %v2252 = vpop.f32.mrf.mxu0
    %2253 = vdwg.mxu0
    %v2256 = vrot.slane %v2251, 6
    %vm2257 = vcmask 1041408
    %v2258 = vsel %vm2257, %v2225, %v2256
    %2260 = vst [vmem:[%s12] sm:$0xf] %v2258
    %v2261 = vmul.f32 %v2251, 0.5
    %v2262 = vmul.f32 %v2261, 1.442695
    %v2263 = vpow.pop %v2262
    %v2264 = vld [vmem:[%s1] sm:$0x3]
    %v2265 = vmul.f32 %v2263, %v2264
    %v2266 = vadd.f32 %v2225, %v2265
    %v2267 = vpack.c.bf16 %v2266, %v2266
    %v2268 = vld [vmem:[%s6] sm:$0xff]
    %v2269 = vld [vmem:[%s6 + $0x8] sm:$0xff]
    %v2270 = vld [vmem:[%s6 + $0x10] sm:$0xff]
    %v2271 = vld [vmem:[%s6 + $0x18] sm:$0xff]
    %v2272 = vld [vmem:[%s6 + $0x20] sm:$0xff]
    %v2273 = vld [vmem:[%s6 + $0x28] sm:$0xff]
    %v2274 = vld [vmem:[%s6 + $0x30] sm:$0xff]
    %v2275 = vld [vmem:[%s6 + $0x38] sm:$0xff]
    %v2276 = vld [vmem:[%s6 + $0x40] sm:$0xff]
    %v2277 = vld [vmem:[%s6 + $0x48] sm:$0xff]
    %v2278 = vld [vmem:[%s6 + $0x50] sm:$0xff]
    %v2279 = vld [vmem:[%s6 + $0x58] sm:$0xff]
    %v2280 = vld [vmem:[%s6 + $0x60] sm:$0xff]
    %v2281 = vld [vmem:[%s6 + $0x68] sm:$0xff]
    %v2282 = vld [vmem:[%s6 + $0x70] sm:$0xff]
    %v2283 = vld [vmem:[%s6 + $0x78] sm:$0xff]
    %v2284 = vperm.slane %v73, 4
    %v2285 = vperm.slane %v74, 4
    %v2302 = vunpack.c.l.b16 %v2268
    %v2303 = vunpack.c.h.b16 %v2268
    %v2304 = vunpack.c.l.b16 %v2269
    %v2305 = vunpack.c.h.b16 %v2269
    %v2306 = vunpack.c.l.b16 %v2270
    %v2307 = vunpack.c.h.b16 %v2270
    %v2308 = vunpack.c.l.b16 %v2271
    %v2309 = vunpack.c.h.b16 %v2271
    %v2310 = vunpack.c.l.b16 %v2272
    %v2311 = vunpack.c.h.b16 %v2272
    %v2312 = vunpack.c.l.b16 %v2273
    %v2313 = vunpack.c.h.b16 %v2273
    %v2314 = vunpack.c.l.b16 %v2274
    %v2315 = vunpack.c.h.b16 %v2274
    %v2316 = vunpack.c.l.b16 %v2275
    %v2317 = vunpack.c.h.b16 %v2275
    %v2318 = vunpack.c.l.b16 %v2276
    %v2319 = vunpack.c.h.b16 %v2276
    %v2320 = vunpack.c.l.b16 %v2277
    %v2321 = vunpack.c.h.b16 %v2277
    %v2322 = vunpack.c.l.b16 %v2278
    %v2323 = vunpack.c.h.b16 %v2278
    %v2324 = vunpack.c.l.b16 %v2279
    %v2325 = vunpack.c.h.b16 %v2279
    %v2326 = vunpack.c.l.b16 %v2280
    %v2327 = vunpack.c.h.b16 %v2280
    %v2328 = vunpack.c.l.b16 %v2281
    %v2329 = vunpack.c.h.b16 %v2281
    %v2330 = vunpack.c.l.b16 %v2282
    %v2331 = vunpack.c.h.b16 %v2282
    %v2332 = vunpack.c.l.b16 %v2283
    %v2333 = vunpack.c.h.b16 %v2283
    %v2334 = vpack.c.b16 %v2304, %v2302
    %v2335 = vpack.c.b16 %v2305, %v2303
    %v2336 = vpack.c.b16 %v2308, %v2306
    %v2337 = vpack.c.b16 %v2309, %v2307
    %v2338 = vpack.c.b16 %v2312, %v2310
    %v2339 = vpack.c.b16 %v2313, %v2311
    %v2340 = vpack.c.b16 %v2316, %v2314
    %v2341 = vpack.c.b16 %v2317, %v2315
    %v2342 = vpack.c.b16 %v2320, %v2318
    %v2343 = vpack.c.b16 %v2321, %v2319
    %v2344 = vpack.c.b16 %v2324, %v2322
    %v2345 = vpack.c.b16 %v2325, %v2323
    %v2346 = vpack.c.b16 %v2328, %v2326
    %v2347 = vpack.c.b16 %v2329, %v2327
    %v2348 = vpack.c.b16 %v2332, %v2330
    %v2349 = vpack.c.b16 %v2333, %v2331
    %2366 = vmatpush.bf16.msra.mxu0 %v2348
    %2367 = vmatpush.bf16.msra.mxu0 %v2346
    %2368 = vmatpush.bf16.msra.mxu0 %v2344
    %2369 = vmatpush.bf16.msra.mxu0 %v2342
    %2370 = vmatpush.bf16.msra.mxu0 %v2340
    %2371 = vmatpush.bf16.msra.mxu0 %v2338
    %2372 = vmatpush.bf16.msra.mxu0 %v2336
    %2373 = vmatpush.bf16.msra.mxu0 %v2334
    %2374 = vmatmul.bf16.gmra.mxu0 %v2267
    %v2375 = vpop.f32.mrf.mxu0
    %v2376 = vadd.f32 %v2284, %v2375
    %v2377 = vpop.f32.mrf.mxu0
    %2378 = vdwg.mxu0
    %2379 = vmatpush.bf16.msra.mxu0 %v2349
    %2380 = vmatpush.bf16.msra.mxu0 %v2347
    %2381 = vmatpush.bf16.msra.mxu0 %v2345
    %2382 = vmatpush.bf16.msra.mxu0 %v2343
    %2383 = vmatpush.bf16.msra.mxu0 %v2341
    %2384 = vmatpush.bf16.msra.mxu0 %v2339
    %2385 = vmatpush.bf16.msra.mxu0 %v2337
    %2386 = vmatpush.bf16.msra.mxu0 %v2335
    %2387 = vmatmul.bf16.gmra.mxu0 %v2267
    %v2388 = vpop.f32.mrf.mxu0
    %v2389 = vadd.f32 %v2285, %v2388
    %v2390 = vpop.f32.mrf.mxu0
    %2391 = vdwg.mxu0
    %v2392 = vpack.c.bf16 %v2376, %v2376
    %v2393 = vpack.c.bf16 %v2389, %v2389
    %v2394 = vld [vmem:[%s7] sm:$0xff]
    %v2395 = vld [vmem:[%s7 + $0x8] sm:$0xf]
    %v2396 = vld [vmem:[%s7 + $0xc] sm:$0xff]
    %v2397 = vld [vmem:[%s7 + $0x14] sm:$0xf]
    %v2398 = vld [vmem:[%s7 + $0x18] sm:$0xff]
    %v2399 = vld [vmem:[%s7 + $0x20] sm:$0xf]
    %v2400 = vld [vmem:[%s7 + $0x24] sm:$0xff]
    %v2401 = vld [vmem:[%s7 + $0x2c] sm:$0xf]
    %v2402 = vld [vmem:[%s7 + $0x30] sm:$0xff]
    %v2403 = vld [vmem:[%s7 + $0x38] sm:$0xf]
    %v2404 = vld [vmem:[%s7 + $0x3c] sm:$0xff]
    %v2405 = vld [vmem:[%s7 + $0x44] sm:$0xf]
    %v2406 = vld [vmem:[%s7 + $0x48] sm:$0xff]
    %v2407 = vld [vmem:[%s7 + $0x50] sm:$0xf]
    %v2408 = vld [vmem:[%s7 + $0x54] sm:$0xff]
    %v2409 = vld [vmem:[%s7 + $0x5c] sm:$0xf]
    %v2410 = vld [vmem:[%s7 + $0x60] sm:$0xff]
    %v2411 = vld [vmem:[%s7 + $0x68] sm:$0xf]
    %v2412 = vld [vmem:[%s7 + $0x6c] sm:$0xff]
    %v2413 = vld [vmem:[%s7 + $0x74] sm:$0xf]
    %v2414 = vld [vmem:[%s7 + $0x78] sm:$0xff]
    %v2415 = vld [vmem:[%s7 + $0x80] sm:$0xf]
    %v2416 = vld [vmem:[%s7 + $0x84] sm:$0xff]
    %v2417 = vld [vmem:[%s7 + $0x8c] sm:$0xf]
    %v2418 = vld [vmem:[%s7 + $0x90] sm:$0xff]
    %v2419 = vld [vmem:[%s7 + $0x98] sm:$0xf]
    %v2420 = vld [vmem:[%s7 + $0x9c] sm:$0xff]
    %v2421 = vld [vmem:[%s7 + $0xa4] sm:$0xf]
    %v2422 = vld [vmem:[%s7 + $0xa8] sm:$0xff]
    %v2423 = vld [vmem:[%s7 + $0xb0] sm:$0xf]
    %v2424 = vld [vmem:[%s7 + $0xb4] sm:$0xff]
    %v2425 = vld [vmem:[%s7 + $0xbc] sm:$0xf]
    %v2426 = vld [vmem:[%s7 + $0xc0] sm:$0xff]
    %v2427 = vld [vmem:[%s7 + $0xc8] sm:$0xf]
    %v2428 = vld [vmem:[%s7 + $0xcc] sm:$0xff]
    %v2429 = vld [vmem:[%s7 + $0xd4] sm:$0xf]
    %v2430 = vld [vmem:[%s7 + $0xd8] sm:$0xff]
    %v2431 = vld [vmem:[%s7 + $0xe0] sm:$0xf]
    %v2432 = vld [vmem:[%s7 + $0xe4] sm:$0xff]
    %v2433 = vld [vmem:[%s7 + $0xec] sm:$0xf]
    %v2434 = vperm.slane %v73, 5
    %v2435 = vperm.slane %v74, 5
    %v2436 = vperm.slane %v75, 5
    %v2477 = vunpack.c.l.b16 %v2394
    %v2478 = vunpack.c.h.b16 %v2394
    %v2479 = vunpack.c.l.b16 %v2395
    %v2480 = vunpack.c.l.b16 %v2396
    %v2481 = vunpack.c.h.b16 %v2396
    %v2482 = vunpack.c.l.b16 %v2397
    %v2483 = vunpack.c.l.b16 %v2398
    %v2484 = vunpack.c.h.b16 %v2398
    %v2485 = vunpack.c.l.b16 %v2399
    %v2486 = vunpack.c.l.b16 %v2400
    %v2487 = vunpack.c.h.b16 %v2400
    %v2488 = vunpack.c.l.b16 %v2401
    %v2489 = vunpack.c.l.b16 %v2402
    %v2490 = vunpack.c.h.b16 %v2402
    %v2491 = vunpack.c.l.b16 %v2403
    %v2492 = vunpack.c.l.b16 %v2404
    %v2493 = vunpack.c.h.b16 %v2404
    %v2494 = vunpack.c.l.b16 %v2405
    %v2495 = vunpack.c.l.b16 %v2406
    %v2496 = vunpack.c.h.b16 %v2406
    %v2497 = vunpack.c.l.b16 %v2407
    %v2498 = vunpack.c.l.b16 %v2408
    %v2499 = vunpack.c.h.b16 %v2408
    %v2500 = vunpack.c.l.b16 %v2409
    %v2501 = vunpack.c.l.b16 %v2410
    %v2502 = vunpack.c.h.b16 %v2410
    %v2503 = vunpack.c.l.b16 %v2411
    %v2504 = vunpack.c.l.b16 %v2412
    %v2505 = vunpack.c.h.b16 %v2412
    %v2506 = vunpack.c.l.b16 %v2413
    %v2507 = vunpack.c.l.b16 %v2414
    %v2508 = vunpack.c.h.b16 %v2414
    %v2509 = vunpack.c.l.b16 %v2415
    %v2510 = vunpack.c.l.b16 %v2416
    %v2511 = vunpack.c.h.b16 %v2416
    %v2512 = vunpack.c.l.b16 %v2417
    %v2513 = vunpack.c.l.b16 %v2418
    %v2514 = vunpack.c.h.b16 %v2418
    %v2515 = vunpack.c.l.b16 %v2419
    %v2516 = vunpack.c.l.b16 %v2420
    %v2517 = vunpack.c.h.b16 %v2420
    %v2518 = vunpack.c.l.b16 %v2421
    %v2519 = vunpack.c.l.b16 %v2422
    %v2520 = vunpack.c.h.b16 %v2422
    %v2521 = vunpack.c.l.b16 %v2423
    %v2522 = vunpack.c.l.b16 %v2424
    %v2523 = vunpack.c.h.b16 %v2424
    %v2524 = vunpack.c.l.b16 %v2425
    %v2525 = vunpack.c.l.b16 %v2426
    %v2526 = vunpack.c.h.b16 %v2426
    %v2527 = vunpack.c.l.b16 %v2427
    %v2528 = vunpack.c.l.b16 %v2428
    %v2529 = vunpack.c.h.b16 %v2428
    %v2530 = vunpack.c.l.b16 %v2429
    %v2531 = vunpack.c.l.b16 %v2430
    %v2532 = vunpack.c.h.b16 %v2430
    %v2533 = vunpack.c.l.b16 %v2431
    %v2534 = vunpack.c.l.b16 %v2432
    %v2535 = vunpack.c.h.b16 %v2432
    %v2536 = vunpack.c.l.b16 %v2433
    %v2537 = vpack.c.b16 %v2480, %v2477
    %v2538 = vpack.c.b16 %v2481, %v2478
    %v2539 = vpack.c.b16 %v2482, %v2479
    %v2540 = vpack.c.b16 %v2486, %v2483
    %v2541 = vpack.c.b16 %v2487, %v2484
    %v2542 = vpack.c.b16 %v2488, %v2485
    %v2543 = vpack.c.b16 %v2492, %v2489
    %v2544 = vpack.c.b16 %v2493, %v2490
    %v2545 = vpack.c.b16 %v2494, %v2491
    %v2546 = vpack.c.b16 %v2498, %v2495
    %v2547 = vpack.c.b16 %v2499, %v2496
    %v2548 = vpack.c.b16 %v2500, %v2497
    %v2549 = vpack.c.b16 %v2504, %v2501
    %v2550 = vpack.c.b16 %v2505, %v2502
    %v2551 = vpack.c.b16 %v2506, %v2503
    %v2552 = vpack.c.b16 %v2510, %v2507
    %v2553 = vpack.c.b16 %v2511, %v2508
    %v2554 = vpack.c.b16 %v2512, %v2509
    %v2555 = vpack.c.b16 %v2516, %v2513
    %v2556 = vpack.c.b16 %v2517, %v2514
    %v2557 = vpack.c.b16 %v2518, %v2515
    %v2558 = vpack.c.b16 %v2522, %v2519
    %v2559 = vpack.c.b16 %v2523, %v2520
    %v2560 = vpack.c.b16 %v2524, %v2521
    %v2561 = vpack.c.b16 %v2528, %v2525
    %v2562 = vpack.c.b16 %v2529, %v2526
    %v2563 = vpack.c.b16 %v2530, %v2527
    %v2564 = vpack.c.b16 %v2534, %v2531
    %v2565 = vpack.c.b16 %v2535, %v2532
    %v2566 = vpack.c.b16 %v2536, %v2533
    %v2598 = vsel %vm2198, %v2393, 0
    %2600 = vmatpush.bf16.msra.mxu0 %v2558
    %2601 = vmatpush.bf16.msra.mxu0 %v2555
    %2602 = vmatpush.bf16.msra.mxu0 %v2552
    %2603 = vmatpush.bf16.msra.mxu0 %v2549
    %2604 = vmatpush.bf16.msra.mxu0 %v2546
    %2605 = vmatpush.bf16.msra.mxu0 %v2543
    %2606 = vmatpush.bf16.msra.mxu0 %v2540
    %2607 = vmatpush.bf16.msra.mxu0 %v2537
    %2608 = vmatmul.bf16.gmra.mxu0 %v2392
    %v2609 = vpop.f32.mrf.mxu0
    %v2610 = vadd.f32 %v2434, %v2609
    %v2611 = vpop.f32.mrf.mxu0
    %2612 = vdwg.mxu0
    %2613 = vmatpush.bf16.msra.mxu0 0
    %2614 = vmatpush.bf16.msra.mxu0 0
    %2615 = vmatpush.bf16.msra.mxu0 0
    %2616 = vmatpush.bf16.msra.mxu0 0
    %2617 = vmatpush.bf16.msra.mxu0 0
    %2618 = vmatpush.bf16.msra.mxu0 0
    %2619 = vmatpush.bf16.msra.mxu0 %v2564
    %2620 = vmatpush.bf16.msra.mxu0 %v2561
    %2621 = vmatmul.bf16.gmra.mxu0 %v2598
    %v2622 = vpop.f32.mrf.mxu0
    %v2623 = vadd.f32 %v2610, %v2622
    %v2624 = vpop.f32.mrf.mxu0
    %2625 = vdwg.mxu0
    %2626 = vmatpush.bf16.msra.mxu0 %v2559
    %2627 = vmatpush.bf16.msra.mxu0 %v2556
    %2628 = vmatpush.bf16.msra.mxu0 %v2553
    %2629 = vmatpush.bf16.msra.mxu0 %v2550
    %2630 = vmatpush.bf16.msra.mxu0 %v2547
    %2631 = vmatpush.bf16.msra.mxu0 %v2544
    %2632 = vmatpush.bf16.msra.mxu0 %v2541
    %2633 = vmatpush.bf16.msra.mxu0 %v2538
    %2634 = vmatmul.bf16.gmra.mxu0 %v2392
    %v2635 = vpop.f32.mrf.mxu0
    %v2636 = vadd.f32 %v2435, %v2635
    %v2637 = vpop.f32.mrf.mxu0
    %2638 = vdwg.mxu0
    %2639 = vmatpush.bf16.msra.mxu0 0
    %2640 = vmatpush.bf16.msra.mxu0 0
    %2641 = vmatpush.bf16.msra.mxu0 0
    %2642 = vmatpush.bf16.msra.mxu0 0
    %2643 = vmatpush.bf16.msra.mxu0 0
    %2644 = vmatpush.bf16.msra.mxu0 0
    %2645 = vmatpush.bf16.msra.mxu0 %v2565
    %2646 = vmatpush.bf16.msra.mxu0 %v2562
    %2647 = vmatmul.bf16.gmra.mxu0 %v2598
    %v2648 = vpop.f32.mrf.mxu0
    %v2649 = vadd.f32 %v2636, %v2648
    %v2650 = vpop.f32.mrf.mxu0
    %2651 = vdwg.mxu0
    %2652 = vmatpush.bf16.msra.mxu0 %v2560
    %2653 = vmatpush.bf16.msra.mxu0 %v2557
    %2654 = vmatpush.bf16.msra.mxu0 %v2554
    %2655 = vmatpush.bf16.msra.mxu0 %v2551
    %2656 = vmatpush.bf16.msra.mxu0 %v2548
    %2657 = vmatpush.bf16.msra.mxu0 %v2545
    %2658 = vmatpush.bf16.msra.mxu0 %v2542
    %2659 = vmatpush.bf16.msra.mxu0 %v2539
    %2660 = vmatmul.bf16.gmra.mxu0 %v2392
    %v2661 = vpop.f32.mrf.mxu0
    %v2662 = vadd.f32 %v2436, %v2661
    %v2663 = vpop.f32.mrf.mxu0
    %2664 = vdwg.mxu0
    %2665 = vmatpush.bf16.msra.mxu0 0
    %2666 = vmatpush.bf16.msra.mxu0 0
    %2667 = vmatpush.bf16.msra.mxu0 0
    %2668 = vmatpush.bf16.msra.mxu0 0
    %2669 = vmatpush.bf16.msra.mxu0 0
    %2670 = vmatpush.bf16.msra.mxu0 0
    %2671 = vmatpush.bf16.msra.mxu0 %v2566
    %2672 = vmatpush.bf16.msra.mxu0 %v2563
    %2673 = vmatmul.bf16.gmra.mxu0 %v2598
    %v2674 = vpop.f32.mrf.mxu0
    %v2675 = vadd.f32 %v2662, %v2674
    %v2676 = vpop.f32.mrf.mxu0
    %2677 = vdwg.mxu0
    %v2678 = vmax.f32 %v2623, 0.0
    %v2679 = vmax.f32 %v2649, 0.0
    %v2680 = vmax.f32 %v2675, 0.0
    %v2681 = vpack.c.bf16 %v2678, %v2678
    %v2682 = vpack.c.bf16 %v2679, %v2679
    %v2683 = vpack.c.bf16 %v2680, %v2680
    %v2684 = vld [vmem:[%s8] sm:$0xff]
    %v2685 = vld [vmem:[%s8 + $0x8] sm:$0xff]
    %v2686 = vld [vmem:[%s8 + $0x10] sm:$0xf]
    %v2687 = vld [vmem:[%s8 + $0x14] sm:$0xff]
    %v2688 = vld [vmem:[%s8 + $0x1c] sm:$0xff]
    %v2689 = vld [vmem:[%s8 + $0x24] sm:$0xf]
    %v2690 = vld [vmem:[%s8 + $0x28] sm:$0xff]
    %v2691 = vld [vmem:[%s8 + $0x30] sm:$0xff]
    %v2692 = vld [vmem:[%s8 + $0x38] sm:$0xf]
    %v2693 = vld [vmem:[%s8 + $0x3c] sm:$0xff]
    %v2694 = vld [vmem:[%s8 + $0x44] sm:$0xff]
    %v2695 = vld [vmem:[%s8 + $0x4c] sm:$0xf]
    %v2696 = vld [vmem:[%s8 + $0x50] sm:$0xff]
    %v2697 = vld [vmem:[%s8 + $0x58] sm:$0xff]
    %v2698 = vld [vmem:[%s8 + $0x60] sm:$0xf]
    %v2699 = vld [vmem:[%s8 + $0x64] sm:$0xff]
    %v2700 = vld [vmem:[%s8 + $0x6c] sm:$0xff]
    %v2701 = vld [vmem:[%s8 + $0x74] sm:$0xf]
    %v2702 = vld [vmem:[%s8 + $0x78] sm:$0xff]
    %v2703 = vld [vmem:[%s8 + $0x80] sm:$0xff]
    %v2704 = vld [vmem:[%s8 + $0x88] sm:$0xf]
    %v2705 = vld [vmem:[%s8 + $0x8c] sm:$0xff]
    %v2706 = vld [vmem:[%s8 + $0x94] sm:$0xff]
    %v2707 = vld [vmem:[%s8 + $0x9c] sm:$0xf]
    %v2708 = vld [vmem:[%s8 + $0xa0] sm:$0xff]
    %v2709 = vld [vmem:[%s8 + $0xa8] sm:$0xff]
    %v2710 = vld [vmem:[%s8 + $0xb0] sm:$0xf]
    %v2711 = vld [vmem:[%s8 + $0xb4] sm:$0xff]
    %v2712 = vld [vmem:[%s8 + $0xbc] sm:$0xff]
    %v2713 = vld [vmem:[%s8 + $0xc4] sm:$0xf]
    %v2714 = vld [vmem:[%s8 + $0xc8] sm:$0xff]
    %v2715 = vld [vmem:[%s8 + $0xd0] sm:$0xff]
    %v2716 = vld [vmem:[%s8 + $0xd8] sm:$0xf]
    %v2717 = vld [vmem:[%s8 + $0xdc] sm:$0xff]
    %v2718 = vld [vmem:[%s8 + $0xe4] sm:$0xff]
    %v2719 = vld [vmem:[%s8 + $0xec] sm:$0xf]
    %v2720 = vld [vmem:[%s8 + $0xf0] sm:$0xff]
    %v2721 = vld [vmem:[%s8 + $0xf8] sm:$0xff]
    %v2722 = vld [vmem:[%s8 + $0x100] sm:$0xf]
    %v2723 = vld [vmem:[%s8 + $0x104] sm:$0xff]
    %v2724 = vld [vmem:[%s8 + $0x10c] sm:$0xff]
    %v2725 = vld [vmem:[%s8 + $0x114] sm:$0xf]
    %v2726 = vld [vmem:[%s8 + $0x118] sm:$0xff]
    %v2727 = vld [vmem:[%s8 + $0x120] sm:$0xff]
    %v2728 = vld [vmem:[%s8 + $0x128] sm:$0xf]
    %v2729 = vld [vmem:[%s8 + $0x12c] sm:$0xff]
    %v2730 = vld [vmem:[%s8 + $0x134] sm:$0xff]
    %v2731 = vld [vmem:[%s8 + $0x13c] sm:$0xf]
    %v2732 = vld [vmem:[%s8 + $0x140] sm:$0xff]
    %v2733 = vld [vmem:[%s8 + $0x148] sm:$0xff]
    %v2734 = vld [vmem:[%s8 + $0x150] sm:$0xf]
    %v2735 = vld [vmem:[%s8 + $0x154] sm:$0xff]
    %v2736 = vld [vmem:[%s8 + $0x15c] sm:$0xff]
    %v2737 = vld [vmem:[%s8 + $0x164] sm:$0xf]
    %v2738 = vld [vmem:[%s8 + $0x168] sm:$0xff]
    %v2739 = vld [vmem:[%s8 + $0x170] sm:$0xff]
    %v2740 = vld [vmem:[%s8 + $0x178] sm:$0xf]
    %v2741 = vld [vmem:[%s8 + $0x17c] sm:$0xff]
    %v2742 = vld [vmem:[%s8 + $0x184] sm:$0xff]
    %v2743 = vld [vmem:[%s8 + $0x18c] sm:$0xf]
    %v2744 = vld [vmem:[%s8 + $0x190] sm:$0xff]
    %v2745 = vld [vmem:[%s8 + $0x198] sm:$0xff]
    %v2746 = vld [vmem:[%s8 + $0x1a0] sm:$0xf]
    %v2747 = vld [vmem:[%s8 + $0x1a4] sm:$0xff]
    %v2748 = vld [vmem:[%s8 + $0x1ac] sm:$0xff]
    %v2749 = vld [vmem:[%s8 + $0x1b4] sm:$0xf]
    %v2750 = vld [vmem:[%s8 + $0x1b8] sm:$0xff]
    %v2751 = vld [vmem:[%s8 + $0x1c0] sm:$0xff]
    %v2752 = vld [vmem:[%s8 + $0x1c8] sm:$0xf]
    %v2753 = vld [vmem:[%s8 + $0x1cc] sm:$0xff]
    %v2754 = vld [vmem:[%s8 + $0x1d4] sm:$0xff]
    %v2755 = vld [vmem:[%s8 + $0x1dc] sm:$0xf]
    %v2756 = vld [vmem:[%s8 + $0x1e0] sm:$0xff]
    %v2757 = vld [vmem:[%s8 + $0x1e8] sm:$0xff]
    %v2758 = vld [vmem:[%s8 + $0x1f0] sm:$0xf]
    %v2759 = vld [vmem:[%s8 + $0x1f4] sm:$0xff]
    %v2760 = vld [vmem:[%s8 + $0x1fc] sm:$0xff]
    %v2761 = vld [vmem:[%s8 + $0x204] sm:$0xf]
    %v2762 = vld [vmem:[%s8 + $0x208] sm:$0xff]
    %v2763 = vld [vmem:[%s8 + $0x210] sm:$0xff]
    %v2764 = vld [vmem:[%s8 + $0x218] sm:$0xf]
    %v2765 = vld [vmem:[%s8 + $0x21c] sm:$0xff]
    %v2766 = vld [vmem:[%s8 + $0x224] sm:$0xff]
    %v2767 = vld [vmem:[%s8 + $0x22c] sm:$0xf]
    %v2768 = vld [vmem:[%s8 + $0x230] sm:$0xff]
    %v2769 = vld [vmem:[%s8 + $0x238] sm:$0xff]
    %v2770 = vld [vmem:[%s8 + $0x240] sm:$0xf]
    %v2771 = vld [vmem:[%s8 + $0x244] sm:$0xff]
    %v2772 = vld [vmem:[%s8 + $0x24c] sm:$0xff]
    %v2773 = vld [vmem:[%s8 + $0x254] sm:$0xf]
    %v2774 = vld [vmem:[%s8 + $0x258] sm:$0xff]
    %v2775 = vld [vmem:[%s8 + $0x260] sm:$0xff]
    %v2776 = vld [vmem:[%s8 + $0x268] sm:$0xf]
    %v2777 = vld [vmem:[%s8 + $0x26c] sm:$0xff]
    %v2778 = vld [vmem:[%s8 + $0x274] sm:$0xff]
    %v2779 = vld [vmem:[%s8 + $0x27c] sm:$0xf]
    %v2780 = vld [vmem:[%s8 + $0x280] sm:$0xff]
    %v2781 = vld [vmem:[%s8 + $0x288] sm:$0xff]
    %v2782 = vld [vmem:[%s8 + $0x290] sm:$0xf]
    %v2783 = vld [vmem:[%s8 + $0x294] sm:$0xff]
    %v2784 = vld [vmem:[%s8 + $0x29c] sm:$0xff]
    %v2785 = vld [vmem:[%s8 + $0x2a4] sm:$0xf]
    %v2786 = vld [vmem:[%s8 + $0x2a8] sm:$0xff]
    %v2787 = vld [vmem:[%s8 + $0x2b0] sm:$0xff]
    %v2788 = vld [vmem:[%s8 + $0x2b8] sm:$0xf]
    %v2789 = vld [vmem:[%s8 + $0x2bc] sm:$0xff]
    %v2790 = vld [vmem:[%s8 + $0x2c4] sm:$0xff]
    %v2791 = vld [vmem:[%s8 + $0x2cc] sm:$0xf]
    %v2792 = vld [vmem:[%s8 + $0x2d0] sm:$0xff]
    %v2793 = vld [vmem:[%s8 + $0x2d8] sm:$0xff]
    %v2794 = vld [vmem:[%s8 + $0x2e0] sm:$0xf]
    %v2795 = vld [vmem:[%s8 + $0x2e4] sm:$0xff]
    %v2796 = vld [vmem:[%s8 + $0x2ec] sm:$0xff]
    %v2797 = vld [vmem:[%s8 + $0x2f4] sm:$0xf]
    %v2798 = vld [vmem:[%s8 + $0x2f8] sm:$0xff]
    %v2799 = vld [vmem:[%s8 + $0x300] sm:$0xff]
    %v2800 = vld [vmem:[%s8 + $0x308] sm:$0xf]
    %v2801 = vld [vmem:[%s8 + $0x30c] sm:$0xff]
    %v2802 = vld [vmem:[%s8 + $0x314] sm:$0xff]
    %v2803 = vld [vmem:[%s8 + $0x31c] sm:$0xf]
    %v2804 = vperm.slane %v73, 6
    %v2805 = vperm.slane %v74, 6
    %v2806 = vperm.slane %v75, 6
    %v2807 = vperm.slane %v76, 6
    %v2808 = vperm.slane %v77, 6
    %v2929 = vunpack.c.l.b16 %v2684
    %v2930 = vunpack.c.h.b16 %v2684
    %v2931 = vunpack.c.l.b16 %v2685
    %v2932 = vunpack.c.h.b16 %v2685
    %v2933 = vunpack.c.l.b16 %v2686
    %v2934 = vunpack.c.l.b16 %v2687
    %v2935 = vunpack.c.h.b16 %v2687
    %v2936 = vunpack.c.l.b16 %v2688
    %v2937 = vunpack.c.h.b16 %v2688
    %v2938 = vunpack.c.l.b16 %v2689
    %v2939 = vunpack.c.l.b16 %v2690
    %v2940 = vunpack.c.h.b16 %v2690
    %v2941 = vunpack.c.l.b16 %v2691
    %v2942 = vunpack.c.h.b16 %v2691
    %v2943 = vunpack.c.l.b16 %v2692
    %v2944 = vunpack.c.l.b16 %v2693
    %v2945 = vunpack.c.h.b16 %v2693
    %v2946 = vunpack.c.l.b16 %v2694
    %v2947 = vunpack.c.h.b16 %v2694
    %v2948 = vunpack.c.l.b16 %v2695
    %v2949 = vunpack.c.l.b16 %v2696
    %v2950 = vunpack.c.h.b16 %v2696
    %v2951 = vunpack.c.l.b16 %v2697
    %v2952 = vunpack.c.h.b16 %v2697
    %v2953 = vunpack.c.l.b16 %v2698
    %v2954 = vunpack.c.l.b16 %v2699
    %v2955 = vunpack.c.h.b16 %v2699
    %v2956 = vunpack.c.l.b16 %v2700
    %v2957 = vunpack.c.h.b16 %v2700
    %v2958 = vunpack.c.l.b16 %v2701
    %v2959 = vunpack.c.l.b16 %v2702
    %v2960 = vunpack.c.h.b16 %v2702
    %v2961 = vunpack.c.l.b16 %v2703
    %v2962 = vunpack.c.h.b16 %v2703
    %v2963 = vunpack.c.l.b16 %v2704
    %v2964 = vunpack.c.l.b16 %v2705
    %v2965 = vunpack.c.h.b16 %v2705
    %v2966 = vunpack.c.l.b16 %v2706
    %v2967 = vunpack.c.h.b16 %v2706
    %v2968 = vunpack.c.l.b16 %v2707
    %v2969 = vunpack.c.l.b16 %v2708
    %v2970 = vunpack.c.h.b16 %v2708
    %v2971 = vunpack.c.l.b16 %v2709
    %v2972 = vunpack.c.h.b16 %v2709
    %v2973 = vunpack.c.l.b16 %v2710
    %v2974 = vunpack.c.l.b16 %v2711
    %v2975 = vunpack.c.h.b16 %v2711
    %v2976 = vunpack.c.l.b16 %v2712
    %v2977 = vunpack.c.h.b16 %v2712
    %v2978 = vunpack.c.l.b16 %v2713
    %v2979 = vunpack.c.l.b16 %v2714
    %v2980 = vunpack.c.h.b16 %v2714
    %v2981 = vunpack.c.l.b16 %v2715
    %v2982 = vunpack.c.h.b16 %v2715
    %v2983 = vunpack.c.l.b16 %v2716
    %v2984 = vunpack.c.l.b16 %v2717
    %v2985 = vunpack.c.h.b16 %v2717
    %v2986 = vunpack.c.l.b16 %v2718
    %v2987 = vunpack.c.h.b16 %v2718
    %v2988 = vunpack.c.l.b16 %v2719
    %v2989 = vunpack.c.l.b16 %v2720
    %v2990 = vunpack.c.h.b16 %v2720
    %v2991 = vunpack.c.l.b16 %v2721
    %v2992 = vunpack.c.h.b16 %v2721
    %v2993 = vunpack.c.l.b16 %v2722
    %v2994 = vunpack.c.l.b16 %v2723
    %v2995 = vunpack.c.h.b16 %v2723
    %v2996 = vunpack.c.l.b16 %v2724
    %v2997 = vunpack.c.h.b16 %v2724
    %v2998 = vunpack.c.l.b16 %v2725
    %v2999 = vunpack.c.l.b16 %v2726
    %v3000 = vunpack.c.h.b16 %v2726
    %v3001 = vunpack.c.l.b16 %v2727
    %v3002 = vunpack.c.h.b16 %v2727
    %v3003 = vunpack.c.l.b16 %v2728
    %v3004 = vunpack.c.l.b16 %v2729
    %v3005 = vunpack.c.h.b16 %v2729
    %v3006 = vunpack.c.l.b16 %v2730
    %v3007 = vunpack.c.h.b16 %v2730
    %v3008 = vunpack.c.l.b16 %v2731
    %v3009 = vunpack.c.l.b16 %v2732
    %v3010 = vunpack.c.h.b16 %v2732
    %v3011 = vunpack.c.l.b16 %v2733
    %v3012 = vunpack.c.h.b16 %v2733
    %v3013 = vunpack.c.l.b16 %v2734
    %v3014 = vunpack.c.l.b16 %v2735
    %v3015 = vunpack.c.h.b16 %v2735
    %v3016 = vunpack.c.l.b16 %v2736
    %v3017 = vunpack.c.h.b16 %v2736
    %v3018 = vunpack.c.l.b16 %v2737
    %v3019 = vunpack.c.l.b16 %v2738
    %v3020 = vunpack.c.h.b16 %v2738
    %v3021 = vunpack.c.l.b16 %v2739
    %v3022 = vunpack.c.h.b16 %v2739
    %v3023 = vunpack.c.l.b16 %v2740
    %v3024 = vunpack.c.l.b16 %v2741
    %v3025 = vunpack.c.h.b16 %v2741
    %v3026 = vunpack.c.l.b16 %v2742
    %v3027 = vunpack.c.h.b16 %v2742
    %v3028 = vunpack.c.l.b16 %v2743
    %v3029 = vunpack.c.l.b16 %v2744
    %v3030 = vunpack.c.h.b16 %v2744
    %v3031 = vunpack.c.l.b16 %v2745
    %v3032 = vunpack.c.h.b16 %v2745
    %v3033 = vunpack.c.l.b16 %v2746
    %v3034 = vunpack.c.l.b16 %v2747
    %v3035 = vunpack.c.h.b16 %v2747
    %v3036 = vunpack.c.l.b16 %v2748
    %v3037 = vunpack.c.h.b16 %v2748
    %v3038 = vunpack.c.l.b16 %v2749
    %v3039 = vunpack.c.l.b16 %v2750
    %v3040 = vunpack.c.h.b16 %v2750
    %v3041 = vunpack.c.l.b16 %v2751
    %v3042 = vunpack.c.h.b16 %v2751
    %v3043 = vunpack.c.l.b16 %v2752
    %v3044 = vunpack.c.l.b16 %v2753
    %v3045 = vunpack.c.h.b16 %v2753
    %v3046 = vunpack.c.l.b16 %v2754
    %v3047 = vunpack.c.h.b16 %v2754
    %v3048 = vunpack.c.l.b16 %v2755
    %v3049 = vunpack.c.l.b16 %v2756
    %v3050 = vunpack.c.h.b16 %v2756
    %v3051 = vunpack.c.l.b16 %v2757
    %v3052 = vunpack.c.h.b16 %v2757
    %v3053 = vunpack.c.l.b16 %v2758
    %v3054 = vunpack.c.l.b16 %v2759
    %v3055 = vunpack.c.h.b16 %v2759
    %v3056 = vunpack.c.l.b16 %v2760
    %v3057 = vunpack.c.h.b16 %v2760
    %v3058 = vunpack.c.l.b16 %v2761
    %v3059 = vunpack.c.l.b16 %v2762
    %v3060 = vunpack.c.h.b16 %v2762
    %v3061 = vunpack.c.l.b16 %v2763
    %v3062 = vunpack.c.h.b16 %v2763
    %v3063 = vunpack.c.l.b16 %v2764
    %v3064 = vunpack.c.l.b16 %v2765
    %v3065 = vunpack.c.h.b16 %v2765
    %v3066 = vunpack.c.l.b16 %v2766
    %v3067 = vunpack.c.h.b16 %v2766
    %v3068 = vunpack.c.l.b16 %v2767
    %v3069 = vunpack.c.l.b16 %v2768
    %v3070 = vunpack.c.h.b16 %v2768
    %v3071 = vunpack.c.l.b16 %v2769
    %v3072 = vunpack.c.h.b16 %v2769
    %v3073 = vunpack.c.l.b16 %v2770
    %v3074 = vunpack.c.l.b16 %v2771
    %v3075 = vunpack.c.h.b16 %v2771
    %v3076 = vunpack.c.l.b16 %v2772
    %v3077 = vunpack.c.h.b16 %v2772
    %v3078 = vunpack.c.l.b16 %v2773
    %v3079 = vunpack.c.l.b16 %v2774
    %v3080 = vunpack.c.h.b16 %v2774
    %v3081 = vunpack.c.l.b16 %v2775
    %v3082 = vunpack.c.h.b16 %v2775
    %v3083 = vunpack.c.l.b16 %v2776
    %v3084 = vunpack.c.l.b16 %v2777
    %v3085 = vunpack.c.h.b16 %v2777
    %v3086 = vunpack.c.l.b16 %v2778
    %v3087 = vunpack.c.h.b16 %v2778
    %v3088 = vunpack.c.l.b16 %v2779
    %v3089 = vunpack.c.l.b16 %v2780
    %v3090 = vunpack.c.h.b16 %v2780
    %v3091 = vunpack.c.l.b16 %v2781
    %v3092 = vunpack.c.h.b16 %v2781
    %v3093 = vunpack.c.l.b16 %v2782
    %v3094 = vunpack.c.l.b16 %v2783
    %v3095 = vunpack.c.h.b16 %v2783
    %v3096 = vunpack.c.l.b16 %v2784
    %v3097 = vunpack.c.h.b16 %v2784
    %v3098 = vunpack.c.l.b16 %v2785
    %v3099 = vunpack.c.l.b16 %v2786
    %v3100 = vunpack.c.h.b16 %v2786
    %v3101 = vunpack.c.l.b16 %v2787
    %v3102 = vunpack.c.h.b16 %v2787
    %v3103 = vunpack.c.l.b16 %v2788
    %v3104 = vunpack.c.l.b16 %v2789
    %v3105 = vunpack.c.h.b16 %v2789
    %v3106 = vunpack.c.l.b16 %v2790
    %v3107 = vunpack.c.h.b16 %v2790
    %v3108 = vunpack.c.l.b16 %v2791
    %v3109 = vunpack.c.l.b16 %v2792
    %v3110 = vunpack.c.h.b16 %v2792
    %v3111 = vunpack.c.l.b16 %v2793
    %v3112 = vunpack.c.h.b16 %v2793
    %v3113 = vunpack.c.l.b16 %v2794
    %v3114 = vunpack.c.l.b16 %v2795
    %v3115 = vunpack.c.h.b16 %v2795
    %v3116 = vunpack.c.l.b16 %v2796
    %v3117 = vunpack.c.h.b16 %v2796
    %v3118 = vunpack.c.l.b16 %v2797
    %v3119 = vunpack.c.l.b16 %v2798
    %v3120 = vunpack.c.h.b16 %v2798
    %v3121 = vunpack.c.l.b16 %v2799
    %v3122 = vunpack.c.h.b16 %v2799
    %v3123 = vunpack.c.l.b16 %v2800
    %v3124 = vunpack.c.l.b16 %v2801
    %v3125 = vunpack.c.h.b16 %v2801
    %v3126 = vunpack.c.l.b16 %v2802
    %v3127 = vunpack.c.h.b16 %v2802
    %v3128 = vunpack.c.l.b16 %v2803
    %v3129 = vpack.c.b16 %v2934, %v2929
    %v3130 = vpack.c.b16 %v2935, %v2930
    %v3131 = vpack.c.b16 %v2936, %v2931
    %v3132 = vpack.c.b16 %v2937, %v2932
    %v3133 = vpack.c.b16 %v2938, %v2933
    %v3134 = vpack.c.b16 %v2944, %v2939
    %v3135 = vpack.c.b16 %v2945, %v2940
    %v3136 = vpack.c.b16 %v2946, %v2941
    %v3137 = vpack.c.b16 %v2947, %v2942
    %v3138 = vpack.c.b16 %v2948, %v2943
    %v3139 = vpack.c.b16 %v2954, %v2949
    %v3140 = vpack.c.b16 %v2955, %v2950
    %v3141 = vpack.c.b16 %v2956, %v2951
    %v3142 = vpack.c.b16 %v2957, %v2952
    %v3143 = vpack.c.b16 %v2958, %v2953
    %v3144 = vpack.c.b16 %v2964, %v2959
    %v3145 = vpack.c.b16 %v2965, %v2960
    %v3146 = vpack.c.b16 %v2966, %v2961
    %v3147 = vpack.c.b16 %v2967, %v2962
    %v3148 = vpack.c.b16 %v2968, %v2963
    %v3149 = vpack.c.b16 %v2974, %v2969
    %v3150 = vpack.c.b16 %v2975, %v2970
    %v3151 = vpack.c.b16 %v2976, %v2971
    %v3152 = vpack.c.b16 %v2977, %v2972
    %v3153 = vpack.c.b16 %v2978, %v2973
    %v3154 = vpack.c.b16 %v2984, %v2979
    %v3155 = vpack.c.b16 %v2985, %v2980
    %v3156 = vpack.c.b16 %v2986, %v2981
    %v3157 = vpack.c.b16 %v2987, %v2982
    %v3158 = vpack.c.b16 %v2988, %v2983
    %v3159 = vpack.c.b16 %v2994, %v2989
    %v3160 = vpack.c.b16 %v2995, %v2990
    %v3161 = vpack.c.b16 %v2996, %v2991
    %v3162 = vpack.c.b16 %v2997, %v2992
    %v3163 = vpack.c.b16 %v2998, %v2993
    %v3164 = vpack.c.b16 %v3004, %v2999
    %v3165 = vpack.c.b16 %v3005, %v3000
    %v3166 = vpack.c.b16 %v3006, %v3001
    %v3167 = vpack.c.b16 %v3007, %v3002
    %v3168 = vpack.c.b16 %v3008, %v3003
    %v3169 = vpack.c.b16 %v3014, %v3009
    %v3170 = vpack.c.b16 %v3015, %v3010
    %v3171 = vpack.c.b16 %v3016, %v3011
    %v3172 = vpack.c.b16 %v3017, %v3012
    %v3173 = vpack.c.b16 %v3018, %v3013
    %v3174 = vpack.c.b16 %v3024, %v3019
    %v3175 = vpack.c.b16 %v3025, %v3020
    %v3176 = vpack.c.b16 %v3026, %v3021
    %v3177 = vpack.c.b16 %v3027, %v3022
    %v3178 = vpack.c.b16 %v3028, %v3023
    %v3179 = vpack.c.b16 %v3034, %v3029
    %v3180 = vpack.c.b16 %v3035, %v3030
    %v3181 = vpack.c.b16 %v3036, %v3031
    %v3182 = vpack.c.b16 %v3037, %v3032
    %v3183 = vpack.c.b16 %v3038, %v3033
    %v3184 = vpack.c.b16 %v3044, %v3039
    %v3185 = vpack.c.b16 %v3045, %v3040
    %v3186 = vpack.c.b16 %v3046, %v3041
    %v3187 = vpack.c.b16 %v3047, %v3042
    %v3188 = vpack.c.b16 %v3048, %v3043
    %v3189 = vpack.c.b16 %v3054, %v3049
    %v3190 = vpack.c.b16 %v3055, %v3050
    %v3191 = vpack.c.b16 %v3056, %v3051
    %v3192 = vpack.c.b16 %v3057, %v3052
    %v3193 = vpack.c.b16 %v3058, %v3053
    %v3194 = vpack.c.b16 %v3064, %v3059
    %v3195 = vpack.c.b16 %v3065, %v3060
    %v3196 = vpack.c.b16 %v3066, %v3061
    %v3197 = vpack.c.b16 %v3067, %v3062
    %v3198 = vpack.c.b16 %v3068, %v3063
    %v3199 = vpack.c.b16 %v3074, %v3069
    %v3200 = vpack.c.b16 %v3075, %v3070
    %v3201 = vpack.c.b16 %v3076, %v3071
    %v3202 = vpack.c.b16 %v3077, %v3072
    %v3203 = vpack.c.b16 %v3078, %v3073
    %v3204 = vpack.c.b16 %v3084, %v3079
    %v3205 = vpack.c.b16 %v3085, %v3080
    %v3206 = vpack.c.b16 %v3086, %v3081
    %v3207 = vpack.c.b16 %v3087, %v3082
    %v3208 = vpack.c.b16 %v3088, %v3083
    %v3209 = vpack.c.b16 %v3094, %v3089
    %v3210 = vpack.c.b16 %v3095, %v3090
    %v3211 = vpack.c.b16 %v3096, %v3091
    %v3212 = vpack.c.b16 %v3097, %v3092
    %v3213 = vpack.c.b16 %v3098, %v3093
    %v3214 = vpack.c.b16 %v3104, %v3099
    %v3215 = vpack.c.b16 %v3105, %v3100
    %v3216 = vpack.c.b16 %v3106, %v3101
    %v3217 = vpack.c.b16 %v3107, %v3102
    %v3218 = vpack.c.b16 %v3108, %v3103
    %v3219 = vpack.c.b16 %v3114, %v3109
    %v3220 = vpack.c.b16 %v3115, %v3110
    %v3221 = vpack.c.b16 %v3116, %v3111
    %v3222 = vpack.c.b16 %v3117, %v3112
    %v3223 = vpack.c.b16 %v3118, %v3113
    %v3224 = vpack.c.b16 %v3124, %v3119
    %v3225 = vpack.c.b16 %v3125, %v3120
    %v3226 = vpack.c.b16 %v3126, %v3121
    %v3227 = vpack.c.b16 %v3127, %v3122
    %v3228 = vpack.c.b16 %v3128, %v3123
    %v3330 = vsel %vm1990, %v2683, 0
    %3332 = vmatpush.bf16.msra.mxu0 %v3164
    %3333 = vmatpush.bf16.msra.mxu0 %v3159
    %3334 = vmatpush.bf16.msra.mxu0 %v3154
    %3335 = vmatpush.bf16.msra.mxu0 %v3149
    %3336 = vmatpush.bf16.msra.mxu0 %v3144
    %3337 = vmatpush.bf16.msra.mxu0 %v3139
    %3338 = vmatpush.bf16.msra.mxu0 %v3134
    %3339 = vmatpush.bf16.msra.mxu0 %v3129
    %3340 = vmatmul.bf16.gmra.mxu0 %v2681
    %v3341 = vpop.f32.mrf.mxu0
    %v3342 = vadd.f32 %v2804, %v3341
    %v3343 = vpop.f32.mrf.mxu0
    %3344 = vdwg.mxu0
    %3345 = vmatpush.bf16.msra.mxu0 %v3204
    %3346 = vmatpush.bf16.msra.mxu0 %v3199
    %3347 = vmatpush.bf16.msra.mxu0 %v3194
    %3348 = vmatpush.bf16.msra.mxu0 %v3189
    %3349 = vmatpush.bf16.msra.mxu0 %v3184
    %3350 = vmatpush.bf16.msra.mxu0 %v3179
    %3351 = vmatpush.bf16.msra.mxu0 %v3174
    %3352 = vmatpush.bf16.msra.mxu0 %v3169
    %3353 = vmatmul.bf16.gmra.mxu0 %v2682
    %v3354 = vpop.f32.mrf.mxu0
    %v3355 = vadd.f32 %v3342, %v3354
    %v3356 = vpop.f32.mrf.mxu0
    %3357 = vdwg.mxu0
    %3358 = vmatpush.bf16.msra.mxu0 0
    %3359 = vmatpush.bf16.msra.mxu0 0
    %3360 = vmatpush.bf16.msra.mxu0 0
    %3361 = vmatpush.bf16.msra.mxu0 0
    %3362 = vmatpush.bf16.msra.mxu0 %v3224
    %3363 = vmatpush.bf16.msra.mxu0 %v3219
    %3364 = vmatpush.bf16.msra.mxu0 %v3214
    %3365 = vmatpush.bf16.msra.mxu0 %v3209
    %3366 = vmatmul.bf16.gmra.mxu0 %v3330
    %v3367 = vpop.f32.mrf.mxu0
    %v3368 = vadd.f32 %v3355, %v3367
    %v3369 = vpop.f32.mrf.mxu0
    %3370 = vdwg.mxu0
    %3371 = vmatpush.bf16.msra.mxu0 %v3165
    %3372 = vmatpush.bf16.msra.mxu0 %v3160
    %3373 = vmatpush.bf16.msra.mxu0 %v3155
    %3374 = vmatpush.bf16.msra.mxu0 %v3150
    %3375 = vmatpush.bf16.msra.mxu0 %v3145
    %3376 = vmatpush.bf16.msra.mxu0 %v3140
    %3377 = vmatpush.bf16.msra.mxu0 %v3135
    %3378 = vmatpush.bf16.msra.mxu0 %v3130
    %3379 = vmatmul.bf16.gmra.mxu0 %v2681
    %v3380 = vpop.f32.mrf.mxu0
    %v3381 = vadd.f32 %v2805, %v3380
    %v3382 = vpop.f32.mrf.mxu0
    %3383 = vdwg.mxu0
    %3384 = vmatpush.bf16.msra.mxu0 %v3205
    %3385 = vmatpush.bf16.msra.mxu0 %v3200
    %3386 = vmatpush.bf16.msra.mxu0 %v3195
    %3387 = vmatpush.bf16.msra.mxu0 %v3190
    %3388 = vmatpush.bf16.msra.mxu0 %v3185
    %3389 = vmatpush.bf16.msra.mxu0 %v3180
    %3390 = vmatpush.bf16.msra.mxu0 %v3175
    %3391 = vmatpush.bf16.msra.mxu0 %v3170
    %3392 = vmatmul.bf16.gmra.mxu0 %v2682
    %v3393 = vpop.f32.mrf.mxu0
    %v3394 = vadd.f32 %v3381, %v3393
    %v3395 = vpop.f32.mrf.mxu0
    %3396 = vdwg.mxu0
    %3397 = vmatpush.bf16.msra.mxu0 0
    %3398 = vmatpush.bf16.msra.mxu0 0
    %3399 = vmatpush.bf16.msra.mxu0 0
    %3400 = vmatpush.bf16.msra.mxu0 0
    %3401 = vmatpush.bf16.msra.mxu0 %v3225
    %3402 = vmatpush.bf16.msra.mxu0 %v3220
    %3403 = vmatpush.bf16.msra.mxu0 %v3215
    %3404 = vmatpush.bf16.msra.mxu0 %v3210
    %3405 = vmatmul.bf16.gmra.mxu0 %v3330
    %v3406 = vpop.f32.mrf.mxu0
    %v3407 = vadd.f32 %v3394, %v3406
    %v3408 = vpop.f32.mrf.mxu0
    %3409 = vdwg.mxu0
    %3410 = vmatpush.bf16.msra.mxu0 %v3166
    %3411 = vmatpush.bf16.msra.mxu0 %v3161
    %3412 = vmatpush.bf16.msra.mxu0 %v3156
    %3413 = vmatpush.bf16.msra.mxu0 %v3151
    %3414 = vmatpush.bf16.msra.mxu0 %v3146
    %3415 = vmatpush.bf16.msra.mxu0 %v3141
    %3416 = vmatpush.bf16.msra.mxu0 %v3136
    %3417 = vmatpush.bf16.msra.mxu0 %v3131
    %3418 = vmatmul.bf16.gmra.mxu0 %v2681
    %v3419 = vpop.f32.mrf.mxu0
    %v3420 = vadd.f32 %v2806, %v3419
    %v3421 = vpop.f32.mrf.mxu0
    %3422 = vdwg.mxu0
    %3423 = vmatpush.bf16.msra.mxu0 %v3206
    %3424 = vmatpush.bf16.msra.mxu0 %v3201
    %3425 = vmatpush.bf16.msra.mxu0 %v3196
    %3426 = vmatpush.bf16.msra.mxu0 %v3191
    %3427 = vmatpush.bf16.msra.mxu0 %v3186
    %3428 = vmatpush.bf16.msra.mxu0 %v3181
    %3429 = vmatpush.bf16.msra.mxu0 %v3176
    %3430 = vmatpush.bf16.msra.mxu0 %v3171
    %3431 = vmatmul.bf16.gmra.mxu0 %v2682
    %v3432 = vpop.f32.mrf.mxu0
    %v3433 = vadd.f32 %v3420, %v3432
    %v3434 = vpop.f32.mrf.mxu0
    %3435 = vdwg.mxu0
    %3436 = vmatpush.bf16.msra.mxu0 0
    %3437 = vmatpush.bf16.msra.mxu0 0
    %3438 = vmatpush.bf16.msra.mxu0 0
    %3439 = vmatpush.bf16.msra.mxu0 0
    %3440 = vmatpush.bf16.msra.mxu0 %v3226
    %3441 = vmatpush.bf16.msra.mxu0 %v3221
    %3442 = vmatpush.bf16.msra.mxu0 %v3216
    %3443 = vmatpush.bf16.msra.mxu0 %v3211
    %3444 = vmatmul.bf16.gmra.mxu0 %v3330
    %v3445 = vpop.f32.mrf.mxu0
    %v3446 = vadd.f32 %v3433, %v3445
    %v3447 = vpop.f32.mrf.mxu0
    %3448 = vdwg.mxu0
    %3449 = vmatpush.bf16.msra.mxu0 %v3167
    %3450 = vmatpush.bf16.msra.mxu0 %v3162
    %3451 = vmatpush.bf16.msra.mxu0 %v3157
    %3452 = vmatpush.bf16.msra.mxu0 %v3152
    %3453 = vmatpush.bf16.msra.mxu0 %v3147
    %3454 = vmatpush.bf16.msra.mxu0 %v3142
    %3455 = vmatpush.bf16.msra.mxu0 %v3137
    %3456 = vmatpush.bf16.msra.mxu0 %v3132
    %3457 = vmatmul.bf16.gmra.mxu0 %v2681
    %v3458 = vpop.f32.mrf.mxu0
    %v3459 = vadd.f32 %v2807, %v3458
    %v3460 = vpop.f32.mrf.mxu0
    %3461 = vdwg.mxu0
    %3462 = vmatpush.bf16.msra.mxu0 %v3207
    %3463 = vmatpush.bf16.msra.mxu0 %v3202
    %3464 = vmatpush.bf16.msra.mxu0 %v3197
    %3465 = vmatpush.bf16.msra.mxu0 %v3192
    %3466 = vmatpush.bf16.msra.mxu0 %v3187
    %3467 = vmatpush.bf16.msra.mxu0 %v3182
    %3468 = vmatpush.bf16.msra.mxu0 %v3177
    %3469 = vmatpush.bf16.msra.mxu0 %v3172
    %3470 = vmatmul.bf16.gmra.mxu0 %v2682
    %v3471 = vpop.f32.mrf.mxu0
    %v3472 = vadd.f32 %v3459, %v3471
    %v3473 = vpop.f32.mrf.mxu0
    %3474 = vdwg.mxu0
    %3475 = vmatpush.bf16.msra.mxu0 0
    %3476 = vmatpush.bf16.msra.mxu0 0
    %3477 = vmatpush.bf16.msra.mxu0 0
    %3478 = vmatpush.bf16.msra.mxu0 0
    %3479 = vmatpush.bf16.msra.mxu0 %v3227
    %3480 = vmatpush.bf16.msra.mxu0 %v3222
    %3481 = vmatpush.bf16.msra.mxu0 %v3217
    %3482 = vmatpush.bf16.msra.mxu0 %v3212
    %3483 = vmatmul.bf16.gmra.mxu0 %v3330
    %v3484 = vpop.f32.mrf.mxu0
    %v3485 = vadd.f32 %v3472, %v3484
    %v3486 = vpop.f32.mrf.mxu0
    %3487 = vdwg.mxu0
    %3488 = vmatpush.bf16.msra.mxu0 %v3168
    %3489 = vmatpush.bf16.msra.mxu0 %v3163
    %3490 = vmatpush.bf16.msra.mxu0 %v3158
    %3491 = vmatpush.bf16.msra.mxu0 %v3153
    %3492 = vmatpush.bf16.msra.mxu0 %v3148
    %3493 = vmatpush.bf16.msra.mxu0 %v3143
    %3494 = vmatpush.bf16.msra.mxu0 %v3138
    %3495 = vmatpush.bf16.msra.mxu0 %v3133
    %3496 = vmatmul.bf16.gmra.mxu0 %v2681
    %v3497 = vpop.f32.mrf.mxu0
    %v3498 = vadd.f32 %v2808, %v3497
    %v3499 = vpop.f32.mrf.mxu0
    %3500 = vdwg.mxu0
    %3501 = vmatpush.bf16.msra.mxu0 %v3208
    %3502 = vmatpush.bf16.msra.mxu0 %v3203
    %3503 = vmatpush.bf16.msra.mxu0 %v3198
    %3504 = vmatpush.bf16.msra.mxu0 %v3193
    %3505 = vmatpush.bf16.msra.mxu0 %v3188
    %3506 = vmatpush.bf16.msra.mxu0 %v3183
    %3507 = vmatpush.bf16.msra.mxu0 %v3178
    %3508 = vmatpush.bf16.msra.mxu0 %v3173
    %3509 = vmatmul.bf16.gmra.mxu0 %v2682
    %v3510 = vpop.f32.mrf.mxu0
    %v3511 = vadd.f32 %v3498, %v3510
    %v3512 = vpop.f32.mrf.mxu0
    %3513 = vdwg.mxu0
    %3514 = vmatpush.bf16.msra.mxu0 0
    %3515 = vmatpush.bf16.msra.mxu0 0
    %3516 = vmatpush.bf16.msra.mxu0 0
    %3517 = vmatpush.bf16.msra.mxu0 0
    %3518 = vmatpush.bf16.msra.mxu0 %v3228
    %3519 = vmatpush.bf16.msra.mxu0 %v3223
    %3520 = vmatpush.bf16.msra.mxu0 %v3218
    %3521 = vmatpush.bf16.msra.mxu0 %v3213
    %3522 = vmatmul.bf16.gmra.mxu0 %v3330
    %v3523 = vpop.f32.mrf.mxu0
    %v3524 = vadd.f32 %v3511, %v3523
    %v3525 = vpop.f32.mrf.mxu0
    %3526 = vdwg.mxu0
    %v3527 = vmax.f32 %v3368, 0.0
    %v3528 = vmax.f32 %v3407, 0.0
    %v3529 = vmax.f32 %v3446, 0.0
    %v3530 = vmax.f32 %v3485, 0.0
    %v3531 = vmax.f32 %v3524, 0.0
    %v3532 = vpack.c.bf16 %v3527, %v3527
    %v3533 = vpack.c.bf16 %v3528, %v3528
    %v3534 = vpack.c.bf16 %v3529, %v3529
    %v3535 = vpack.c.bf16 %v3530, %v3530
    %v3536 = vpack.c.bf16 %v3531, %v3531
    %v3537 = vld [vmem:[#allocation4] sm:$0xff]
    %v3538 = vld [vmem:[#allocation4 + $0x8] sm:$0xff]
    %v3539 = vld [vmem:[#allocation4 + $0x10] sm:$0xff]
    %v3540 = vld [vmem:[#allocation4 + $0x18] sm:$0xff]
    %v3541 = vld [vmem:[#allocation4 + $0x20] sm:$0xff]
    %v3542 = vld [vmem:[#allocation4 + $0x28] sm:$0xff]
    %v3543 = vld [vmem:[#allocation4 + $0x30] sm:$0xff]
    %v3544 = vld [vmem:[#allocation4 + $0x38] sm:$0xff]
    %v3545 = vld [vmem:[#allocation4 + $0x40] sm:$0xff]
    %v3546 = vld [vmem:[#allocation4 + $0x48] sm:$0xff]
    %v3547 = vld [vmem:[#allocation4 + $0x50] sm:$0xff]
    %v3548 = vld [vmem:[#allocation4 + $0x58] sm:$0xff]
    %v3549 = vld [vmem:[#allocation4 + $0x60] sm:$0xff]
    %v3550 = vld [vmem:[#allocation4 + $0x68] sm:$0xff]
    %v3551 = vld [vmem:[#allocation4 + $0x70] sm:$0xff]
    %v3552 = vld [vmem:[#allocation4 + $0x78] sm:$0xff]
    %v3553 = vld [vmem:[#allocation4 + $0x80] sm:$0xff]
    %v3554 = vld [vmem:[#allocation4 + $0x88] sm:$0xff]
    %v3555 = vld [vmem:[#allocation4 + $0x90] sm:$0xff]
    %v3556 = vld [vmem:[#allocation4 + $0x98] sm:$0xff]
    %v3557 = vld [vmem:[#allocation4 + $0xa0] sm:$0xff]
    %v3558 = vld [vmem:[#allocation4 + $0xa8] sm:$0xff]
    %v3559 = vld [vmem:[#allocation4 + $0xb0] sm:$0xff]
    %v3560 = vld [vmem:[#allocation4 + $0xb8] sm:$0xff]
    %v3561 = vld [vmem:[#allocation4 + $0xc0] sm:$0xff]
    %v3562 = vld [vmem:[#allocation4 + $0xc8] sm:$0xff]
    %v3563 = vld [vmem:[#allocation4 + $0xd0] sm:$0xff]
    %v3564 = vld [vmem:[#allocation4 + $0xd8] sm:$0xff]
    %v3565 = vld [vmem:[#allocation4 + $0xe0] sm:$0xff]
    %v3566 = vld [vmem:[#allocation4 + $0xe8] sm:$0xff]
    %v3567 = vld [vmem:[#allocation4 + $0xf0] sm:$0xff]
    %v3568 = vld [vmem:[#allocation4 + $0xf8] sm:$0xff]
    %v3569 = vld [vmem:[#allocation4 + $0x100] sm:$0xff]
    %v3570 = vld [vmem:[#allocation4 + $0x108] sm:$0xff]
    %v3571 = vld [vmem:[#allocation4 + $0x110] sm:$0xff]
    %v3572 = vld [vmem:[#allocation4 + $0x118] sm:$0xff]
    %v3573 = vld [vmem:[#allocation4 + $0x120] sm:$0xff]
    %v3574 = vld [vmem:[#allocation4 + $0x128] sm:$0xff]
    %v3575 = vld [vmem:[#allocation4 + $0x130] sm:$0xff]
    %v3576 = vld [vmem:[#allocation4 + $0x138] sm:$0xff]
    %v3577 = vld [vmem:[#allocation4 + $0x140] sm:$0xff]
    %v3578 = vld [vmem:[#allocation4 + $0x148] sm:$0xff]
    %v3579 = vld [vmem:[#allocation4 + $0x150] sm:$0xff]
    %v3580 = vld [vmem:[#allocation4 + $0x158] sm:$0xff]
    %v3581 = vld [vmem:[#allocation4 + $0x160] sm:$0xff]
    %v3582 = vld [vmem:[#allocation4 + $0x168] sm:$0xff]
    %v3583 = vld [vmem:[#allocation4 + $0x170] sm:$0xff]
    %v3584 = vld [vmem:[#allocation4 + $0x178] sm:$0xff]
    %v3585 = vld [vmem:[#allocation4 + $0x180] sm:$0xff]
    %v3586 = vld [vmem:[#allocation4 + $0x188] sm:$0xff]
    %v3587 = vld [vmem:[#allocation4 + $0x190] sm:$0xff]
    %v3588 = vld [vmem:[#allocation4 + $0x198] sm:$0xff]
    %v3589 = vld [vmem:[#allocation4 + $0x1a0] sm:$0xff]
    %v3590 = vld [vmem:[#allocation4 + $0x1a8] sm:$0xff]
    %v3591 = vld [vmem:[#allocation4 + $0x1b0] sm:$0xff]
    %v3592 = vld [vmem:[#allocation4 + $0x1b8] sm:$0xff]
    %v3593 = vld [vmem:[#allocation4 + $0x1c0] sm:$0xff]
    %v3594 = vld [vmem:[#allocation4 + $0x1c8] sm:$0xff]
    %v3595 = vld [vmem:[#allocation4 + $0x1d0] sm:$0xff]
    %v3596 = vld [vmem:[#allocation4 + $0x1d8] sm:$0xff]
    %v3597 = vld [vmem:[#allocation4 + $0x1e0] sm:$0xff]
    %v3598 = vld [vmem:[#allocation4 + $0x1e8] sm:$0xff]
    %v3599 = vld [vmem:[#allocation4 + $0x1f0] sm:$0xff]
    %v3600 = vld [vmem:[#allocation4 + $0x1f8] sm:$0xff]
    %v3601 = vld [vmem:[#allocation4 + $0x200] sm:$0xff]
    %v3602 = vld [vmem:[#allocation4 + $0x208] sm:$0xff]
    %v3603 = vld [vmem:[#allocation4 + $0x210] sm:$0xff]
    %v3604 = vld [vmem:[#allocation4 + $0x218] sm:$0xff]
    %v3605 = vld [vmem:[#allocation4 + $0x220] sm:$0xff]
    %v3606 = vld [vmem:[#allocation4 + $0x228] sm:$0xff]
    %v3607 = vld [vmem:[#allocation4 + $0x230] sm:$0xff]
    %v3608 = vld [vmem:[#allocation4 + $0x238] sm:$0xff]
    %v3609 = vld [vmem:[#allocation4 + $0x240] sm:$0xff]
    %v3610 = vld [vmem:[#allocation4 + $0x248] sm:$0xff]
    %v3611 = vld [vmem:[#allocation4 + $0x250] sm:$0xff]
    %v3612 = vld [vmem:[#allocation4 + $0x258] sm:$0xff]
    %v3613 = vld [vmem:[#allocation4 + $0x260] sm:$0xff]
    %v3614 = vld [vmem:[#allocation4 + $0x268] sm:$0xff]
    %v3615 = vld [vmem:[#allocation4 + $0x270] sm:$0xff]
    %v3616 = vld [vmem:[#allocation4 + $0x278] sm:$0xff]
    %v3617 = vperm.slane %v73, 7
    %v3618 = vperm.slane %v74, 7
    %v3699 = vunpack.c.l.b16 %v3537
    %v3700 = vunpack.c.h.b16 %v3537
    %v3701 = vunpack.c.l.b16 %v3538
    %v3702 = vunpack.c.h.b16 %v3538
    %v3703 = vunpack.c.l.b16 %v3539
    %v3704 = vunpack.c.h.b16 %v3539
    %v3705 = vunpack.c.l.b16 %v3540
    %v3706 = vunpack.c.h.b16 %v3540
    %v3707 = vunpack.c.l.b16 %v3541
    %v3708 = vunpack.c.h.b16 %v3541
    %v3709 = vunpack.c.l.b16 %v3542
    %v3710 = vunpack.c.h.b16 %v3542
    %v3711 = vunpack.c.l.b16 %v3543
    %v3712 = vunpack.c.h.b16 %v3543
    %v3713 = vunpack.c.l.b16 %v3544
    %v3714 = vunpack.c.h.b16 %v3544
    %v3715 = vunpack.c.l.b16 %v3545
    %v3716 = vunpack.c.h.b16 %v3545
    %v3717 = vunpack.c.l.b16 %v3546
    %v3718 = vunpack.c.h.b16 %v3546
    %v3719 = vunpack.c.l.b16 %v3547
    %v3720 = vunpack.c.h.b16 %v3547
    %v3721 = vunpack.c.l.b16 %v3548
    %v3722 = vunpack.c.h.b16 %v3548
    %v3723 = vunpack.c.l.b16 %v3549
    %v3724 = vunpack.c.h.b16 %v3549
    %v3725 = vunpack.c.l.b16 %v3550
    %v3726 = vunpack.c.h.b16 %v3550
    %v3727 = vunpack.c.l.b16 %v3551
    %v3728 = vunpack.c.h.b16 %v3551
    %v3729 = vunpack.c.l.b16 %v3552
    %v3730 = vunpack.c.h.b16 %v3552
    %v3731 = vunpack.c.l.b16 %v3553
    %v3732 = vunpack.c.h.b16 %v3553
    %v3733 = vunpack.c.l.b16 %v3554
    %v3734 = vunpack.c.h.b16 %v3554
    %v3735 = vunpack.c.l.b16 %v3555
    %v3736 = vunpack.c.h.b16 %v3555
    %v3737 = vunpack.c.l.b16 %v3556
    %v3738 = vunpack.c.h.b16 %v3556
    %v3739 = vunpack.c.l.b16 %v3557
    %v3740 = vunpack.c.h.b16 %v3557
    %v3741 = vunpack.c.l.b16 %v3558
    %v3742 = vunpack.c.h.b16 %v3558
    %v3743 = vunpack.c.l.b16 %v3559
    %v3744 = vunpack.c.h.b16 %v3559
    %v3745 = vunpack.c.l.b16 %v3560
    %v3746 = vunpack.c.h.b16 %v3560
    %v3747 = vunpack.c.l.b16 %v3561
    %v3748 = vunpack.c.h.b16 %v3561
    %v3749 = vunpack.c.l.b16 %v3562
    %v3750 = vunpack.c.h.b16 %v3562
    %v3751 = vunpack.c.l.b16 %v3563
    %v3752 = vunpack.c.h.b16 %v3563
    %v3753 = vunpack.c.l.b16 %v3564
    %v3754 = vunpack.c.h.b16 %v3564
    %v3755 = vunpack.c.l.b16 %v3565
    %v3756 = vunpack.c.h.b16 %v3565
    %v3757 = vunpack.c.l.b16 %v3566
    %v3758 = vunpack.c.h.b16 %v3566
    %v3759 = vunpack.c.l.b16 %v3567
    %v3760 = vunpack.c.h.b16 %v3567
    %v3761 = vunpack.c.l.b16 %v3568
    %v3762 = vunpack.c.h.b16 %v3568
    %v3763 = vunpack.c.l.b16 %v3569
    %v3764 = vunpack.c.h.b16 %v3569
    %v3765 = vunpack.c.l.b16 %v3570
    %v3766 = vunpack.c.h.b16 %v3570
    %v3767 = vunpack.c.l.b16 %v3571
    %v3768 = vunpack.c.h.b16 %v3571
    %v3769 = vunpack.c.l.b16 %v3572
    %v3770 = vunpack.c.h.b16 %v3572
    %v3771 = vunpack.c.l.b16 %v3573
    %v3772 = vunpack.c.h.b16 %v3573
    %v3773 = vunpack.c.l.b16 %v3574
    %v3774 = vunpack.c.h.b16 %v3574
    %v3775 = vunpack.c.l.b16 %v3575
    %v3776 = vunpack.c.h.b16 %v3575
    %v3777 = vunpack.c.l.b16 %v3576
    %v3778 = vunpack.c.h.b16 %v3576
    %v3779 = vunpack.c.l.b16 %v3577
    %v3780 = vunpack.c.h.b16 %v3577
    %v3781 = vunpack.c.l.b16 %v3578
    %v3782 = vunpack.c.h.b16 %v3578
    %v3783 = vunpack.c.l.b16 %v3579
    %v3784 = vunpack.c.h.b16 %v3579
    %v3785 = vunpack.c.l.b16 %v3580
    %v3786 = vunpack.c.h.b16 %v3580
    %v3787 = vunpack.c.l.b16 %v3581
    %v3788 = vunpack.c.h.b16 %v3581
    %v3789 = vunpack.c.l.b16 %v3582
    %v3790 = vunpack.c.h.b16 %v3582
    %v3791 = vunpack.c.l.b16 %v3583
    %v3792 = vunpack.c.h.b16 %v3583
    %v3793 = vunpack.c.l.b16 %v3584
    %v3794 = vunpack.c.h.b16 %v3584
    %v3795 = vunpack.c.l.b16 %v3585
    %v3796 = vunpack.c.h.b16 %v3585
    %v3797 = vunpack.c.l.b16 %v3586
    %v3798 = vunpack.c.h.b16 %v3586
    %v3799 = vunpack.c.l.b16 %v3587
    %v3800 = vunpack.c.h.b16 %v3587
    %v3801 = vunpack.c.l.b16 %v3588
    %v3802 = vunpack.c.h.b16 %v3588
    %v3803 = vunpack.c.l.b16 %v3589
    %v3804 = vunpack.c.h.b16 %v3589
    %v3805 = vunpack.c.l.b16 %v3590
    %v3806 = vunpack.c.h.b16 %v3590
    %v3807 = vunpack.c.l.b16 %v3591
    %v3808 = vunpack.c.h.b16 %v3591
    %v3809 = vunpack.c.l.b16 %v3592
    %v3810 = vunpack.c.h.b16 %v3592
    %v3811 = vunpack.c.l.b16 %v3593
    %v3812 = vunpack.c.h.b16 %v3593
    %v3813 = vunpack.c.l.b16 %v3594
    %v3814 = vunpack.c.h.b16 %v3594
    %v3815 = vunpack.c.l.b16 %v3595
    %v3816 = vunpack.c.h.b16 %v3595
    %v3817 = vunpack.c.l.b16 %v3596
    %v3818 = vunpack.c.h.b16 %v3596
    %v3819 = vunpack.c.l.b16 %v3597
    %v3820 = vunpack.c.h.b16 %v3597
    %v3821 = vunpack.c.l.b16 %v3598
    %v3822 = vunpack.c.h.b16 %v3598
    %v3823 = vunpack.c.l.b16 %v3599
    %v3824 = vunpack.c.h.b16 %v3599
    %v3825 = vunpack.c.l.b16 %v3600
    %v3826 = vunpack.c.h.b16 %v3600
    %v3827 = vunpack.c.l.b16 %v3601
    %v3828 = vunpack.c.h.b16 %v3601
    %v3829 = vunpack.c.l.b16 %v3602
    %v3830 = vunpack.c.h.b16 %v3602
    %v3831 = vunpack.c.l.b16 %v3603
    %v3832 = vunpack.c.h.b16 %v3603
    %v3833 = vunpack.c.l.b16 %v3604
    %v3834 = vunpack.c.h.b16 %v3604
    %v3835 = vunpack.c.l.b16 %v3605
    %v3836 = vunpack.c.h.b16 %v3605
    %v3837 = vunpack.c.l.b16 %v3606
    %v3838 = vunpack.c.h.b16 %v3606
    %v3839 = vunpack.c.l.b16 %v3607
    %v3840 = vunpack.c.h.b16 %v3607
    %v3841 = vunpack.c.l.b16 %v3608
    %v3842 = vunpack.c.h.b16 %v3608
    %v3843 = vunpack.c.l.b16 %v3609
    %v3844 = vunpack.c.h.b16 %v3609
    %v3845 = vunpack.c.l.b16 %v3610
    %v3846 = vunpack.c.h.b16 %v3610
    %v3847 = vunpack.c.l.b16 %v3611
    %v3848 = vunpack.c.h.b16 %v3611
    %v3849 = vunpack.c.l.b16 %v3612
    %v3850 = vunpack.c.h.b16 %v3612
    %v3851 = vunpack.c.l.b16 %v3613
    %v3852 = vunpack.c.h.b16 %v3613
    %v3853 = vunpack.c.l.b16 %v3614
    %v3854 = vunpack.c.h.b16 %v3614
    %v3855 = vunpack.c.l.b16 %v3615
    %v3856 = vunpack.c.h.b16 %v3615
    %v3857 = vunpack.c.l.b16 %v3616
    %v3858 = vunpack.c.h.b16 %v3616
    %v3859 = vpack.c.b16 %v3701, %v3699
    %v3860 = vpack.c.b16 %v3702, %v3700
    %v3861 = vpack.c.b16 %v3705, %v3703
    %v3862 = vpack.c.b16 %v3706, %v3704
    %v3863 = vpack.c.b16 %v3709, %v3707
    %v3864 = vpack.c.b16 %v3710, %v3708
    %v3865 = vpack.c.b16 %v3713, %v3711
    %v3866 = vpack.c.b16 %v3714, %v3712
    %v3867 = vpack.c.b16 %v3717, %v3715
    %v3868 = vpack.c.b16 %v3718, %v3716
    %v3869 = vpack.c.b16 %v3721, %v3719
    %v3870 = vpack.c.b16 %v3722, %v3720
    %v3871 = vpack.c.b16 %v3725, %v3723
    %v3872 = vpack.c.b16 %v3726, %v3724
    %v3873 = vpack.c.b16 %v3729, %v3727
    %v3874 = vpack.c.b16 %v3730, %v3728
    %v3875 = vpack.c.b16 %v3733, %v3731
    %v3876 = vpack.c.b16 %v3734, %v3732
    %v3877 = vpack.c.b16 %v3737, %v3735
    %v3878 = vpack.c.b16 %v3738, %v3736
    %v3879 = vpack.c.b16 %v3741, %v3739
    %v3880 = vpack.c.b16 %v3742, %v3740
    %v3881 = vpack.c.b16 %v3745, %v3743
    %v3882 = vpack.c.b16 %v3746, %v3744
    %v3883 = vpack.c.b16 %v3749, %v3747
    %v3884 = vpack.c.b16 %v3750, %v3748
    %v3885 = vpack.c.b16 %v3753, %v3751
    %v3886 = vpack.c.b16 %v3754, %v3752
    %v3887 = vpack.c.b16 %v3757, %v3755
    %v3888 = vpack.c.b16 %v3758, %v3756
    %v3889 = vpack.c.b16 %v3761, %v3759
    %v3890 = vpack.c.b16 %v3762, %v3760
    %v3891 = vpack.c.b16 %v3765, %v3763
    %v3892 = vpack.c.b16 %v3766, %v3764
    %v3893 = vpack.c.b16 %v3769, %v3767
    %v3894 = vpack.c.b16 %v3770, %v3768
    %v3895 = vpack.c.b16 %v3773, %v3771
    %v3896 = vpack.c.b16 %v3774, %v3772
    %v3897 = vpack.c.b16 %v3777, %v3775
    %v3898 = vpack.c.b16 %v3778, %v3776
    %v3899 = vpack.c.b16 %v3781, %v3779
    %v3900 = vpack.c.b16 %v3782, %v3780
    %v3901 = vpack.c.b16 %v3785, %v3783
    %v3902 = vpack.c.b16 %v3786, %v3784
    %v3903 = vpack.c.b16 %v3789, %v3787
    %v3904 = vpack.c.b16 %v3790, %v3788
    %v3905 = vpack.c.b16 %v3793, %v3791
    %v3906 = vpack.c.b16 %v3794, %v3792
    %v3907 = vpack.c.b16 %v3797, %v3795
    %v3908 = vpack.c.b16 %v3798, %v3796
    %v3909 = vpack.c.b16 %v3801, %v3799
    %v3910 = vpack.c.b16 %v3802, %v3800
    %v3911 = vpack.c.b16 %v3805, %v3803
    %v3912 = vpack.c.b16 %v3806, %v3804
    %v3913 = vpack.c.b16 %v3809, %v3807
    %v3914 = vpack.c.b16 %v3810, %v3808
    %v3915 = vpack.c.b16 %v3813, %v3811
    %v3916 = vpack.c.b16 %v3814, %v3812
    %v3917 = vpack.c.b16 %v3817, %v3815
    %v3918 = vpack.c.b16 %v3818, %v3816
    %v3919 = vpack.c.b16 %v3821, %v3819
    %v3920 = vpack.c.b16 %v3822, %v3820
    %v3921 = vpack.c.b16 %v3825, %v3823
    %v3922 = vpack.c.b16 %v3826, %v3824
    %v3923 = vpack.c.b16 %v3829, %v3827
    %v3924 = vpack.c.b16 %v3830, %v3828
    %v3925 = vpack.c.b16 %v3833, %v3831
    %v3926 = vpack.c.b16 %v3834, %v3832
    %v3927 = vpack.c.b16 %v3837, %v3835
    %v3928 = vpack.c.b16 %v3838, %v3836
    %v3929 = vpack.c.b16 %v3841, %v3839
    %v3930 = vpack.c.b16 %v3842, %v3840
    %v3931 = vpack.c.b16 %v3845, %v3843
    %v3932 = vpack.c.b16 %v3846, %v3844
    %v3933 = vpack.c.b16 %v3849, %v3847
    %v3934 = vpack.c.b16 %v3850, %v3848
    %v3935 = vpack.c.b16 %v3853, %v3851
    %v3936 = vpack.c.b16 %v3854, %v3852
    %v3937 = vpack.c.b16 %v3857, %v3855
    %v3938 = vpack.c.b16 %v3858, %v3856
    %4019 = vmatpush.bf16.msra.mxu0 %v3873
    %4020 = vmatpush.bf16.msra.mxu0 %v3871
    %4021 = vmatpush.bf16.msra.mxu0 %v3869
    %4022 = vmatpush.bf16.msra.mxu0 %v3867
    %4023 = vmatpush.bf16.msra.mxu0 %v3865
    %4024 = vmatpush.bf16.msra.mxu0 %v3863
    %4025 = vmatpush.bf16.msra.mxu0 %v3861
    %4026 = vmatpush.bf16.msra.mxu0 %v3859
    %4027 = vmatmul.bf16.gmra.mxu0 %v3532
    %v4028 = vpop.f32.mrf.mxu0
    %v4029 = vadd.f32 %v3617, %v4028
    %v4030 = vpop.f32.mrf.mxu0
    %4031 = vdwg.mxu0
    %4032 = vmatpush.bf16.msra.mxu0 %v3889
    %4033 = vmatpush.bf16.msra.mxu0 %v3887
    %4034 = vmatpush.bf16.msra.mxu0 %v3885
    %4035 = vmatpush.bf16.msra.mxu0 %v3883
    %4036 = vmatpush.bf16.msra.mxu0 %v3881
    %4037 = vmatpush.bf16.msra.mxu0 %v3879
    %4038 = vmatpush.bf16.msra.mxu0 %v3877
    %4039 = vmatpush.bf16.msra.mxu0 %v3875
    %4040 = vmatmul.bf16.gmra.mxu0 %v3533
    %v4041 = vpop.f32.mrf.mxu0
    %v4042 = vadd.f32 %v4029, %v4041
    %v4043 = vpop.f32.mrf.mxu0
    %4044 = vdwg.mxu0
    %4045 = vmatpush.bf16.msra.mxu0 %v3905
    %4046 = vmatpush.bf16.msra.mxu0 %v3903
    %4047 = vmatpush.bf16.msra.mxu0 %v3901
    %4048 = vmatpush.bf16.msra.mxu0 %v3899
    %4049 = vmatpush.bf16.msra.mxu0 %v3897
    %4050 = vmatpush.bf16.msra.mxu0 %v3895
    %4051 = vmatpush.bf16.msra.mxu0 %v3893
    %4052 = vmatpush.bf16.msra.mxu0 %v3891
    %4053 = vmatmul.bf16.gmra.mxu0 %v3534
    %v4054 = vpop.f32.mrf.mxu0
    %v4055 = vadd.f32 %v4042, %v4054
    %v4056 = vpop.f32.mrf.mxu0
    %4057 = vdwg.mxu0
    %4058 = vmatpush.bf16.msra.mxu0 %v3921
    %4059 = vmatpush.bf16.msra.mxu0 %v3919
    %4060 = vmatpush.bf16.msra.mxu0 %v3917
    %4061 = vmatpush.bf16.msra.mxu0 %v3915
    %4062 = vmatpush.bf16.msra.mxu0 %v3913
    %4063 = vmatpush.bf16.msra.mxu0 %v3911
    %4064 = vmatpush.bf16.msra.mxu0 %v3909
    %4065 = vmatpush.bf16.msra.mxu0 %v3907
    %4066 = vmatmul.bf16.gmra.mxu0 %v3535
    %v4067 = vpop.f32.mrf.mxu0
    %v4068 = vadd.f32 %v4055, %v4067
    %v4069 = vpop.f32.mrf.mxu0
    %4070 = vdwg.mxu0
    %4071 = vmatpush.bf16.msra.mxu0 %v3937
    %4072 = vmatpush.bf16.msra.mxu0 %v3935
    %4073 = vmatpush.bf16.msra.mxu0 %v3933
    %4074 = vmatpush.bf16.msra.mxu0 %v3931
    %4075 = vmatpush.bf16.msra.mxu0 %v3929
    %4076 = vmatpush.bf16.msra.mxu0 %v3927
    %4077 = vmatpush.bf16.msra.mxu0 %v3925
    %4078 = vmatpush.bf16.msra.mxu0 %v3923
    %4079 = vmatmul.bf16.gmra.mxu0 %v3536
    %v4080 = vpop.f32.mrf.mxu0
    %v4081 = vadd.f32 %v4068, %v4080
    %v4082 = vpop.f32.mrf.mxu0
    %4083 = vdwg.mxu0
    %4084 = vmatpush.bf16.msra.mxu0 %v3874
    %4085 = vmatpush.bf16.msra.mxu0 %v3872
    %4086 = vmatpush.bf16.msra.mxu0 %v3870
    %4087 = vmatpush.bf16.msra.mxu0 %v3868
    %4088 = vmatpush.bf16.msra.mxu0 %v3866
    %4089 = vmatpush.bf16.msra.mxu0 %v3864
    %4090 = vmatpush.bf16.msra.mxu0 %v3862
    %4091 = vmatpush.bf16.msra.mxu0 %v3860
    %4092 = vmatmul.bf16.gmra.mxu0 %v3532
    %v4093 = vpop.f32.mrf.mxu0
    %v4094 = vadd.f32 %v3618, %v4093
    %v4095 = vpop.f32.mrf.mxu0
    %4096 = vdwg.mxu0
    %4097 = vmatpush.bf16.msra.mxu0 %v3890
    %4098 = vmatpush.bf16.msra.mxu0 %v3888
    %4099 = vmatpush.bf16.msra.mxu0 %v3886
    %4100 = vmatpush.bf16.msra.mxu0 %v3884
    %4101 = vmatpush.bf16.msra.mxu0 %v3882
    %4102 = vmatpush.bf16.msra.mxu0 %v3880
    %4103 = vmatpush.bf16.msra.mxu0 %v3878
    %4104 = vmatpush.bf16.msra.mxu0 %v3876
    %4105 = vmatmul.bf16.gmra.mxu0 %v3533
    %v4106 = vpop.f32.mrf.mxu0
    %v4107 = vadd.f32 %v4094, %v4106
    %v4108 = vpop.f32.mrf.mxu0
    %4109 = vdwg.mxu0
    %4110 = vmatpush.bf16.msra.mxu0 %v3906
    %4111 = vmatpush.bf16.msra.mxu0 %v3904
    %4112 = vmatpush.bf16.msra.mxu0 %v3902
    %4113 = vmatpush.bf16.msra.mxu0 %v3900
    %4114 = vmatpush.bf16.msra.mxu0 %v3898
    %4115 = vmatpush.bf16.msra.mxu0 %v3896
    %4116 = vmatpush.bf16.msra.mxu0 %v3894
    %4117 = vmatpush.bf16.msra.mxu0 %v3892
    %4118 = vmatmul.bf16.gmra.mxu0 %v3534
    %v4119 = vpop.f32.mrf.mxu0
    %v4120 = vadd.f32 %v4107, %v4119
    %v4121 = vpop.f32.mrf.mxu0
    %4122 = vdwg.mxu0
    %4123 = vmatpush.bf16.msra.mxu0 %v3922
    %4124 = vmatpush.bf16.msra.mxu0 %v3920
    %4125 = vmatpush.bf16.msra.mxu0 %v3918
    %4126 = vmatpush.bf16.msra.mxu0 %v3916
    %4127 = vmatpush.bf16.msra.mxu0 %v3914
    %4128 = vmatpush.bf16.msra.mxu0 %v3912
    %4129 = vmatpush.bf16.msra.mxu0 %v3910
    %4130 = vmatpush.bf16.msra.mxu0 %v3908
    %4131 = vmatmul.bf16.gmra.mxu0 %v3535
    %v4132 = vpop.f32.mrf.mxu0
    %v4133 = vadd.f32 %v4120, %v4132
    %v4134 = vpop.f32.mrf.mxu0
    %4135 = vdwg.mxu0
    %4136 = vmatpush.bf16.msra.mxu0 %v3938
    %4137 = vmatpush.bf16.msra.mxu0 %v3936
    %4138 = vmatpush.bf16.msra.mxu0 %v3934
    %4139 = vmatpush.bf16.msra.mxu0 %v3932
    %4140 = vmatpush.bf16.msra.mxu0 %v3930
    %4141 = vmatpush.bf16.msra.mxu0 %v3928
    %4142 = vmatpush.bf16.msra.mxu0 %v3926
    %4143 = vmatpush.bf16.msra.mxu0 %v3924
    %4144 = vmatmul.bf16.gmra.mxu0 %v3536
    %v4145 = vpop.f32.mrf.mxu0
    %v4146 = vadd.f32 %v4133, %v4145
    %v4147 = vpop.f32.mrf.mxu0
    %4148 = vdwg.mxu0
    %v4149 = vmax.f32 %v4081, 0.0
    %v4150 = vmax.f32 %v4146, 0.0
    %v4151 = vxor.u32 %v4149, 2147483648
    %v4152 = vxor.u32 %v4150, 2147483648
    %v4153 = vmul.f32 %v4151, 1.442695
    %v4154 = vpow.pop %v4153
    %v4155 = vmul.f32 %v4152, 1.442695
    %v4156 = vpow.pop %v4155
    %v4157 = vadd.f32 %v4154, 1.0
    %v4158 = vadd.f32 %v4156, 1.0
    %v4159 = vrcp.pop %v4157
    %v4160 = vmul.f32 %v4157, %v4159
    %v4161 = vsub.f32 1.0, %v4160
    %v4162 = vmul.f32 %v4159, %v4161
    %v4163 = vadd.f32 %v4159, %v4162
    %vm4164 = vweird.f32 %v4157
    %vm4165 = vweird.f32 %v4159
    %vm4166 = vmor %vm4164, %vm4165
    %v4167 = vsel %vm4166, %v4159, %v4163
    %v4168 = vand.u32 2147483647, %v4157
    %vm4169 = vcmp.eq.f32.partialorder %v4168, 8.507059e+37
    %v4170 = vand.u32 %v4157, 2147483648
    %v4171 = vor.u32 1.1754944e-38, %v4170
    %v4172 = vsel %vm4169, %v4171, %v4167
    %v4173 = vmul.f32 1.0, %v4172
    %v4174 = vrcp.pop %v4158
    %v4175 = vmul.f32 %v4158, %v4174
    %v4176 = vsub.f32 1.0, %v4175
    %v4177 = vmul.f32 %v4174, %v4176
    %v4178 = vadd.f32 %v4174, %v4177
    %vm4179 = vweird.f32 %v4158
    %vm4180 = vweird.f32 %v4174
    %vm4181 = vmor %vm4179, %vm4180
    %v4182 = vsel %vm4181, %v4174, %v4178
    %v4183 = vand.u32 2147483647, %v4158
    %vm4184 = vcmp.eq.f32.partialorder %v4183, 8.507059e+37
    %v4185 = vand.u32 %v4158, 2147483648
    %v4186 = vor.u32 1.1754944e-38, %v4185
    %v4187 = vsel %vm4184, %v4186, %v4182
    %v4188 = vmul.f32 1.0, %v4187
    %v4191 = vrot.slane %v4188, 6
    %v4192 = vsel %vm2257, %v4173, %v4191
    %4194 = vst [vmem:[%s11] sm:$0xf] %v4192
    // Predicated region
    $region54: #{even_vae_forward.1} parent=1 // pred_check
      _
    $region55: #{even_vae_forward.1} parent=1 // pred_check_branch
      %4196 = sbr.rel (0) target = $region57
    $region56: #{even_vae_forward.1} parent=1 // pred_region
      _
    $region57: #{even_vae_forward.1} parent=1 // pred_fallthru
      _
    // Predicated region
    $region58: #{even_vae_forward.1} parent=1 // pred_check
      _
    $region59: #{even_vae_forward.1} parent=1 // pred_check_branch
      %4198 = sbr.rel (0) target = $region61
    $region60: #{even_vae_forward.1} parent=1 // pred_region
      _
    $region61: #{even_vae_forward.1} parent=1 // pred_fallthru
      _
    // Predicated region
    $region62: #{even_vae_forward.1} parent=1 // pred_check
      _
    $region63: #{even_vae_forward.1} parent=1 // pred_check_branch
      %4200 = sbr.rel (0) target = $region65
    $region64: #{even_vae_forward.1} parent=1 // pred_region
      _
    $region65: #{even_vae_forward.1} parent=1 // pred_fallthru
      _
    // Predicated region
    $region66: #{even_vae_forward.1} parent=1 // pred_check
      _
    $region67: #{even_vae_forward.1} parent=1 // pred_check_branch
      %4202 = sbr.rel (0) target = $region69
    $region68: #{even_vae_forward.1} parent=1 // pred_region
      _
    $region69: #{even_vae_forward.1} parent=1 // pred_fallthru
      _
    %4203 = vsyncpa [#allocation3], 1
    %4204 = vsyncpa [#allocation5], 1

</llo_original>
